<compile_context>
chip_gen: v6e
topology: v6e:2x2x1
jax: 0.10.0
libtpu: 0.0.40
codegen_flags: <defaults>
</compile_context>

<pallas_src>
import jax
import jax.numpy as jnp
from jax.experimental import pallas as pl
from jax.experimental.pallas import tpu as pltpu

EPS = 1e-3


def conv_bn_kernel(w_ref, x_ref, gb_ref, o_ref):
    # 1x1 conv == matmul on the MXU: (tn, Cin) @ (Cin, M) -> (tn, M), f32 accumulation.
    y = jnp.dot(w_ref[...], x_ref[...], preferred_element_type=jnp.float32)

    m = jnp.float32(y.shape[1])  # number of BN samples per channel (N*H*W)

    # Two-pass per-channel (per-row) batch statistics: mean, then centered variance.
    mean = jnp.sum(y, axis=1, keepdims=True) / m          # (tn, 1)
    yc = y - mean                                          # centered activations
    var = jnp.sum(yc * yc, axis=1, keepdims=True) / m      # (tn, 1) biased variance

    # gamma/beta arrive lane-major as an (8, tn) slab: row 0 = gamma, row 1 = beta.
    # One aligned XLU transpose turns them into per-channel columns.
    gb = gb_ref[...].T                                     # (tn, 8)
    scale = gb[:, 0:1] * jax.lax.rsqrt(var + EPS)          # gamma / sqrt(var + eps)
    o_ref[...] = (yc * scale + gb[:, 1:2]).astype(o_ref.dtype)


def conv2d_1x1_batchnorm(x_nchw, weight_oi11, gamma, beta, *, tn=1152):
    """x_nchw: (N, Cin, H, W); weight_oi11: (Cout, Cin, 1, 1); gamma/beta: (Cout,)."""
    N, Cin, H, W = x_nchw.shape
    Cout = weight_oi11.shape[0]
    if Cout % tn != 0:
        tn = Cout  # fallback: single slab
    M = N * H * W

    # NCHW -> (Cin, M).  For N == 1 this is a pure reshape (no data movement).
    if N == 1:
        x2d = x_nchw.reshape(Cin, M)
    else:
        x2d = jnp.transpose(x_nchw, (1, 0, 2, 3)).reshape(Cin, M)

    w2d = weight_oi11[:, :, 0, 0].astype(jnp.float32)      # (Cout, Cin), channel-major

    # Pack gamma/beta lane-major into one (8, Cout) slab (rows 2..7 are padding so the
    # in-kernel transpose uses the canonical 8-sublane tile).  ~74 KB total.
    gb = jnp.concatenate(
        [gamma.astype(jnp.float32)[None, :],
         beta.astype(jnp.float32)[None, :],
         jnp.zeros((6, Cout), jnp.float32)],
        axis=0,
    )

    out2d = pl.pallas_call(
        conv_bn_kernel,
        out_shape=jax.ShapeDtypeStruct((Cout, M), jnp.float32),
        grid_spec=pltpu.PrefetchScalarGridSpec(
            num_scalar_prefetch=0,
            grid=(Cout // tn,),                              # 2 steps: 1 slab per TC on v7x
            in_specs=[
                pl.BlockSpec((tn, Cin), lambda j: (j, 0)),   # weight slab (dominant DMA)
                pl.BlockSpec((Cin, M), lambda j: (0, 0)),    # full activations, resident
                pl.BlockSpec((8, tn), lambda j: (0, j)),     # lane-major gamma/beta slab
            ],
            out_specs=pl.BlockSpec((tn, M), lambda j: (j, 0)),
        ),
        compiler_params=pltpu.CompilerParams(
            dimension_semantics=("parallel",),
        ),
    )(w2d, x2d, gb)

    # (Cout, M) -> NCHW.  For N == 1 this is a pure reshape.
    if N == 1:
        return out2d.reshape(1, Cout, H, W)
    return jnp.transpose(out2d.reshape(Cout, N, H, W), (1, 0, 2, 3))


def _reference(x_nchw, weight_oi11, gamma, beta):
    """Pure-JAX reference of Conv2d(1x1, no bias) + BatchNorm2d (training-mode stats)."""
    N, Cin, H, W = x_nchw.shape
    Cout = weight_oi11.shape[0]
    x2d = jnp.transpose(x_nchw, (0, 2, 3, 1)).reshape(N * H * W, Cin)
    y = x2d @ jnp.transpose(weight_oi11[:, :, 0, 0], (1, 0))
    mean = jnp.mean(y, axis=0, keepdims=True)
    var = jnp.mean(jnp.square(y - mean), axis=0, keepdims=True)
    y = (y - mean) / jnp.sqrt(var + EPS) * gamma[None, :] + beta[None, :]
    return jnp.transpose(y.reshape(N, H, W, Cout), (0, 3, 1, 2))


if __name__ == "__main__":
    # Shapes implied by the module: Conv2d(384 -> 2304, 1x1), input (1, 384, 7, 7).
    N, Cin, H, W, Cout = 1, 384, 7, 7, 2304

    key = jax.random.PRNGKey(0)
    kx, kw, kg, kb = jax.random.split(key, 4)

    x = jax.random.normal(kx, (N, Cin, H, W), dtype=jnp.float32)
    weight = jax.random.normal(kw, (Cout, Cin, 1, 1), dtype=jnp.float32) * (1.0 / Cin) ** 0.5
    gamma = 1.0 + 0.1 * jax.random.normal(kg, (Cout,), dtype=jnp.float32)
    beta = 0.1 * jax.random.normal(kb, (Cout,), dtype=jnp.float32)

    out = conv2d_1x1_batchnorm(x, weight, gamma, beta)
    out = jax.block_until_ready(out)

    ref = _reference(x, weight, gamma, beta)
    assert out.shape == (N, Cout, H, W), out.shape
    max_err = float(jnp.max(jnp.abs(out - ref)))
    assert jnp.allclose(out, ref, atol=2e-3, rtol=2e-3), max_err

    print("KERNEL_OK")
</pallas_src>

<mosaic_0001>
module attributes {stable_mosaic.version = 11 : i64} {
  func.func @conv_bn_kernel(%arg0: i32, %arg1: memref<1152x384xf32, #tpu.memory_space<vmem>>, %arg2: memref<384x49xf32, #tpu.memory_space<vmem>>, %arg3: memref<8x1152xf32, #tpu.memory_space<vmem>>, %arg4: memref<1152x49xf32, #tpu.memory_space<vmem>>) attributes {dimension_semantics = [#tpu.dimension_semantics<parallel>], iteration_bounds = array<i64: 2>, scalar_prefetch = 0 : i64, scratch_operands = 0 : i64, tpu.core_type = #tpu.core_type<tc>, window_params = [{transform_indices = @transform_0, window_bounds = array<i64: 1152, 384>}, {pipeline_mode = #tpu.pipeline_mode<synchronous>, transform_indices = @transform_1, window_bounds = array<i64: 384, 49>}, {transform_indices = @transform_2, window_bounds = array<i64: 8, 1152>}, {transform_indices = @transform_3, window_bounds = array<i64: 1152, 49>}]} {
    %c0 = arith.constant 0 : index
    %c0_0 = arith.constant 0 : index
    %0 = vector.load %arg1[%c0, %c0_0] : memref<1152x384xf32, #tpu.memory_space<vmem>>, vector<1152x384xf32>
    %c0_1 = arith.constant 0 : index
    %c0_2 = arith.constant 0 : index
    %1 = vector.load %arg2[%c0_1, %c0_2] : memref<384x49xf32, #tpu.memory_space<vmem>>, vector<384x49xf32>
    %cst = arith.constant dense<0.000000e+00> : vector<1152x49xf32>
    %2 = tpu.matmul %0, %1, %cst {dimension_numbers = #tpu.dot_dimension_numbers<[1], [0], [0], [1], [0, 0, 1, 1], [], []>} : vector<1152x384xf32>, vector<384x49xf32>, vector<1152x49xf32> -> vector<1152x49xf32>
    %cst_3 = arith.constant dense<0.000000e+00> : vector<1152xf32>
    %3 = vector.multi_reduction <add>, %2, %cst_3 [1] : vector<1152x49xf32> to vector<1152xf32>
    %4 = vector.shape_cast %3 : vector<1152xf32> to vector<1152x1xf32>
    %cst_4 = arith.constant 4.900000e+01 : f32
    %5 = vector.broadcast %cst_4 : f32 to vector<1152x1xf32>
    %6 = arith.divf %4, %5 : vector<1152x1xf32>
    %7 = vector.broadcast %6 : vector<1152x1xf32> to vector<1152x49xf32>
    %8 = arith.subf %2, %7 : vector<1152x49xf32>
    %9 = arith.mulf %8, %8 : vector<1152x49xf32>
    %cst_5 = arith.constant dense<0.000000e+00> : vector<1152xf32>
    %10 = vector.multi_reduction <add>, %9, %cst_5 [1] : vector<1152x49xf32> to vector<1152xf32>
    %11 = vector.shape_cast %10 : vector<1152xf32> to vector<1152x1xf32>
    %cst_6 = arith.constant 4.900000e+01 : f32
    %12 = vector.broadcast %cst_6 : f32 to vector<1152x1xf32>
    %13 = arith.divf %11, %12 : vector<1152x1xf32>
    %c0_7 = arith.constant 0 : index
    %c0_8 = arith.constant 0 : index
    %14 = vector.load %arg3[%c0_7, %c0_8] : memref<8x1152xf32, #tpu.memory_space<vmem>>, vector<8x1152xf32>
    %15 = tpu.transpose %14, [1, 0] : vector<8x1152xf32> -> vector<1152x8xf32>
    %16 = vector.extract_strided_slice %15 {offsets = [0, 0], sizes = [1152, 1], strides = [1, 1]} : vector<1152x8xf32> to vector<1152x1xf32>
    %cst_9 = arith.constant 1.000000e-03 : f32
    %17 = vector.broadcast %cst_9 : f32 to vector<1152x1xf32>
    %18 = arith.addf %13, %17 : vector<1152x1xf32>
    %19 = math.rsqrt %18 : vector<1152x1xf32>
    %20 = arith.mulf %16, %19 : vector<1152x1xf32>
    %21 = vector.broadcast %20 : vector<1152x1xf32> to vector<1152x49xf32>
    %22 = arith.mulf %8, %21 : vector<1152x49xf32>
    %23 = vector.extract_strided_slice %15 {offsets = [0, 1], sizes = [1152, 1], strides = [1, 1]} : vector<1152x8xf32> to vector<1152x1xf32>
    %24 = vector.broadcast %23 : vector<1152x1xf32> to vector<1152x49xf32>
    %25 = arith.addf %22, %24 : vector<1152x49xf32>
    %c0_10 = arith.constant 0 : index
    %c0_11 = arith.constant 0 : index
    %26 = vector.load %arg4[%c0_10, %c0_11] : memref<1152x49xf32, #tpu.memory_space<vmem>>, vector<1152x49xf32>
    tpu.vector_store %arg4[%c0_10, %c0_11], %25 {strides = array<i32>} : memref<1152x49xf32, #tpu.memory_space<vmem>>, vector<1152x49xf32>,
    return
  }
  func.func @transform_0(%arg0: i32) -> (i32, i32) {
    %c0_i32 = arith.constant 0 : i32
    %c0_i32_0 = arith.constant 0 : i32
    return %arg0, %c0_i32 : i32, i32
  }
  func.func @transform_1(%arg0: i32) -> (i32, i32) {
    %c0_i32 = arith.constant 0 : i32
    %c0_i32_0 = arith.constant 0 : i32
    %c0_i32_1 = arith.constant 0 : i32
    return %c0_i32, %c0_i32_0 : i32, i32
  }
  func.func @transform_2(%arg0: i32) -> (i32, i32) {
    %c0_i32 = arith.constant 0 : i32
    %c0_i32_0 = arith.constant 0 : i32
    return %c0_i32, %arg0 : i32, i32
  }
  func.func @transform_3(%arg0: i32) -> (i32, i32) {
    %c0_i32 = arith.constant 0 : i32
    %c0_i32_0 = arith.constant 0 : i32
    return %arg0, %c0_i32 : i32, i32
  }
}

</mosaic_0001>

<llo_original>
// kernel: tpu_custom_call.1
$region0: #{tpu_custom_call.1}
  #allocation0 [shape = 'u32[]', space=smem, size = 0x4, offset = 0x4, fixed_abs, tag = 'smem constant byte address 0x4 - core index']
  #allocation1 [shape = 'u32[144,128]{1,0:T(1,128)}', space=vmem, size = 0x12000, scoped, tag = 'internal scratch']
  %s0 = inlined_call_operand.hbm [shape: f32[2304,384], index: 0, kind: input, shape index: {}]
  %s1 = inlined_call_operand.vmem [shape: f32[384,49], index: 1, kind: input, shape index: {}]
  %s2 = inlined_call_operand.hbm [shape: f32[8,2304], index: 2, kind: input, shape index: {}]
  %s3 = inlined_call_operand.vmem [shape: f32[2304,49], index: 3, kind: output, shape index: {}]
  %s4 = sld [smem:[#allocation0]]
  $region53: #{tpu_custom_call.1} parent=0
    _
  %s6 = ssub.s32 1, %s4
  %s7 = scalar_select 0, %s6, %s4
  $region1: #{tpu_custom_call.1} parent=0
    #allocation2 [shape = 'u8[3538944]{0}', space=vmem, size = 0x360000, scoped, tag = 'input window, operand 0']
    #allocation3 [shape = 's32[2]{0}', space=sflag, size = 0x8, scoped, tag = 'scoped memory for tpu_custom_call.1']
    #allocation4 [shape = 'u8[73728]{0}', space=vmem, size = 0x12000, scoped, tag = 'input window, operand 2']
    #allocation5 [shape = 's32[2]{0}', space=sflag, size = 0x8, scoped, tag = 'scoped memory for tpu_custom_call.1']
    %8 = vsyncpa [#allocation3], 0
    %s9 = scalar_lea.sflag [#allocation3], 1
    %10 = vsyncpa %s9, 0
    %11 = vsyncpa [#allocation5], 0
    %s12 = scalar_lea.sflag [#allocation5], 1
    %13 = vsyncpa %s12, 0
    loop: start=0, step=1, limit=4
    $region2: #{tpu_custom_call.1} parent=1 // loop_pre_header
      _
    $region3: #{tpu_custom_call.1} parent=1 // loop_header
      %s15 = sphi 0, %s19
      %p16 = scmp.ge.s32.totalorder %s15, 4
      %s25 = sphi 0, %s27
      %s28 = sphi 0, %s25
      %s29 = sphi 0, %s28
      %s45 = sphi 0, %s29
      %s49 = sphi 0, %s49
      %s51 = sphi 0, %s49
      %s52 = sphi 0, %s51
      %s66 = sphi 0, %s52
      %s72 = sphi 0, %s74
      %s75 = sphi 0, %s72
      %s76 = sphi 0, %s75
      %s92 = sphi 0, %s76
      %s98 = sphi 0, %s100
      %s101 = sphi 0, %s98
      %s102 = sphi 0, %s101
      %s118 = sphi 0, %s102
    $region4: #{tpu_custom_call.1} parent=1 // loop_header_branch
      %18 = sbr.rel (%p16) target = $region8
    $region5: #{tpu_custom_call.1} parent=1 // loop_body
      %s20 = ssub.s32 %s15, 1
      %s21 = ssub.s32 %s15, 2
      %s22 = sadd.s32 %s15, 1
      %s23 = ssub.s32 %s15, %s22
      %p24 = scmp.eq.s32.totalorder %s23, 0
      %s26 = sadd.s32 %s25, 1
      %s27 = scalar_select %p24, %s25, %s26
      %p30 = pneg %p24
      %p31 = scmp.eq.s32.totalorder %s15, 1
      %p32 = por %p30, %p31
      %p33 = scmp.ne.s32.totalorder %s25, %s28
      %p34 = scmp.eq.s32.totalorder %s15, 0
      %p35 = por %p33, %p34
      %p36 = scmp.ne.s32.totalorder %s25, %s28
      %p37 = scmp.eq.s32.totalorder %s20, 1
      %p38 = por %p36, %p37
      %p39 = scmp.ne.s32.totalorder %s28, %s29
      %p40 = scmp.eq.s32.totalorder %s20, 0
      %p41 = por %p39, %p40
      %p42 = scmp.ne.s32.totalorder %s28, %s29
      %p43 = scmp.eq.s32.totalorder %s21, 1
      %p44 = por %p42, %p43
      %p46 = scmp.ne.s32.totalorder %s29, %s45
      %p47 = scmp.eq.s32.totalorder %s21, 0
      %p48 = por %p46, %p47
      %s50 = sadd.s32 %s49, 1
      %p53 = scmp.eq.s32.totalorder %s15, 1
      %p54 = scmp.ne.s32.totalorder %s49, %s51
      %p55 = scmp.eq.s32.totalorder %s15, 0
      %p56 = por %p54, %p55
      %p57 = scmp.ne.s32.totalorder %s49, %s51
      %p58 = scmp.eq.s32.totalorder %s20, 1
      %p59 = por %p57, %p58
      %p60 = scmp.ne.s32.totalorder %s51, %s52
      %p61 = scmp.eq.s32.totalorder %s20, 0
      %p62 = por %p60, %p61
      %p63 = scmp.ne.s32.totalorder %s51, %s52
      %p64 = scmp.eq.s32.totalorder %s21, 1
      %p65 = por %p63, %p64
      %p67 = scmp.ne.s32.totalorder %s52, %s66
      %p68 = scmp.eq.s32.totalorder %s21, 0
      %p69 = por %p67, %p68
      %s70 = ssub.s32 %s15, %s22
      %p71 = scmp.eq.s32.totalorder %s70, 0
      %s73 = sadd.s32 %s72, 1
      %s74 = scalar_select %p71, %s72, %s73
      %p77 = pneg %p71
      %p78 = scmp.eq.s32.totalorder %s15, 1
      %p79 = por %p77, %p78
      %p80 = scmp.ne.s32.totalorder %s72, %s75
      %p81 = scmp.eq.s32.totalorder %s15, 0
      %p82 = por %p80, %p81
      %p83 = scmp.ne.s32.totalorder %s72, %s75
      %p84 = scmp.eq.s32.totalorder %s20, 1
      %p85 = por %p83, %p84
      %p86 = scmp.ne.s32.totalorder %s75, %s76
      %p87 = scmp.eq.s32.totalorder %s20, 0
      %p88 = por %p86, %p87
      %p89 = scmp.ne.s32.totalorder %s75, %s76
      %p90 = scmp.eq.s32.totalorder %s21, 1
      %p91 = por %p89, %p90
      %p93 = scmp.ne.s32.totalorder %s76, %s92
      %p94 = scmp.eq.s32.totalorder %s21, 0
      %p95 = por %p93, %p94
      %s96 = ssub.s32 %s15, %s22
      %p97 = scmp.eq.s32.totalorder %s96, 0
      %s99 = sadd.s32 %s98, 1
      %s100 = scalar_select %p97, %s98, %s99
      %p103 = pneg %p97
      %p104 = scmp.eq.s32.totalorder %s15, 1
      %p105 = por %p103, %p104
      %p106 = scmp.ne.s32.totalorder %s98, %s101
      %p107 = scmp.eq.s32.totalorder %s15, 0
      %p108 = por %p106, %p107
      %p109 = scmp.ne.s32.totalorder %s98, %s101
      %p110 = scmp.eq.s32.totalorder %s20, 1
      %p111 = por %p109, %p110
      %p112 = scmp.ne.s32.totalorder %s101, %s102
      %p113 = scmp.eq.s32.totalorder %s20, 0
      %p114 = por %p112, %p113
      %p115 = scmp.ne.s32.totalorder %s101, %s102
      %p116 = scmp.eq.s32.totalorder %s21, 1
      %p117 = por %p115, %p116
      %p119 = scmp.ne.s32.totalorder %s102, %s118
      %p120 = scmp.eq.s32.totalorder %s21, 0
      %p121 = por %p119, %p120
      %p122 = scmp.le.s32.totalorder 1, %s15
      %p123 = scmp.lt.s32.totalorder %s15, 3
      %p124 = pnand %p122, %p123
      %p125 = pneg %p124
      // Predicated region
      $region9: #{tpu_custom_call.1} parent=5 // pred_check
        _
      $region10: #{tpu_custom_call.1} parent=5 // pred_check_branch
        %127 = sbr.rel (%p124) target = $region12
      $region11: #{tpu_custom_call.1} parent=5 // pred_region
        %s128 = ssub.s32 %s15, 1
        // Predicated region
        $region13: #{tpu_custom_call.1} parent=11 // pred_check
          %p129 = pneg %p62
        $region14: #{tpu_custom_call.1} parent=11 // pred_check_branch
          %131 = sbr.rel (%p129) target = $region16
        $region15: #{tpu_custom_call.1} parent=11 // pred_region
          _
        $region16: #{tpu_custom_call.1} parent=11 // pred_fallthru
          _
      $region12: #{tpu_custom_call.1} parent=5 // pred_fallthru
        _
      %p132 = scmp.lt.s32.totalorder %s15, 2
      // Predicated region
      $region17: #{tpu_custom_call.1} parent=5 // pred_check
        %p133 = pneg %p132
      $region18: #{tpu_custom_call.1} parent=5 // pred_check_branch
        %135 = sbr.rel (%p133) target = $region20
      $region19: #{tpu_custom_call.1} parent=5 // pred_region
        // Predicated region
        $region21: #{tpu_custom_call.1} parent=19 // pred_check
          %p136 = pneg %p35
        $region22: #{tpu_custom_call.1} parent=19 // pred_check_branch
          %138 = sbr.rel (%p136) target = $region24
        $region23: #{tpu_custom_call.1} parent=19 // pred_region
          %s139 = sand.u32 %s25, 1
          %s140 = scalar_lea.sflag [#allocation3], %s139
          %s141 = sand.u32 %s25, 1
          %s142 = smul.addr %s141, 3456
          %s143 = scalar_lea.vmem [#allocation2], %s142
          %s144 = smul.u32 144, %s15
          %s146 = ssub.s32 55296, 55296
          %147 = vsyncadd %s140, %s146
          %s148 = smul.addr %s144, 3
          %s149 = smul.addr %s148, 128
          %s150 = scalar_lea.hbm %s0, %s149
          %s151 = sshll.u32 %s143, 4
          %s152 = int_to_ptr.vmem [resolvable:$true] %s151
          %157 = dma.hbm_to_vmem [thread:$0]  %s150, 55296, %s152, %s140, 384, 384, 24
        $region24: #{tpu_custom_call.1} parent=19 // pred_fallthru
          _
        // Predicated region
        $region25: #{tpu_custom_call.1} parent=19 // pred_check
          %p158 = pneg %p82
        $region26: #{tpu_custom_call.1} parent=19 // pred_check_branch
          %160 = sbr.rel (%p158) target = $region28
        $region27: #{tpu_custom_call.1} parent=19 // pred_region
          %s161 = sand.u32 %s72, 1
          %s162 = scalar_lea.sflag [#allocation5], %s161
          %s163 = sand.u32 %s72, 1
          %s164 = smul.addr %s163, 72
          %s165 = scalar_lea.vmem [#allocation4], %s164
          %s166 = smul.u32 9, %s15
          %s168 = ssub.s32 1152, 1152
          %169 = vsyncadd %s162, %s168
          %s170 = smul.addr %s166, 128
          %s171 = scalar_lea.hbm %s2, %s170
          %s173 = sshll.u32 %s165, 4
          %s174 = int_to_ptr.vmem [resolvable:$true] %s173
          %176 = dma.hbm_to_vmem [thread:$0]  %s171, 1152, %s174, %s162
        $region28: #{tpu_custom_call.1} parent=19 // pred_fallthru
          _
      $region20: #{tpu_custom_call.1} parent=5 // pred_fallthru
        _
      %p177 = scmp.le.s32.totalorder 1, %s15
      %p178 = scmp.lt.s32.totalorder %s15, 3
      %p179 = pnand %p177, %p178
      %p180 = pneg %p179
      // Predicated region
      $region29: #{tpu_custom_call.1} parent=5 // pred_check
        _
      $region30: #{tpu_custom_call.1} parent=5 // pred_check_branch
        %182 = sbr.rel (%p179) target = $region32
      $region31: #{tpu_custom_call.1} parent=5 // pred_region
        %s183 = ssub.s32 %s15, 1
        %s184 = sand.u32 %s28, 1
        %s185 = scalar_lea.sflag [#allocation3], %s184
        %s186 = sand.u32 %s28, 1
        %s187 = smul.addr %s186, 3456
        %s188 = scalar_lea.vmem [#allocation2], %s187
        // Predicated region
        $region33: #{tpu_custom_call.1} parent=31 // pred_check
          %p189 = pneg %p41
        $region34: #{tpu_custom_call.1} parent=31 // pred_check_branch
          %191 = sbr.rel (%p189) target = $region36
        $region35: #{tpu_custom_call.1} parent=31 // pred_region
          %192 = dma.done %s185, 55296
        $region36: #{tpu_custom_call.1} parent=31 // pred_fallthru
          _
        %s193 = sand.u32 %s75, 1
        %s194 = scalar_lea.sflag [#allocation5], %s193
        %s195 = sand.u32 %s75, 1
        %s196 = smul.addr %s195, 72
        %s197 = scalar_lea.vmem [#allocation4], %s196
        // Predicated region
        $region37: #{tpu_custom_call.1} parent=31 // pred_check
          %p198 = pneg %p88
        $region38: #{tpu_custom_call.1} parent=31 // pred_check_branch
          %200 = sbr.rel (%p198) target = $region40
        $region39: #{tpu_custom_call.1} parent=31 // pred_region
          %201 = dma.done %s194, 1152
        $region40: #{tpu_custom_call.1} parent=31 // pred_fallthru
          _
        %s202 = sand.u32 %s28, 1
        %s203 = scalar_lea.sflag [#allocation3], %s202
        %s204 = sand.u32 %s28, 1
        %s205 = smul.addr %s204, 3456
        %s206 = scalar_lea.vmem [#allocation2], %s205
        %p207 = pneg %p41
        %p208 = pneg %p38
        %p209 = pneg %p62
        %p210 = pneg %p59
        %s211 = sand.u32 %s75, 1
        %s212 = scalar_lea.sflag [#allocation5], %s211
        %s213 = sand.u32 %s75, 1
        %s214 = smul.addr %s213, 72
        %s215 = scalar_lea.vmem [#allocation4], %s214
        %p216 = pneg %p88
        %p217 = pneg %p85
        %p218 = pneg %p114
        %p219 = pneg %p111
        %s220 = smul.u32 144, %s20
        %p221 = scmp.lt.s32.totalorder %s220, 287
        %s222 = scalar_select %p221, %s220, 287
        %s223 = smul.addr %s222, 8
        %s224 = scalar_lea.vmem %s3, %s223
        %s225 = smul.u32 144, %s20
        %s226 = smul.u32 9, %s20
        %s227 = smul.u32 144, %s20
        %p228 = scmp.lt.s32.totalorder %s227, 287
        %s229 = scalar_select %p228, %s227, 287
        %s230 = smul.addr %s229, 8
        %s231 = scalar_lea.vmem %s3, %s230
        %s232 = smul.u32 144, %s20
        %v233 = vld [vmem:[%s188] sm:$0xff]
        %v234 = vld [vmem:[%s188 + $0x8] sm:$0xff]
        %v235 = vld [vmem:[%s188 + $0x10] sm:$0xff]
        %v236 = vld [vmem:[%s188 + $0x18] sm:$0xff]
        %v237 = vld [vmem:[%s188 + $0x20] sm:$0xff]
        %v238 = vld [vmem:[%s188 + $0x28] sm:$0xff]
        %v239 = vld [vmem:[%s188 + $0x30] sm:$0xff]
        %v240 = vld [vmem:[%s188 + $0x38] sm:$0xff]
        %v241 = vld [vmem:[%s188 + $0x40] sm:$0xff]
        %v242 = vld [vmem:[%s188 + $0x48] sm:$0xff]
        %v243 = vld [vmem:[%s188 + $0x50] sm:$0xff]
        %v244 = vld [vmem:[%s188 + $0x58] sm:$0xff]
        %v245 = vld [vmem:[%s188 + $0x60] sm:$0xff]
        %v246 = vld [vmem:[%s188 + $0x68] sm:$0xff]
        %v247 = vld [vmem:[%s188 + $0x70] sm:$0xff]
        %v248 = vld [vmem:[%s188 + $0x78] sm:$0xff]
        %v249 = vld [vmem:[%s188 + $0x80] sm:$0xff]
        %v250 = vld [vmem:[%s188 + $0x88] sm:$0xff]
        %v251 = vld [vmem:[%s188 + $0x90] sm:$0xff]
        %v252 = vld [vmem:[%s188 + $0x98] sm:$0xff]
        %v253 = vld [vmem:[%s188 + $0xa0] sm:$0xff]
        %v254 = vld [vmem:[%s188 + $0xa8] sm:$0xff]
        %v255 = vld [vmem:[%s188 + $0xb0] sm:$0xff]
        %v256 = vld [vmem:[%s188 + $0xb8] sm:$0xff]
        %v257 = vld [vmem:[%s188 + $0xc0] sm:$0xff]
        %v258 = vld [vmem:[%s188 + $0xc8] sm:$0xff]
        %v259 = vld [vmem:[%s188 + $0xd0] sm:$0xff]
        %v260 = vld [vmem:[%s188 + $0xd8] sm:$0xff]
        %v261 = vld [vmem:[%s188 + $0xe0] sm:$0xff]
        %v262 = vld [vmem:[%s188 + $0xe8] sm:$0xff]
        %v263 = vld [vmem:[%s188 + $0xf0] sm:$0xff]
        %v264 = vld [vmem:[%s188 + $0xf8] sm:$0xff]
        %v265 = vld [vmem:[%s188 + $0x100] sm:$0xff]
        %v266 = vld [vmem:[%s188 + $0x108] sm:$0xff]
        %v267 = vld [vmem:[%s188 + $0x110] sm:$0xff]
        %v268 = vld [vmem:[%s188 + $0x118] sm:$0xff]
        %v269 = vld [vmem:[%s188 + $0x120] sm:$0xff]
        %v270 = vld [vmem:[%s188 + $0x128] sm:$0xff]
        %v271 = vld [vmem:[%s188 + $0x130] sm:$0xff]
        %v272 = vld [vmem:[%s188 + $0x138] sm:$0xff]
        %v273 = vld [vmem:[%s188 + $0x140] sm:$0xff]
        %v274 = vld [vmem:[%s188 + $0x148] sm:$0xff]
        %v275 = vld [vmem:[%s188 + $0x150] sm:$0xff]
        %v276 = vld [vmem:[%s188 + $0x158] sm:$0xff]
        %v277 = vld [vmem:[%s188 + $0x160] sm:$0xff]
        %v278 = vld [vmem:[%s188 + $0x168] sm:$0xff]
        %v279 = vld [vmem:[%s188 + $0x170] sm:$0xff]
        %v280 = vld [vmem:[%s188 + $0x178] sm:$0xff]
        %v281 = vld [vmem:[%s188 + $0x180] sm:$0xff]
        %v282 = vld [vmem:[%s188 + $0x188] sm:$0xff]
        %v283 = vld [vmem:[%s188 + $0x190] sm:$0xff]
        %v284 = vld [vmem:[%s188 + $0x198] sm:$0xff]
        %v285 = vld [vmem:[%s188 + $0x1a0] sm:$0xff]
        %v286 = vld [vmem:[%s188 + $0x1a8] sm:$0xff]
        %v287 = vld [vmem:[%s188 + $0x1b0] sm:$0xff]
        %v288 = vld [vmem:[%s188 + $0x1b8] sm:$0xff]
        %v289 = vld [vmem:[%s188 + $0x1c0] sm:$0xff]
        %v290 = vld [vmem:[%s188 + $0x1c8] sm:$0xff]
        %v291 = vld [vmem:[%s188 + $0x1d0] sm:$0xff]
        %v292 = vld [vmem:[%s188 + $0x1d8] sm:$0xff]
        %v293 = vld [vmem:[%s188 + $0x1e0] sm:$0xff]
        %v294 = vld [vmem:[%s188 + $0x1e8] sm:$0xff]
        %v295 = vld [vmem:[%s188 + $0x1f0] sm:$0xff]
        %v296 = vld [vmem:[%s188 + $0x1f8] sm:$0xff]
        %v297 = vld [vmem:[%s188 + $0x200] sm:$0xff]
        %v298 = vld [vmem:[%s188 + $0x208] sm:$0xff]
        %v299 = vld [vmem:[%s188 + $0x210] sm:$0xff]
        %v300 = vld [vmem:[%s188 + $0x218] sm:$0xff]
        %v301 = vld [vmem:[%s188 + $0x220] sm:$0xff]
        %v302 = vld [vmem:[%s188 + $0x228] sm:$0xff]
        %v303 = vld [vmem:[%s188 + $0x230] sm:$0xff]
        %v304 = vld [vmem:[%s188 + $0x238] sm:$0xff]
        %v305 = vld [vmem:[%s188 + $0x240] sm:$0xff]
        %v306 = vld [vmem:[%s188 + $0x248] sm:$0xff]
        %v307 = vld [vmem:[%s188 + $0x250] sm:$0xff]
        %v308 = vld [vmem:[%s188 + $0x258] sm:$0xff]
        %v309 = vld [vmem:[%s188 + $0x260] sm:$0xff]
        %v310 = vld [vmem:[%s188 + $0x268] sm:$0xff]
        %v311 = vld [vmem:[%s188 + $0x270] sm:$0xff]
        %v312 = vld [vmem:[%s188 + $0x278] sm:$0xff]
        %v313 = vld [vmem:[%s188 + $0x280] sm:$0xff]
        %v314 = vld [vmem:[%s188 + $0x288] sm:$0xff]
        %v315 = vld [vmem:[%s188 + $0x290] sm:$0xff]
        %v316 = vld [vmem:[%s188 + $0x298] sm:$0xff]
        %v317 = vld [vmem:[%s188 + $0x2a0] sm:$0xff]
        %v318 = vld [vmem:[%s188 + $0x2a8] sm:$0xff]
        %v319 = vld [vmem:[%s188 + $0x2b0] sm:$0xff]
        %v320 = vld [vmem:[%s188 + $0x2b8] sm:$0xff]
        %v321 = vld [vmem:[%s188 + $0x2c0] sm:$0xff]
        %v322 = vld [vmem:[%s188 + $0x2c8] sm:$0xff]
        %v323 = vld [vmem:[%s188 + $0x2d0] sm:$0xff]
        %v324 = vld [vmem:[%s188 + $0x2d8] sm:$0xff]
        %v325 = vld [vmem:[%s188 + $0x2e0] sm:$0xff]
        %v326 = vld [vmem:[%s188 + $0x2e8] sm:$0xff]
        %v327 = vld [vmem:[%s188 + $0x2f0] sm:$0xff]
        %v328 = vld [vmem:[%s188 + $0x2f8] sm:$0xff]
        %v329 = vld [vmem:[%s188 + $0x300] sm:$0xff]
        %v330 = vld [vmem:[%s188 + $0x308] sm:$0xff]
        %v331 = vld [vmem:[%s188 + $0x310] sm:$0xff]
        %v332 = vld [vmem:[%s188 + $0x318] sm:$0xff]
        %v333 = vld [vmem:[%s188 + $0x320] sm:$0xff]
        %v334 = vld [vmem:[%s188 + $0x328] sm:$0xff]
        %v335 = vld [vmem:[%s188 + $0x330] sm:$0xff]
        %v336 = vld [vmem:[%s188 + $0x338] sm:$0xff]
        %v337 = vld [vmem:[%s188 + $0x340] sm:$0xff]
        %v338 = vld [vmem:[%s188 + $0x348] sm:$0xff]
        %v339 = vld [vmem:[%s188 + $0x350] sm:$0xff]
        %v340 = vld [vmem:[%s188 + $0x358] sm:$0xff]
        %v341 = vld [vmem:[%s188 + $0x360] sm:$0xff]
        %v342 = vld [vmem:[%s188 + $0x368] sm:$0xff]
        %v343 = vld [vmem:[%s188 + $0x370] sm:$0xff]
        %v344 = vld [vmem:[%s188 + $0x378] sm:$0xff]
        %v345 = vld [vmem:[%s188 + $0x380] sm:$0xff]
        %v346 = vld [vmem:[%s188 + $0x388] sm:$0xff]
        %v347 = vld [vmem:[%s188 + $0x390] sm:$0xff]
        %v348 = vld [vmem:[%s188 + $0x398] sm:$0xff]
        %v349 = vld [vmem:[%s188 + $0x3a0] sm:$0xff]
        %v350 = vld [vmem:[%s188 + $0x3a8] sm:$0xff]
        %v351 = vld [vmem:[%s188 + $0x3b0] sm:$0xff]
        %v352 = vld [vmem:[%s188 + $0x3b8] sm:$0xff]
        %v353 = vld [vmem:[%s188 + $0x3c0] sm:$0xff]
        %v354 = vld [vmem:[%s188 + $0x3c8] sm:$0xff]
        %v355 = vld [vmem:[%s188 + $0x3d0] sm:$0xff]
        %v356 = vld [vmem:[%s188 + $0x3d8] sm:$0xff]
        %v357 = vld [vmem:[%s188 + $0x3e0] sm:$0xff]
        %v358 = vld [vmem:[%s188 + $0x3e8] sm:$0xff]
        %v359 = vld [vmem:[%s188 + $0x3f0] sm:$0xff]
        %v360 = vld [vmem:[%s188 + $0x3f8] sm:$0xff]
        %v361 = vld [vmem:[%s188 + $0x400] sm:$0xff]
        %v362 = vld [vmem:[%s188 + $0x408] sm:$0xff]
        %v363 = vld [vmem:[%s188 + $0x410] sm:$0xff]
        %v364 = vld [vmem:[%s188 + $0x418] sm:$0xff]
        %v365 = vld [vmem:[%s188 + $0x420] sm:$0xff]
        %v366 = vld [vmem:[%s188 + $0x428] sm:$0xff]
        %v367 = vld [vmem:[%s188 + $0x430] sm:$0xff]
        %v368 = vld [vmem:[%s188 + $0x438] sm:$0xff]
        %v369 = vld [vmem:[%s188 + $0x440] sm:$0xff]
        %v370 = vld [vmem:[%s188 + $0x448] sm:$0xff]
        %v371 = vld [vmem:[%s188 + $0x450] sm:$0xff]
        %v372 = vld [vmem:[%s188 + $0x458] sm:$0xff]
        %v373 = vld [vmem:[%s188 + $0x460] sm:$0xff]
        %v374 = vld [vmem:[%s188 + $0x468] sm:$0xff]
        %v375 = vld [vmem:[%s188 + $0x470] sm:$0xff]
        %v376 = vld [vmem:[%s188 + $0x478] sm:$0xff]
        %v377 = vld [vmem:[%s188 + $0x480] sm:$0xff]
        %v378 = vld [vmem:[%s188 + $0x488] sm:$0xff]
        %v379 = vld [vmem:[%s188 + $0x490] sm:$0xff]
        %v380 = vld [vmem:[%s188 + $0x498] sm:$0xff]
        %v381 = vld [vmem:[%s188 + $0x4a0] sm:$0xff]
        %v382 = vld [vmem:[%s188 + $0x4a8] sm:$0xff]
        %v383 = vld [vmem:[%s188 + $0x4b0] sm:$0xff]
        %v384 = vld [vmem:[%s188 + $0x4b8] sm:$0xff]
        %v385 = vld [vmem:[%s188 + $0x4c0] sm:$0xff]
        %v386 = vld [vmem:[%s188 + $0x4c8] sm:$0xff]
        %v387 = vld [vmem:[%s188 + $0x4d0] sm:$0xff]
        %v388 = vld [vmem:[%s188 + $0x4d8] sm:$0xff]
        %v389 = vld [vmem:[%s188 + $0x4e0] sm:$0xff]
        %v390 = vld [vmem:[%s188 + $0x4e8] sm:$0xff]
        %v391 = vld [vmem:[%s188 + $0x4f0] sm:$0xff]
        %v392 = vld [vmem:[%s188 + $0x4f8] sm:$0xff]
        %v393 = vld [vmem:[%s188 + $0x500] sm:$0xff]
        %v394 = vld [vmem:[%s188 + $0x508] sm:$0xff]
        %v395 = vld [vmem:[%s188 + $0x510] sm:$0xff]
        %v396 = vld [vmem:[%s188 + $0x518] sm:$0xff]
        %v397 = vld [vmem:[%s188 + $0x520] sm:$0xff]
        %v398 = vld [vmem:[%s188 + $0x528] sm:$0xff]
        %v399 = vld [vmem:[%s188 + $0x530] sm:$0xff]
        %v400 = vld [vmem:[%s188 + $0x538] sm:$0xff]
        %v401 = vld [vmem:[%s188 + $0x540] sm:$0xff]
        %v402 = vld [vmem:[%s188 + $0x548] sm:$0xff]
        %v403 = vld [vmem:[%s188 + $0x550] sm:$0xff]
        %v404 = vld [vmem:[%s188 + $0x558] sm:$0xff]
        %v405 = vld [vmem:[%s188 + $0x560] sm:$0xff]
        %v406 = vld [vmem:[%s188 + $0x568] sm:$0xff]
        %v407 = vld [vmem:[%s188 + $0x570] sm:$0xff]
        %v408 = vld [vmem:[%s188 + $0x578] sm:$0xff]
        %v409 = vld [vmem:[%s188 + $0x580] sm:$0xff]
        %v410 = vld [vmem:[%s188 + $0x588] sm:$0xff]
        %v411 = vld [vmem:[%s188 + $0x590] sm:$0xff]
        %v412 = vld [vmem:[%s188 + $0x598] sm:$0xff]
        %v413 = vld [vmem:[%s188 + $0x5a0] sm:$0xff]
        %v414 = vld [vmem:[%s188 + $0x5a8] sm:$0xff]
        %v415 = vld [vmem:[%s188 + $0x5b0] sm:$0xff]
        %v416 = vld [vmem:[%s188 + $0x5b8] sm:$0xff]
        %v417 = vld [vmem:[%s188 + $0x5c0] sm:$0xff]
        %v418 = vld [vmem:[%s188 + $0x5c8] sm:$0xff]
        %v419 = vld [vmem:[%s188 + $0x5d0] sm:$0xff]
        %v420 = vld [vmem:[%s188 + $0x5d8] sm:$0xff]
        %v421 = vld [vmem:[%s188 + $0x5e0] sm:$0xff]
        %v422 = vld [vmem:[%s188 + $0x5e8] sm:$0xff]
        %v423 = vld [vmem:[%s188 + $0x5f0] sm:$0xff]
        %v424 = vld [vmem:[%s188 + $0x5f8] sm:$0xff]
        %v425 = vld [vmem:[%s188 + $0x600] sm:$0xff]
        %v426 = vld [vmem:[%s188 + $0x608] sm:$0xff]
        %v427 = vld [vmem:[%s188 + $0x610] sm:$0xff]
        %v428 = vld [vmem:[%s188 + $0x618] sm:$0xff]
        %v429 = vld [vmem:[%s188 + $0x620] sm:$0xff]
        %v430 = vld [vmem:[%s188 + $0x628] sm:$0xff]
        %v431 = vld [vmem:[%s188 + $0x630] sm:$0xff]
        %v432 = vld [vmem:[%s188 + $0x638] sm:$0xff]
        %v433 = vld [vmem:[%s188 + $0x640] sm:$0xff]
        %v434 = vld [vmem:[%s188 + $0x648] sm:$0xff]
        %v435 = vld [vmem:[%s188 + $0x650] sm:$0xff]
        %v436 = vld [vmem:[%s188 + $0x658] sm:$0xff]
        %v437 = vld [vmem:[%s188 + $0x660] sm:$0xff]
        %v438 = vld [vmem:[%s188 + $0x668] sm:$0xff]
        %v439 = vld [vmem:[%s188 + $0x670] sm:$0xff]
        %v440 = vld [vmem:[%s188 + $0x678] sm:$0xff]
        %v441 = vld [vmem:[%s188 + $0x680] sm:$0xff]
        %v442 = vld [vmem:[%s188 + $0x688] sm:$0xff]
        %v443 = vld [vmem:[%s188 + $0x690] sm:$0xff]
        %v444 = vld [vmem:[%s188 + $0x698] sm:$0xff]
        %v445 = vld [vmem:[%s188 + $0x6a0] sm:$0xff]
        %v446 = vld [vmem:[%s188 + $0x6a8] sm:$0xff]
        %v447 = vld [vmem:[%s188 + $0x6b0] sm:$0xff]
        %v448 = vld [vmem:[%s188 + $0x6b8] sm:$0xff]
        %v449 = vld [vmem:[%s188 + $0x6c0] sm:$0xff]
        %v450 = vld [vmem:[%s188 + $0x6c8] sm:$0xff]
        %v451 = vld [vmem:[%s188 + $0x6d0] sm:$0xff]
        %v452 = vld [vmem:[%s188 + $0x6d8] sm:$0xff]
        %v453 = vld [vmem:[%s188 + $0x6e0] sm:$0xff]
        %v454 = vld [vmem:[%s188 + $0x6e8] sm:$0xff]
        %v455 = vld [vmem:[%s188 + $0x6f0] sm:$0xff]
        %v456 = vld [vmem:[%s188 + $0x6f8] sm:$0xff]
        %v457 = vld [vmem:[%s188 + $0x700] sm:$0xff]
        %v458 = vld [vmem:[%s188 + $0x708] sm:$0xff]
        %v459 = vld [vmem:[%s188 + $0x710] sm:$0xff]
        %v460 = vld [vmem:[%s188 + $0x718] sm:$0xff]
        %v461 = vld [vmem:[%s188 + $0x720] sm:$0xff]
        %v462 = vld [vmem:[%s188 + $0x728] sm:$0xff]
        %v463 = vld [vmem:[%s188 + $0x730] sm:$0xff]
        %v464 = vld [vmem:[%s188 + $0x738] sm:$0xff]
        %v465 = vld [vmem:[%s188 + $0x740] sm:$0xff]
        %v466 = vld [vmem:[%s188 + $0x748] sm:$0xff]
        %v467 = vld [vmem:[%s188 + $0x750] sm:$0xff]
        %v468 = vld [vmem:[%s188 + $0x758] sm:$0xff]
        %v469 = vld [vmem:[%s188 + $0x760] sm:$0xff]
        %v470 = vld [vmem:[%s188 + $0x768] sm:$0xff]
        %v471 = vld [vmem:[%s188 + $0x770] sm:$0xff]
        %v472 = vld [vmem:[%s188 + $0x778] sm:$0xff]
        %v473 = vld [vmem:[%s188 + $0x780] sm:$0xff]
        %v474 = vld [vmem:[%s188 + $0x788] sm:$0xff]
        %v475 = vld [vmem:[%s188 + $0x790] sm:$0xff]
        %v476 = vld [vmem:[%s188 + $0x798] sm:$0xff]
        %v477 = vld [vmem:[%s188 + $0x7a0] sm:$0xff]
        %v478 = vld [vmem:[%s188 + $0x7a8] sm:$0xff]
        %v479 = vld [vmem:[%s188 + $0x7b0] sm:$0xff]
        %v480 = vld [vmem:[%s188 + $0x7b8] sm:$0xff]
        %v481 = vld [vmem:[%s188 + $0x7c0] sm:$0xff]
        %v482 = vld [vmem:[%s188 + $0x7c8] sm:$0xff]
        %v483 = vld [vmem:[%s188 + $0x7d0] sm:$0xff]
        %v484 = vld [vmem:[%s188 + $0x7d8] sm:$0xff]
        %v485 = vld [vmem:[%s188 + $0x7e0] sm:$0xff]
        %v486 = vld [vmem:[%s188 + $0x7e8] sm:$0xff]
        %v487 = vld [vmem:[%s188 + $0x7f0] sm:$0xff]
        %v488 = vld [vmem:[%s188 + $0x7f8] sm:$0xff]
        %v489 = vld [vmem:[%s188 + $0x800] sm:$0xff]
        %v490 = vld [vmem:[%s188 + $0x808] sm:$0xff]
        %v491 = vld [vmem:[%s188 + $0x810] sm:$0xff]
        %v492 = vld [vmem:[%s188 + $0x818] sm:$0xff]
        %v493 = vld [vmem:[%s188 + $0x820] sm:$0xff]
        %v494 = vld [vmem:[%s188 + $0x828] sm:$0xff]
        %v495 = vld [vmem:[%s188 + $0x830] sm:$0xff]
        %v496 = vld [vmem:[%s188 + $0x838] sm:$0xff]
        %v497 = vld [vmem:[%s188 + $0x840] sm:$0xff]
        %v498 = vld [vmem:[%s188 + $0x848] sm:$0xff]
        %v499 = vld [vmem:[%s188 + $0x850] sm:$0xff]
        %v500 = vld [vmem:[%s188 + $0x858] sm:$0xff]
        %v501 = vld [vmem:[%s188 + $0x860] sm:$0xff]
        %v502 = vld [vmem:[%s188 + $0x868] sm:$0xff]
        %v503 = vld [vmem:[%s188 + $0x870] sm:$0xff]
        %v504 = vld [vmem:[%s188 + $0x878] sm:$0xff]
        %v505 = vld [vmem:[%s188 + $0x880] sm:$0xff]
        %v506 = vld [vmem:[%s188 + $0x888] sm:$0xff]
        %v507 = vld [vmem:[%s188 + $0x890] sm:$0xff]
        %v508 = vld [vmem:[%s188 + $0x898] sm:$0xff]
        %v509 = vld [vmem:[%s188 + $0x8a0] sm:$0xff]
        %v510 = vld [vmem:[%s188 + $0x8a8] sm:$0xff]
        %v511 = vld [vmem:[%s188 + $0x8b0] sm:$0xff]
        %v512 = vld [vmem:[%s188 + $0x8b8] sm:$0xff]
        %v513 = vld [vmem:[%s188 + $0x8c0] sm:$0xff]
        %v514 = vld [vmem:[%s188 + $0x8c8] sm:$0xff]
        %v515 = vld [vmem:[%s188 + $0x8d0] sm:$0xff]
        %v516 = vld [vmem:[%s188 + $0x8d8] sm:$0xff]
        %v517 = vld [vmem:[%s188 + $0x8e0] sm:$0xff]
        %v518 = vld [vmem:[%s188 + $0x8e8] sm:$0xff]
        %v519 = vld [vmem:[%s188 + $0x8f0] sm:$0xff]
        %v520 = vld [vmem:[%s188 + $0x8f8] sm:$0xff]
        %v521 = vld [vmem:[%s188 + $0x900] sm:$0xff]
        %v522 = vld [vmem:[%s188 + $0x908] sm:$0xff]
        %v523 = vld [vmem:[%s188 + $0x910] sm:$0xff]
        %v524 = vld [vmem:[%s188 + $0x918] sm:$0xff]
        %v525 = vld [vmem:[%s188 + $0x920] sm:$0xff]
        %v526 = vld [vmem:[%s188 + $0x928] sm:$0xff]
        %v527 = vld [vmem:[%s188 + $0x930] sm:$0xff]
        %v528 = vld [vmem:[%s188 + $0x938] sm:$0xff]
        %v529 = vld [vmem:[%s188 + $0x940] sm:$0xff]
        %v530 = vld [vmem:[%s188 + $0x948] sm:$0xff]
        %v531 = vld [vmem:[%s188 + $0x950] sm:$0xff]
        %v532 = vld [vmem:[%s188 + $0x958] sm:$0xff]
        %v533 = vld [vmem:[%s188 + $0x960] sm:$0xff]
        %v534 = vld [vmem:[%s188 + $0x968] sm:$0xff]
        %v535 = vld [vmem:[%s188 + $0x970] sm:$0xff]
        %v536 = vld [vmem:[%s188 + $0x978] sm:$0xff]
        %v537 = vld [vmem:[%s188 + $0x980] sm:$0xff]
        %v538 = vld [vmem:[%s188 + $0x988] sm:$0xff]
        %v539 = vld [vmem:[%s188 + $0x990] sm:$0xff]
        %v540 = vld [vmem:[%s188 + $0x998] sm:$0xff]
        %v541 = vld [vmem:[%s188 + $0x9a0] sm:$0xff]
        %v542 = vld [vmem:[%s188 + $0x9a8] sm:$0xff]
        %v543 = vld [vmem:[%s188 + $0x9b0] sm:$0xff]
        %v544 = vld [vmem:[%s188 + $0x9b8] sm:$0xff]
        %v545 = vld [vmem:[%s188 + $0x9c0] sm:$0xff]
        %v546 = vld [vmem:[%s188 + $0x9c8] sm:$0xff]
        %v547 = vld [vmem:[%s188 + $0x9d0] sm:$0xff]
        %v548 = vld [vmem:[%s188 + $0x9d8] sm:$0xff]
        %v549 = vld [vmem:[%s188 + $0x9e0] sm:$0xff]
        %v550 = vld [vmem:[%s188 + $0x9e8] sm:$0xff]
        %v551 = vld [vmem:[%s188 + $0x9f0] sm:$0xff]
        %v552 = vld [vmem:[%s188 + $0x9f8] sm:$0xff]
        %v553 = vld [vmem:[%s188 + $0xa00] sm:$0xff]
        %v554 = vld [vmem:[%s188 + $0xa08] sm:$0xff]
        %v555 = vld [vmem:[%s188 + $0xa10] sm:$0xff]
        %v556 = vld [vmem:[%s188 + $0xa18] sm:$0xff]
        %v557 = vld [vmem:[%s188 + $0xa20] sm:$0xff]
        %v558 = vld [vmem:[%s188 + $0xa28] sm:$0xff]
        %v559 = vld [vmem:[%s188 + $0xa30] sm:$0xff]
        %v560 = vld [vmem:[%s188 + $0xa38] sm:$0xff]
        %v561 = vld [vmem:[%s188 + $0xa40] sm:$0xff]
        %v562 = vld [vmem:[%s188 + $0xa48] sm:$0xff]
        %v563 = vld [vmem:[%s188 + $0xa50] sm:$0xff]
        %v564 = vld [vmem:[%s188 + $0xa58] sm:$0xff]
        %v565 = vld [vmem:[%s188 + $0xa60] sm:$0xff]
        %v566 = vld [vmem:[%s188 + $0xa68] sm:$0xff]
        %v567 = vld [vmem:[%s188 + $0xa70] sm:$0xff]
        %v568 = vld [vmem:[%s188 + $0xa78] sm:$0xff]
        %v569 = vld [vmem:[%s188 + $0xa80] sm:$0xff]
        %v570 = vld [vmem:[%s188 + $0xa88] sm:$0xff]
        %v571 = vld [vmem:[%s188 + $0xa90] sm:$0xff]
        %v572 = vld [vmem:[%s188 + $0xa98] sm:$0xff]
        %v573 = vld [vmem:[%s188 + $0xaa0] sm:$0xff]
        %v574 = vld [vmem:[%s188 + $0xaa8] sm:$0xff]
        %v575 = vld [vmem:[%s188 + $0xab0] sm:$0xff]
        %v576 = vld [vmem:[%s188 + $0xab8] sm:$0xff]
        %v577 = vld [vmem:[%s188 + $0xac0] sm:$0xff]
        %v578 = vld [vmem:[%s188 + $0xac8] sm:$0xff]
        %v579 = vld [vmem:[%s188 + $0xad0] sm:$0xff]
        %v580 = vld [vmem:[%s188 + $0xad8] sm:$0xff]
        %v581 = vld [vmem:[%s188 + $0xae0] sm:$0xff]
        %v582 = vld [vmem:[%s188 + $0xae8] sm:$0xff]
        %v583 = vld [vmem:[%s188 + $0xaf0] sm:$0xff]
        %v584 = vld [vmem:[%s188 + $0xaf8] sm:$0xff]
        %v585 = vld [vmem:[%s188 + $0xb00] sm:$0xff]
        %v586 = vld [vmem:[%s188 + $0xb08] sm:$0xff]
        %v587 = vld [vmem:[%s188 + $0xb10] sm:$0xff]
        %v588 = vld [vmem:[%s188 + $0xb18] sm:$0xff]
        %v589 = vld [vmem:[%s188 + $0xb20] sm:$0xff]
        %v590 = vld [vmem:[%s188 + $0xb28] sm:$0xff]
        %v591 = vld [vmem:[%s188 + $0xb30] sm:$0xff]
        %v592 = vld [vmem:[%s188 + $0xb38] sm:$0xff]
        %v593 = vld [vmem:[%s188 + $0xb40] sm:$0xff]
        %v594 = vld [vmem:[%s188 + $0xb48] sm:$0xff]
        %v595 = vld [vmem:[%s188 + $0xb50] sm:$0xff]
        %v596 = vld [vmem:[%s188 + $0xb58] sm:$0xff]
        %v597 = vld [vmem:[%s188 + $0xb60] sm:$0xff]
        %v598 = vld [vmem:[%s188 + $0xb68] sm:$0xff]
        %v599 = vld [vmem:[%s188 + $0xb70] sm:$0xff]
        %v600 = vld [vmem:[%s188 + $0xb78] sm:$0xff]
        %v601 = vld [vmem:[%s188 + $0xb80] sm:$0xff]
        %v602 = vld [vmem:[%s188 + $0xb88] sm:$0xff]
        %v603 = vld [vmem:[%s188 + $0xb90] sm:$0xff]
        %v604 = vld [vmem:[%s188 + $0xb98] sm:$0xff]
        %v605 = vld [vmem:[%s188 + $0xba0] sm:$0xff]
        %v606 = vld [vmem:[%s188 + $0xba8] sm:$0xff]
        %v607 = vld [vmem:[%s188 + $0xbb0] sm:$0xff]
        %v608 = vld [vmem:[%s188 + $0xbb8] sm:$0xff]
        %v609 = vld [vmem:[%s188 + $0xbc0] sm:$0xff]
        %v610 = vld [vmem:[%s188 + $0xbc8] sm:$0xff]
        %v611 = vld [vmem:[%s188 + $0xbd0] sm:$0xff]
        %v612 = vld [vmem:[%s188 + $0xbd8] sm:$0xff]
        %v613 = vld [vmem:[%s188 + $0xbe0] sm:$0xff]
        %v614 = vld [vmem:[%s188 + $0xbe8] sm:$0xff]
        %v615 = vld [vmem:[%s188 + $0xbf0] sm:$0xff]
        %v616 = vld [vmem:[%s188 + $0xbf8] sm:$0xff]
        %v617 = vld [vmem:[%s188 + $0xc00] sm:$0xff]
        %v618 = vld [vmem:[%s188 + $0xc08] sm:$0xff]
        %v619 = vld [vmem:[%s188 + $0xc10] sm:$0xff]
        %v620 = vld [vmem:[%s188 + $0xc18] sm:$0xff]
        %v621 = vld [vmem:[%s188 + $0xc20] sm:$0xff]
        %v622 = vld [vmem:[%s188 + $0xc28] sm:$0xff]
        %v623 = vld [vmem:[%s188 + $0xc30] sm:$0xff]
        %v624 = vld [vmem:[%s188 + $0xc38] sm:$0xff]
        %v625 = vld [vmem:[%s188 + $0xc40] sm:$0xff]
        %v626 = vld [vmem:[%s188 + $0xc48] sm:$0xff]
        %v627 = vld [vmem:[%s188 + $0xc50] sm:$0xff]
        %v628 = vld [vmem:[%s188 + $0xc58] sm:$0xff]
        %v629 = vld [vmem:[%s188 + $0xc60] sm:$0xff]
        %v630 = vld [vmem:[%s188 + $0xc68] sm:$0xff]
        %v631 = vld [vmem:[%s188 + $0xc70] sm:$0xff]
        %v632 = vld [vmem:[%s188 + $0xc78] sm:$0xff]
        %v633 = vld [vmem:[%s188 + $0xc80] sm:$0xff]
        %v634 = vld [vmem:[%s188 + $0xc88] sm:$0xff]
        %v635 = vld [vmem:[%s188 + $0xc90] sm:$0xff]
        %v636 = vld [vmem:[%s188 + $0xc98] sm:$0xff]
        %v637 = vld [vmem:[%s188 + $0xca0] sm:$0xff]
        %v638 = vld [vmem:[%s188 + $0xca8] sm:$0xff]
        %v639 = vld [vmem:[%s188 + $0xcb0] sm:$0xff]
        %v640 = vld [vmem:[%s188 + $0xcb8] sm:$0xff]
        %v641 = vld [vmem:[%s188 + $0xcc0] sm:$0xff]
        %v642 = vld [vmem:[%s188 + $0xcc8] sm:$0xff]
        %v643 = vld [vmem:[%s188 + $0xcd0] sm:$0xff]
        %v644 = vld [vmem:[%s188 + $0xcd8] sm:$0xff]
        %v645 = vld [vmem:[%s188 + $0xce0] sm:$0xff]
        %v646 = vld [vmem:[%s188 + $0xce8] sm:$0xff]
        %v647 = vld [vmem:[%s188 + $0xcf0] sm:$0xff]
        %v648 = vld [vmem:[%s188 + $0xcf8] sm:$0xff]
        %v649 = vld [vmem:[%s188 + $0xd00] sm:$0xff]
        %v650 = vld [vmem:[%s188 + $0xd08] sm:$0xff]
        %v651 = vld [vmem:[%s188 + $0xd10] sm:$0xff]
        %v652 = vld [vmem:[%s188 + $0xd18] sm:$0xff]
        %v653 = vld [vmem:[%s188 + $0xd20] sm:$0xff]
        %v654 = vld [vmem:[%s188 + $0xd28] sm:$0xff]
        %v655 = vld [vmem:[%s188 + $0xd30] sm:$0xff]
        %v656 = vld [vmem:[%s188 + $0xd38] sm:$0xff]
        %v657 = vld [vmem:[%s188 + $0xd40] sm:$0xff]
        %v658 = vld [vmem:[%s188 + $0xd48] sm:$0xff]
        %v659 = vld [vmem:[%s188 + $0xd50] sm:$0xff]
        %v660 = vld [vmem:[%s188 + $0xd58] sm:$0xff]
        %v661 = vld [vmem:[%s188 + $0xd60] sm:$0xff]
        %v662 = vld [vmem:[%s188 + $0xd68] sm:$0xff]
        %v663 = vld [vmem:[%s188 + $0xd70] sm:$0xff]
        %v664 = vld [vmem:[%s188 + $0xd78] sm:$0xff]
        %v665 = vld [vmem:[%s1] sm:$0xff]
        %v666 = vld [vmem:[%s1 + $0x8] sm:$0xff]
        %v667 = vld [vmem:[%s1 + $0x10] sm:$0xff]
        %v668 = vld [vmem:[%s1 + $0x18] sm:$0xff]
        %v669 = vld [vmem:[%s1 + $0x20] sm:$0xff]
        %v670 = vld [vmem:[%s1 + $0x28] sm:$0xff]
        %v671 = vld [vmem:[%s1 + $0x30] sm:$0xff]
        %v672 = vld [vmem:[%s1 + $0x38] sm:$0xff]
        %v673 = vld [vmem:[%s1 + $0x40] sm:$0xff]
        %v674 = vld [vmem:[%s1 + $0x48] sm:$0xff]
        %v675 = vld [vmem:[%s1 + $0x50] sm:$0xff]
        %v676 = vld [vmem:[%s1 + $0x58] sm:$0xff]
        %v677 = vld [vmem:[%s1 + $0x60] sm:$0xff]
        %v678 = vld [vmem:[%s1 + $0x68] sm:$0xff]
        %v679 = vld [vmem:[%s1 + $0x70] sm:$0xff]
        %v680 = vld [vmem:[%s1 + $0x78] sm:$0xff]
        %v681 = vld [vmem:[%s1 + $0x80] sm:$0xff]
        %v682 = vld [vmem:[%s1 + $0x88] sm:$0xff]
        %v683 = vld [vmem:[%s1 + $0x90] sm:$0xff]
        %v684 = vld [vmem:[%s1 + $0x98] sm:$0xff]
        %v685 = vld [vmem:[%s1 + $0xa0] sm:$0xff]
        %v686 = vld [vmem:[%s1 + $0xa8] sm:$0xff]
        %v687 = vld [vmem:[%s1 + $0xb0] sm:$0xff]
        %v688 = vld [vmem:[%s1 + $0xb8] sm:$0xff]
        %v689 = vld [vmem:[%s1 + $0xc0] sm:$0xff]
        %v690 = vld [vmem:[%s1 + $0xc8] sm:$0xff]
        %v691 = vld [vmem:[%s1 + $0xd0] sm:$0xff]
        %v692 = vld [vmem:[%s1 + $0xd8] sm:$0xff]
        %v693 = vld [vmem:[%s1 + $0xe0] sm:$0xff]
        %v694 = vld [vmem:[%s1 + $0xe8] sm:$0xff]
        %v695 = vld [vmem:[%s1 + $0xf0] sm:$0xff]
        %v696 = vld [vmem:[%s1 + $0xf8] sm:$0xff]
        %v697 = vld [vmem:[%s1 + $0x100] sm:$0xff]
        %v698 = vld [vmem:[%s1 + $0x108] sm:$0xff]
        %v699 = vld [vmem:[%s1 + $0x110] sm:$0xff]
        %v700 = vld [vmem:[%s1 + $0x118] sm:$0xff]
        %v701 = vld [vmem:[%s1 + $0x120] sm:$0xff]
        %v702 = vld [vmem:[%s1 + $0x128] sm:$0xff]
        %v703 = vld [vmem:[%s1 + $0x130] sm:$0xff]
        %v704 = vld [vmem:[%s1 + $0x138] sm:$0xff]
        %v705 = vld [vmem:[%s1 + $0x140] sm:$0xff]
        %v706 = vld [vmem:[%s1 + $0x148] sm:$0xff]
        %v707 = vld [vmem:[%s1 + $0x150] sm:$0xff]
        %v708 = vld [vmem:[%s1 + $0x158] sm:$0xff]
        %v709 = vld [vmem:[%s1 + $0x160] sm:$0xff]
        %v710 = vld [vmem:[%s1 + $0x168] sm:$0xff]
        %v711 = vld [vmem:[%s1 + $0x170] sm:$0xff]
        %v712 = vld [vmem:[%s1 + $0x178] sm:$0xff]
        %713 = vmatprep.subr.mxu0 0.0
        %714 = vmatpush1.msra.mxu0 %v680
        %715 = vmatprep.subr.mxu0 0.0
        %716 = vmatpush1.msra.mxu0 %v679
        %717 = vmatprep.subr.mxu0 0.0
        %718 = vmatpush1.msra.mxu0 %v678
        %719 = vmatprep.subr.mxu0 0.0
        %720 = vmatpush1.msra.mxu0 %v677
        %721 = vmatprep.subr.mxu0 0.0
        %722 = vmatpush1.msra.mxu0 %v676
        %723 = vmatprep.subr.mxu0 0.0
        %724 = vmatpush1.msra.mxu0 %v675
        %725 = vmatprep.subr.mxu0 0.0
        %726 = vmatpush1.msra.mxu0 %v674
        %727 = vmatprep.subr.mxu0 0.0
        %728 = vmatpush1.msra.mxu0 %v673
        %729 = vmatprep.subr.mxu0 0.0
        %730 = vmatpush1.msra.mxu0 %v672
        %731 = vmatprep.subr.mxu0 0.0
        %732 = vmatpush1.msra.mxu0 %v671
        %733 = vmatprep.subr.mxu0 0.0
        %734 = vmatpush1.msra.mxu0 %v670
        %735 = vmatprep.subr.mxu0 0.0
        %736 = vmatpush1.msra.mxu0 %v669
        %737 = vmatprep.subr.mxu0 0.0
        %738 = vmatpush1.msra.mxu0 %v668
        %739 = vmatprep.subr.mxu0 0.0
        %740 = vmatpush1.msra.mxu0 %v667
        %741 = vmatprep.subr.mxu0 0.0
        %742 = vmatpush1.msra.mxu0 %v666
        %743 = vmatprep.subr.mxu0 0.0
        %744 = vmatpush1.msra.mxu0 %v665
        %745 = vmatprep.subr.mxu0 0.0
        %746 = vmatpush2.msra.mxu0 %v696
        %747 = vmatprep.subr.mxu0 0.0
        %748 = vmatpush2.msra.mxu0 %v695
        %749 = vmatprep.subr.mxu0 0.0
        %750 = vmatpush2.msra.mxu0 %v694
        %751 = vmatprep.subr.mxu0 0.0
        %752 = vmatpush2.msra.mxu0 %v693
        %753 = vmatprep.subr.mxu0 0.0
        %754 = vmatpush2.msra.mxu0 %v692
        %755 = vmatprep.subr.mxu0 0.0
        %756 = vmatpush2.msra.mxu0 %v691
        %757 = vmatprep.subr.mxu0 0.0
        %758 = vmatpush2.msra.mxu0 %v690
        %759 = vmatprep.subr.mxu0 0.0
        %760 = vmatpush2.msra.mxu0 %v689
        %761 = vmatprep.subr.mxu0 0.0
        %762 = vmatpush2.msra.mxu0 %v688
        %763 = vmatprep.subr.mxu0 0.0
        %764 = vmatpush2.msra.mxu0 %v687
        %765 = vmatprep.subr.mxu0 0.0
        %766 = vmatpush2.msra.mxu0 %v686
        %767 = vmatprep.subr.mxu0 0.0
        %768 = vmatpush2.msra.mxu0 %v685
        %769 = vmatprep.subr.mxu0 0.0
        %770 = vmatpush2.msra.mxu0 %v684
        %771 = vmatprep.subr.mxu0 0.0
        %772 = vmatpush2.msra.mxu0 %v683
        %773 = vmatprep.subr.mxu0 0.0
        %774 = vmatpush2.msra.mxu0 %v682
        %775 = vmatprep.subr.mxu0 0.0
        %776 = vmatpush2.msra.mxu0 %v681
        %777 = vmatprep.mubr.f32.mxu0 %v234
        %778 = vmatmul.mubr.f32.gmra.mxu0 %v233
        %v779 = vpop.f32.mrf.mxu0
        %v780 = vadd.f32 0.0, %v779
        %v781 = vpop.f32.mrf.mxu0
        %782 = vmatprep.mubr.f32.mxu0 %v237
        %783 = vmatmul.mubr.f32.gmra.mxu0 %v236
        %v784 = vpop.f32.mrf.mxu0
        %v785 = vadd.f32 0.0, %v784
        %v786 = vpop.f32.mrf.mxu0
        %787 = vmatprep.mubr.f32.mxu0 %v240
        %788 = vmatmul.mubr.f32.gmra.mxu0 %v239
        %v789 = vpop.f32.mrf.mxu0
        %v790 = vadd.f32 0.0, %v789
        %v791 = vpop.f32.mrf.mxu0
        %792 = vmatprep.mubr.f32.mxu0 %v243
        %793 = vmatmul.mubr.f32.gmra.mxu0 %v242
        %v794 = vpop.f32.mrf.mxu0
        %v795 = vadd.f32 0.0, %v794
        %v796 = vpop.f32.mrf.mxu0
        %797 = vmatprep.mubr.f32.mxu0 %v246
        %798 = vmatmul.mubr.f32.gmra.mxu0 %v245
        %v799 = vpop.f32.mrf.mxu0
        %v800 = vadd.f32 0.0, %v799
        %v801 = vpop.f32.mrf.mxu0
        %802 = vmatprep.mubr.f32.mxu0 %v249
        %803 = vmatmul.mubr.f32.gmra.mxu0 %v248
        %v804 = vpop.f32.mrf.mxu0
        %v805 = vadd.f32 0.0, %v804
        %v806 = vpop.f32.mrf.mxu0
        %807 = vmatprep.mubr.f32.mxu0 %v252
        %808 = vmatmul.mubr.f32.gmra.mxu0 %v251
        %v809 = vpop.f32.mrf.mxu0
        %v810 = vadd.f32 0.0, %v809
        %v811 = vpop.f32.mrf.mxu0
        %812 = vmatprep.mubr.f32.mxu0 %v255
        %813 = vmatmul.mubr.f32.gmra.mxu0 %v254
        %v814 = vpop.f32.mrf.mxu0
        %v815 = vadd.f32 0.0, %v814
        %v816 = vpop.f32.mrf.mxu0
        %817 = vmatprep.mubr.f32.mxu0 %v258
        %818 = vmatmul.mubr.f32.gmra.mxu0 %v257
        %v819 = vpop.f32.mrf.mxu0
        %v820 = vadd.f32 0.0, %v819
        %v821 = vpop.f32.mrf.mxu0
        %822 = vmatprep.mubr.f32.mxu0 %v261
        %823 = vmatmul.mubr.f32.gmra.mxu0 %v260
        %v824 = vpop.f32.mrf.mxu0
        %v825 = vadd.f32 0.0, %v824
        %v826 = vpop.f32.mrf.mxu0
        %827 = vmatprep.mubr.f32.mxu0 %v264
        %828 = vmatmul.mubr.f32.gmra.mxu0 %v263
        %v829 = vpop.f32.mrf.mxu0
        %v830 = vadd.f32 0.0, %v829
        %v831 = vpop.f32.mrf.mxu0
        %832 = vmatprep.mubr.f32.mxu0 %v267
        %833 = vmatmul.mubr.f32.gmra.mxu0 %v266
        %v834 = vpop.f32.mrf.mxu0
        %v835 = vadd.f32 0.0, %v834
        %v836 = vpop.f32.mrf.mxu0
        %837 = vmatprep.mubr.f32.mxu0 %v270
        %838 = vmatmul.mubr.f32.gmra.mxu0 %v269
        %v839 = vpop.f32.mrf.mxu0
        %v840 = vadd.f32 0.0, %v839
        %v841 = vpop.f32.mrf.mxu0
        %842 = vmatprep.mubr.f32.mxu0 %v273
        %843 = vmatmul.mubr.f32.gmra.mxu0 %v272
        %v844 = vpop.f32.mrf.mxu0
        %v845 = vadd.f32 0.0, %v844
        %v846 = vpop.f32.mrf.mxu0
        %847 = vmatprep.mubr.f32.mxu0 %v276
        %848 = vmatmul.mubr.f32.gmra.mxu0 %v275
        %v849 = vpop.f32.mrf.mxu0
        %v850 = vadd.f32 0.0, %v849
        %v851 = vpop.f32.mrf.mxu0
        %852 = vmatprep.mubr.f32.mxu0 %v279
        %853 = vmatmul.mubr.f32.gmra.mxu0 %v278
        %v854 = vpop.f32.mrf.mxu0
        %v855 = vadd.f32 0.0, %v854
        %v856 = vpop.f32.mrf.mxu0
        %857 = vmatprep.mubr.f32.mxu0 %v282
        %858 = vmatmul.mubr.f32.gmra.mxu0 %v281
        %v859 = vpop.f32.mrf.mxu0
        %v860 = vadd.f32 0.0, %v859
        %v861 = vpop.f32.mrf.mxu0
        %862 = vmatprep.mubr.f32.mxu0 %v285
        %863 = vmatmul.mubr.f32.gmra.mxu0 %v284
        %v864 = vpop.f32.mrf.mxu0
        %v865 = vadd.f32 0.0, %v864
        %v866 = vpop.f32.mrf.mxu0
        %867 = vmatprep.mubr.f32.mxu0 %v288
        %868 = vmatmul.mubr.f32.gmra.mxu0 %v287
        %v869 = vpop.f32.mrf.mxu0
        %v870 = vadd.f32 0.0, %v869
        %v871 = vpop.f32.mrf.mxu0
        %872 = vmatprep.mubr.f32.mxu0 %v291
        %873 = vmatmul.mubr.f32.gmra.mxu0 %v290
        %v874 = vpop.f32.mrf.mxu0
        %v875 = vadd.f32 0.0, %v874
        %v876 = vpop.f32.mrf.mxu0
        %877 = vmatprep.mubr.f32.mxu0 %v294
        %878 = vmatmul.mubr.f32.gmra.mxu0 %v293
        %v879 = vpop.f32.mrf.mxu0
        %v880 = vadd.f32 0.0, %v879
        %v881 = vpop.f32.mrf.mxu0
        %882 = vmatprep.mubr.f32.mxu0 %v297
        %883 = vmatmul.mubr.f32.gmra.mxu0 %v296
        %v884 = vpop.f32.mrf.mxu0
        %v885 = vadd.f32 0.0, %v884
        %v886 = vpop.f32.mrf.mxu0
        %887 = vmatprep.mubr.f32.mxu0 %v300
        %888 = vmatmul.mubr.f32.gmra.mxu0 %v299
        %v889 = vpop.f32.mrf.mxu0
        %v890 = vadd.f32 0.0, %v889
        %v891 = vpop.f32.mrf.mxu0
        %892 = vmatprep.mubr.f32.mxu0 %v303
        %893 = vmatmul.mubr.f32.gmra.mxu0 %v302
        %v894 = vpop.f32.mrf.mxu0
        %v895 = vadd.f32 0.0, %v894
        %v896 = vpop.f32.mrf.mxu0
        %897 = vmatprep.mubr.f32.mxu0 %v306
        %898 = vmatmul.mubr.f32.gmra.mxu0 %v305
        %v899 = vpop.f32.mrf.mxu0
        %v900 = vadd.f32 0.0, %v899
        %v901 = vpop.f32.mrf.mxu0
        %902 = vmatprep.mubr.f32.mxu0 %v309
        %903 = vmatmul.mubr.f32.gmra.mxu0 %v308
        %v904 = vpop.f32.mrf.mxu0
        %v905 = vadd.f32 0.0, %v904
        %v906 = vpop.f32.mrf.mxu0
        %907 = vmatprep.mubr.f32.mxu0 %v312
        %908 = vmatmul.mubr.f32.gmra.mxu0 %v311
        %v909 = vpop.f32.mrf.mxu0
        %v910 = vadd.f32 0.0, %v909
        %v911 = vpop.f32.mrf.mxu0
        %912 = vmatprep.mubr.f32.mxu0 %v315
        %913 = vmatmul.mubr.f32.gmra.mxu0 %v314
        %v914 = vpop.f32.mrf.mxu0
        %v915 = vadd.f32 0.0, %v914
        %v916 = vpop.f32.mrf.mxu0
        %917 = vmatprep.mubr.f32.mxu0 %v318
        %918 = vmatmul.mubr.f32.gmra.mxu0 %v317
        %v919 = vpop.f32.mrf.mxu0
        %v920 = vadd.f32 0.0, %v919
        %v921 = vpop.f32.mrf.mxu0
        %922 = vmatprep.mubr.f32.mxu0 %v321
        %923 = vmatmul.mubr.f32.gmra.mxu0 %v320
        %v924 = vpop.f32.mrf.mxu0
        %v925 = vadd.f32 0.0, %v924
        %v926 = vpop.f32.mrf.mxu0
        %927 = vmatprep.mubr.f32.mxu0 %v324
        %928 = vmatmul.mubr.f32.gmra.mxu0 %v323
        %v929 = vpop.f32.mrf.mxu0
        %v930 = vadd.f32 0.0, %v929
        %v931 = vpop.f32.mrf.mxu0
        %932 = vmatprep.mubr.f32.mxu0 %v327
        %933 = vmatmul.mubr.f32.gmra.mxu0 %v326
        %v934 = vpop.f32.mrf.mxu0
        %v935 = vadd.f32 0.0, %v934
        %v936 = vpop.f32.mrf.mxu0
        %937 = vmatprep.mubr.f32.mxu0 %v330
        %938 = vmatmul.mubr.f32.gmra.mxu0 %v329
        %v939 = vpop.f32.mrf.mxu0
        %v940 = vadd.f32 0.0, %v939
        %v941 = vpop.f32.mrf.mxu0
        %942 = vmatprep.mubr.f32.mxu0 %v333
        %943 = vmatmul.mubr.f32.gmra.mxu0 %v332
        %v944 = vpop.f32.mrf.mxu0
        %v945 = vadd.f32 0.0, %v944
        %v946 = vpop.f32.mrf.mxu0
        %947 = vmatprep.mubr.f32.mxu0 %v336
        %948 = vmatmul.mubr.f32.gmra.mxu0 %v335
        %v949 = vpop.f32.mrf.mxu0
        %v950 = vadd.f32 0.0, %v949
        %v951 = vpop.f32.mrf.mxu0
        %952 = vmatprep.mubr.f32.mxu0 %v339
        %953 = vmatmul.mubr.f32.gmra.mxu0 %v338
        %v954 = vpop.f32.mrf.mxu0
        %v955 = vadd.f32 0.0, %v954
        %v956 = vpop.f32.mrf.mxu0
        %957 = vmatprep.mubr.f32.mxu0 %v342
        %958 = vmatmul.mubr.f32.gmra.mxu0 %v341
        %v959 = vpop.f32.mrf.mxu0
        %v960 = vadd.f32 0.0, %v959
        %v961 = vpop.f32.mrf.mxu0
        %962 = vmatprep.mubr.f32.mxu0 %v345
        %963 = vmatmul.mubr.f32.gmra.mxu0 %v344
        %v964 = vpop.f32.mrf.mxu0
        %v965 = vadd.f32 0.0, %v964
        %v966 = vpop.f32.mrf.mxu0
        %967 = vmatprep.mubr.f32.mxu0 %v348
        %968 = vmatmul.mubr.f32.gmra.mxu0 %v347
        %v969 = vpop.f32.mrf.mxu0
        %v970 = vadd.f32 0.0, %v969
        %v971 = vpop.f32.mrf.mxu0
        %972 = vmatprep.mubr.f32.mxu0 %v351
        %973 = vmatmul.mubr.f32.gmra.mxu0 %v350
        %v974 = vpop.f32.mrf.mxu0
        %v975 = vadd.f32 0.0, %v974
        %v976 = vpop.f32.mrf.mxu0
        %977 = vmatprep.mubr.f32.mxu0 %v354
        %978 = vmatmul.mubr.f32.gmra.mxu0 %v353
        %v979 = vpop.f32.mrf.mxu0
        %v980 = vadd.f32 0.0, %v979
        %v981 = vpop.f32.mrf.mxu0
        %982 = vmatprep.mubr.f32.mxu0 %v357
        %983 = vmatmul.mubr.f32.gmra.mxu0 %v356
        %v984 = vpop.f32.mrf.mxu0
        %v985 = vadd.f32 0.0, %v984
        %v986 = vpop.f32.mrf.mxu0
        %987 = vmatprep.mubr.f32.mxu0 %v360
        %988 = vmatmul.mubr.f32.gmra.mxu0 %v359
        %v989 = vpop.f32.mrf.mxu0
        %v990 = vadd.f32 0.0, %v989
        %v991 = vpop.f32.mrf.mxu0
        %992 = vmatprep.mubr.f32.mxu0 %v363
        %993 = vmatmul.mubr.f32.gmra.mxu0 %v362
        %v994 = vpop.f32.mrf.mxu0
        %v995 = vadd.f32 0.0, %v994
        %v996 = vpop.f32.mrf.mxu0
        %997 = vmatprep.mubr.f32.mxu0 %v366
        %998 = vmatmul.mubr.f32.gmra.mxu0 %v365
        %v999 = vpop.f32.mrf.mxu0
        %v1000 = vadd.f32 0.0, %v999
        %v1001 = vpop.f32.mrf.mxu0
        %1002 = vmatprep.mubr.f32.mxu0 %v369
        %1003 = vmatmul.mubr.f32.gmra.mxu0 %v368
        %v1004 = vpop.f32.mrf.mxu0
        %v1005 = vadd.f32 0.0, %v1004
        %v1006 = vpop.f32.mrf.mxu0
        %1007 = vmatprep.mubr.f32.mxu0 %v372
        %1008 = vmatmul.mubr.f32.gmra.mxu0 %v371
        %v1009 = vpop.f32.mrf.mxu0
        %v1010 = vadd.f32 0.0, %v1009
        %v1011 = vpop.f32.mrf.mxu0
        %1012 = vmatprep.mubr.f32.mxu0 %v375
        %1013 = vmatmul.mubr.f32.gmra.mxu0 %v374
        %v1014 = vpop.f32.mrf.mxu0
        %v1015 = vadd.f32 0.0, %v1014
        %v1016 = vpop.f32.mrf.mxu0
        %1017 = vmatprep.mubr.f32.mxu0 %v378
        %1018 = vmatmul.mubr.f32.gmra.mxu0 %v377
        %v1019 = vpop.f32.mrf.mxu0
        %v1020 = vadd.f32 0.0, %v1019
        %v1021 = vpop.f32.mrf.mxu0
        %1022 = vmatprep.mubr.f32.mxu0 %v381
        %1023 = vmatmul.mubr.f32.gmra.mxu0 %v380
        %v1024 = vpop.f32.mrf.mxu0
        %v1025 = vadd.f32 0.0, %v1024
        %v1026 = vpop.f32.mrf.mxu0
        %1027 = vmatprep.mubr.f32.mxu0 %v384
        %1028 = vmatmul.mubr.f32.gmra.mxu0 %v383
        %v1029 = vpop.f32.mrf.mxu0
        %v1030 = vadd.f32 0.0, %v1029
        %v1031 = vpop.f32.mrf.mxu0
        %1032 = vmatprep.mubr.f32.mxu0 %v387
        %1033 = vmatmul.mubr.f32.gmra.mxu0 %v386
        %v1034 = vpop.f32.mrf.mxu0
        %v1035 = vadd.f32 0.0, %v1034
        %v1036 = vpop.f32.mrf.mxu0
        %1037 = vmatprep.mubr.f32.mxu0 %v390
        %1038 = vmatmul.mubr.f32.gmra.mxu0 %v389
        %v1039 = vpop.f32.mrf.mxu0
        %v1040 = vadd.f32 0.0, %v1039
        %v1041 = vpop.f32.mrf.mxu0
        %1042 = vmatprep.mubr.f32.mxu0 %v393
        %1043 = vmatmul.mubr.f32.gmra.mxu0 %v392
        %v1044 = vpop.f32.mrf.mxu0
        %v1045 = vadd.f32 0.0, %v1044
        %v1046 = vpop.f32.mrf.mxu0
        %1047 = vmatprep.mubr.f32.mxu0 %v396
        %1048 = vmatmul.mubr.f32.gmra.mxu0 %v395
        %v1049 = vpop.f32.mrf.mxu0
        %v1050 = vadd.f32 0.0, %v1049
        %v1051 = vpop.f32.mrf.mxu0
        %1052 = vmatprep.mubr.f32.mxu0 %v399
        %1053 = vmatmul.mubr.f32.gmra.mxu0 %v398
        %v1054 = vpop.f32.mrf.mxu0
        %v1055 = vadd.f32 0.0, %v1054
        %v1056 = vpop.f32.mrf.mxu0
        %1057 = vmatprep.mubr.f32.mxu0 %v402
        %1058 = vmatmul.mubr.f32.gmra.mxu0 %v401
        %v1059 = vpop.f32.mrf.mxu0
        %v1060 = vadd.f32 0.0, %v1059
        %v1061 = vpop.f32.mrf.mxu0
        %1062 = vmatprep.mubr.f32.mxu0 %v405
        %1063 = vmatmul.mubr.f32.gmra.mxu0 %v404
        %v1064 = vpop.f32.mrf.mxu0
        %v1065 = vadd.f32 0.0, %v1064
        %v1066 = vpop.f32.mrf.mxu0
        %1067 = vmatprep.mubr.f32.mxu0 %v408
        %1068 = vmatmul.mubr.f32.gmra.mxu0 %v407
        %v1069 = vpop.f32.mrf.mxu0
        %v1070 = vadd.f32 0.0, %v1069
        %v1071 = vpop.f32.mrf.mxu0
        %1072 = vmatprep.mubr.f32.mxu0 %v411
        %1073 = vmatmul.mubr.f32.gmra.mxu0 %v410
        %v1074 = vpop.f32.mrf.mxu0
        %v1075 = vadd.f32 0.0, %v1074
        %v1076 = vpop.f32.mrf.mxu0
        %1077 = vmatprep.mubr.f32.mxu0 %v414
        %1078 = vmatmul.mubr.f32.gmra.mxu0 %v413
        %v1079 = vpop.f32.mrf.mxu0
        %v1080 = vadd.f32 0.0, %v1079
        %v1081 = vpop.f32.mrf.mxu0
        %1082 = vmatprep.mubr.f32.mxu0 %v417
        %1083 = vmatmul.mubr.f32.gmra.mxu0 %v416
        %v1084 = vpop.f32.mrf.mxu0
        %v1085 = vadd.f32 0.0, %v1084
        %v1086 = vpop.f32.mrf.mxu0
        %1087 = vmatprep.mubr.f32.mxu0 %v420
        %1088 = vmatmul.mubr.f32.gmra.mxu0 %v419
        %v1089 = vpop.f32.mrf.mxu0
        %v1090 = vadd.f32 0.0, %v1089
        %v1091 = vpop.f32.mrf.mxu0
        %1092 = vmatprep.mubr.f32.mxu0 %v423
        %1093 = vmatmul.mubr.f32.gmra.mxu0 %v422
        %v1094 = vpop.f32.mrf.mxu0
        %v1095 = vadd.f32 0.0, %v1094
        %v1096 = vpop.f32.mrf.mxu0
        %1097 = vmatprep.mubr.f32.mxu0 %v426
        %1098 = vmatmul.mubr.f32.gmra.mxu0 %v425
        %v1099 = vpop.f32.mrf.mxu0
        %v1100 = vadd.f32 0.0, %v1099
        %v1101 = vpop.f32.mrf.mxu0
        %1102 = vmatprep.mubr.f32.mxu0 %v429
        %1103 = vmatmul.mubr.f32.gmra.mxu0 %v428
        %v1104 = vpop.f32.mrf.mxu0
        %v1105 = vadd.f32 0.0, %v1104
        %v1106 = vpop.f32.mrf.mxu0
        %1107 = vmatprep.mubr.f32.mxu0 %v432
        %1108 = vmatmul.mubr.f32.gmra.mxu0 %v431
        %v1109 = vpop.f32.mrf.mxu0
        %v1110 = vadd.f32 0.0, %v1109
        %v1111 = vpop.f32.mrf.mxu0
        %1112 = vmatprep.mubr.f32.mxu0 %v435
        %1113 = vmatmul.mubr.f32.gmra.mxu0 %v434
        %v1114 = vpop.f32.mrf.mxu0
        %v1115 = vadd.f32 0.0, %v1114
        %v1116 = vpop.f32.mrf.mxu0
        %1117 = vmatprep.mubr.f32.mxu0 %v438
        %1118 = vmatmul.mubr.f32.gmra.mxu0 %v437
        %v1119 = vpop.f32.mrf.mxu0
        %v1120 = vadd.f32 0.0, %v1119
        %v1121 = vpop.f32.mrf.mxu0
        %1122 = vmatprep.mubr.f32.mxu0 %v441
        %1123 = vmatmul.mubr.f32.gmra.mxu0 %v440
        %v1124 = vpop.f32.mrf.mxu0
        %v1125 = vadd.f32 0.0, %v1124
        %v1126 = vpop.f32.mrf.mxu0
        %1127 = vmatprep.mubr.f32.mxu0 %v444
        %1128 = vmatmul.mubr.f32.gmra.mxu0 %v443
        %v1129 = vpop.f32.mrf.mxu0
        %v1130 = vadd.f32 0.0, %v1129
        %v1131 = vpop.f32.mrf.mxu0
        %1132 = vmatprep.mubr.f32.mxu0 %v447
        %1133 = vmatmul.mubr.f32.gmra.mxu0 %v446
        %v1134 = vpop.f32.mrf.mxu0
        %v1135 = vadd.f32 0.0, %v1134
        %v1136 = vpop.f32.mrf.mxu0
        %1137 = vmatprep.mubr.f32.mxu0 %v450
        %1138 = vmatmul.mubr.f32.gmra.mxu0 %v449
        %v1139 = vpop.f32.mrf.mxu0
        %v1140 = vadd.f32 0.0, %v1139
        %v1141 = vpop.f32.mrf.mxu0
        %1142 = vmatprep.mubr.f32.mxu0 %v453
        %1143 = vmatmul.mubr.f32.gmra.mxu0 %v452
        %v1144 = vpop.f32.mrf.mxu0
        %v1145 = vadd.f32 0.0, %v1144
        %v1146 = vpop.f32.mrf.mxu0
        %1147 = vmatprep.mubr.f32.mxu0 %v456
        %1148 = vmatmul.mubr.f32.gmra.mxu0 %v455
        %v1149 = vpop.f32.mrf.mxu0
        %v1150 = vadd.f32 0.0, %v1149
        %v1151 = vpop.f32.mrf.mxu0
        %1152 = vmatprep.mubr.f32.mxu0 %v459
        %1153 = vmatmul.mubr.f32.gmra.mxu0 %v458
        %v1154 = vpop.f32.mrf.mxu0
        %v1155 = vadd.f32 0.0, %v1154
        %v1156 = vpop.f32.mrf.mxu0
        %1157 = vmatprep.mubr.f32.mxu0 %v462
        %1158 = vmatmul.mubr.f32.gmra.mxu0 %v461
        %v1159 = vpop.f32.mrf.mxu0
        %v1160 = vadd.f32 0.0, %v1159
        %v1161 = vpop.f32.mrf.mxu0
        %1162 = vmatprep.mubr.f32.mxu0 %v465
        %1163 = vmatmul.mubr.f32.gmra.mxu0 %v464
        %v1164 = vpop.f32.mrf.mxu0
        %v1165 = vadd.f32 0.0, %v1164
        %v1166 = vpop.f32.mrf.mxu0
        %1167 = vmatprep.mubr.f32.mxu0 %v468
        %1168 = vmatmul.mubr.f32.gmra.mxu0 %v467
        %v1169 = vpop.f32.mrf.mxu0
        %v1170 = vadd.f32 0.0, %v1169
        %v1171 = vpop.f32.mrf.mxu0
        %1172 = vmatprep.mubr.f32.mxu0 %v471
        %1173 = vmatmul.mubr.f32.gmra.mxu0 %v470
        %v1174 = vpop.f32.mrf.mxu0
        %v1175 = vadd.f32 0.0, %v1174
        %v1176 = vpop.f32.mrf.mxu0
        %1177 = vmatprep.mubr.f32.mxu0 %v474
        %1178 = vmatmul.mubr.f32.gmra.mxu0 %v473
        %v1179 = vpop.f32.mrf.mxu0
        %v1180 = vadd.f32 0.0, %v1179
        %v1181 = vpop.f32.mrf.mxu0
        %1182 = vmatprep.mubr.f32.mxu0 %v477
        %1183 = vmatmul.mubr.f32.gmra.mxu0 %v476
        %v1184 = vpop.f32.mrf.mxu0
        %v1185 = vadd.f32 0.0, %v1184
        %v1186 = vpop.f32.mrf.mxu0
        %1187 = vmatprep.mubr.f32.mxu0 %v480
        %1188 = vmatmul.mubr.f32.gmra.mxu0 %v479
        %v1189 = vpop.f32.mrf.mxu0
        %v1190 = vadd.f32 0.0, %v1189
        %v1191 = vpop.f32.mrf.mxu0
        %1192 = vmatprep.mubr.f32.mxu0 %v483
        %1193 = vmatmul.mubr.f32.gmra.mxu0 %v482
        %v1194 = vpop.f32.mrf.mxu0
        %v1195 = vadd.f32 0.0, %v1194
        %v1196 = vpop.f32.mrf.mxu0
        %1197 = vmatprep.mubr.f32.mxu0 %v486
        %1198 = vmatmul.mubr.f32.gmra.mxu0 %v485
        %v1199 = vpop.f32.mrf.mxu0
        %v1200 = vadd.f32 0.0, %v1199
        %v1201 = vpop.f32.mrf.mxu0
        %1202 = vmatprep.mubr.f32.mxu0 %v489
        %1203 = vmatmul.mubr.f32.gmra.mxu0 %v488
        %v1204 = vpop.f32.mrf.mxu0
        %v1205 = vadd.f32 0.0, %v1204
        %v1206 = vpop.f32.mrf.mxu0
        %1207 = vmatprep.mubr.f32.mxu0 %v492
        %1208 = vmatmul.mubr.f32.gmra.mxu0 %v491
        %v1209 = vpop.f32.mrf.mxu0
        %v1210 = vadd.f32 0.0, %v1209
        %v1211 = vpop.f32.mrf.mxu0
        %1212 = vmatprep.mubr.f32.mxu0 %v495
        %1213 = vmatmul.mubr.f32.gmra.mxu0 %v494
        %v1214 = vpop.f32.mrf.mxu0
        %v1215 = vadd.f32 0.0, %v1214
        %v1216 = vpop.f32.mrf.mxu0
        %1217 = vmatprep.mubr.f32.mxu0 %v498
        %1218 = vmatmul.mubr.f32.gmra.mxu0 %v497
        %v1219 = vpop.f32.mrf.mxu0
        %v1220 = vadd.f32 0.0, %v1219
        %v1221 = vpop.f32.mrf.mxu0
        %1222 = vmatprep.mubr.f32.mxu0 %v501
        %1223 = vmatmul.mubr.f32.gmra.mxu0 %v500
        %v1224 = vpop.f32.mrf.mxu0
        %v1225 = vadd.f32 0.0, %v1224
        %v1226 = vpop.f32.mrf.mxu0
        %1227 = vmatprep.mubr.f32.mxu0 %v504
        %1228 = vmatmul.mubr.f32.gmra.mxu0 %v503
        %v1229 = vpop.f32.mrf.mxu0
        %v1230 = vadd.f32 0.0, %v1229
        %v1231 = vpop.f32.mrf.mxu0
        %1232 = vmatprep.mubr.f32.mxu0 %v507
        %1233 = vmatmul.mubr.f32.gmra.mxu0 %v506
        %v1234 = vpop.f32.mrf.mxu0
        %v1235 = vadd.f32 0.0, %v1234
        %v1236 = vpop.f32.mrf.mxu0
        %1237 = vmatprep.mubr.f32.mxu0 %v510
        %1238 = vmatmul.mubr.f32.gmra.mxu0 %v509
        %v1239 = vpop.f32.mrf.mxu0
        %v1240 = vadd.f32 0.0, %v1239
        %v1241 = vpop.f32.mrf.mxu0
        %1242 = vmatprep.mubr.f32.mxu0 %v513
        %1243 = vmatmul.mubr.f32.gmra.mxu0 %v512
        %v1244 = vpop.f32.mrf.mxu0
        %v1245 = vadd.f32 0.0, %v1244
        %v1246 = vpop.f32.mrf.mxu0
        %1247 = vmatprep.mubr.f32.mxu0 %v516
        %1248 = vmatmul.mubr.f32.gmra.mxu0 %v515
        %v1249 = vpop.f32.mrf.mxu0
        %v1250 = vadd.f32 0.0, %v1249
        %v1251 = vpop.f32.mrf.mxu0
        %1252 = vmatprep.mubr.f32.mxu0 %v519
        %1253 = vmatmul.mubr.f32.gmra.mxu0 %v518
        %v1254 = vpop.f32.mrf.mxu0
        %v1255 = vadd.f32 0.0, %v1254
        %v1256 = vpop.f32.mrf.mxu0
        %1257 = vmatprep.mubr.f32.mxu0 %v522
        %1258 = vmatmul.mubr.f32.gmra.mxu0 %v521
        %v1259 = vpop.f32.mrf.mxu0
        %v1260 = vadd.f32 0.0, %v1259
        %v1261 = vpop.f32.mrf.mxu0
        %1262 = vmatprep.mubr.f32.mxu0 %v525
        %1263 = vmatmul.mubr.f32.gmra.mxu0 %v524
        %v1264 = vpop.f32.mrf.mxu0
        %v1265 = vadd.f32 0.0, %v1264
        %v1266 = vpop.f32.mrf.mxu0
        %1267 = vmatprep.mubr.f32.mxu0 %v528
        %1268 = vmatmul.mubr.f32.gmra.mxu0 %v527
        %v1269 = vpop.f32.mrf.mxu0
        %v1270 = vadd.f32 0.0, %v1269
        %v1271 = vpop.f32.mrf.mxu0
        %1272 = vmatprep.mubr.f32.mxu0 %v531
        %1273 = vmatmul.mubr.f32.gmra.mxu0 %v530
        %v1274 = vpop.f32.mrf.mxu0
        %v1275 = vadd.f32 0.0, %v1274
        %v1276 = vpop.f32.mrf.mxu0
        %1277 = vmatprep.mubr.f32.mxu0 %v534
        %1278 = vmatmul.mubr.f32.gmra.mxu0 %v533
        %v1279 = vpop.f32.mrf.mxu0
        %v1280 = vadd.f32 0.0, %v1279
        %v1281 = vpop.f32.mrf.mxu0
        %1282 = vmatprep.mubr.f32.mxu0 %v537
        %1283 = vmatmul.mubr.f32.gmra.mxu0 %v536
        %v1284 = vpop.f32.mrf.mxu0
        %v1285 = vadd.f32 0.0, %v1284
        %v1286 = vpop.f32.mrf.mxu0
        %1287 = vmatprep.mubr.f32.mxu0 %v540
        %1288 = vmatmul.mubr.f32.gmra.mxu0 %v539
        %v1289 = vpop.f32.mrf.mxu0
        %v1290 = vadd.f32 0.0, %v1289
        %v1291 = vpop.f32.mrf.mxu0
        %1292 = vmatprep.mubr.f32.mxu0 %v543
        %1293 = vmatmul.mubr.f32.gmra.mxu0 %v542
        %v1294 = vpop.f32.mrf.mxu0
        %v1295 = vadd.f32 0.0, %v1294
        %v1296 = vpop.f32.mrf.mxu0
        %1297 = vmatprep.mubr.f32.mxu0 %v546
        %1298 = vmatmul.mubr.f32.gmra.mxu0 %v545
        %v1299 = vpop.f32.mrf.mxu0
        %v1300 = vadd.f32 0.0, %v1299
        %v1301 = vpop.f32.mrf.mxu0
        %1302 = vmatprep.mubr.f32.mxu0 %v549
        %1303 = vmatmul.mubr.f32.gmra.mxu0 %v548
        %v1304 = vpop.f32.mrf.mxu0
        %v1305 = vadd.f32 0.0, %v1304
        %v1306 = vpop.f32.mrf.mxu0
        %1307 = vmatprep.mubr.f32.mxu0 %v552
        %1308 = vmatmul.mubr.f32.gmra.mxu0 %v551
        %v1309 = vpop.f32.mrf.mxu0
        %v1310 = vadd.f32 0.0, %v1309
        %v1311 = vpop.f32.mrf.mxu0
        %1312 = vmatprep.mubr.f32.mxu0 %v555
        %1313 = vmatmul.mubr.f32.gmra.mxu0 %v554
        %v1314 = vpop.f32.mrf.mxu0
        %v1315 = vadd.f32 0.0, %v1314
        %v1316 = vpop.f32.mrf.mxu0
        %1317 = vmatprep.mubr.f32.mxu0 %v558
        %1318 = vmatmul.mubr.f32.gmra.mxu0 %v557
        %v1319 = vpop.f32.mrf.mxu0
        %v1320 = vadd.f32 0.0, %v1319
        %v1321 = vpop.f32.mrf.mxu0
        %1322 = vmatprep.mubr.f32.mxu0 %v561
        %1323 = vmatmul.mubr.f32.gmra.mxu0 %v560
        %v1324 = vpop.f32.mrf.mxu0
        %v1325 = vadd.f32 0.0, %v1324
        %v1326 = vpop.f32.mrf.mxu0
        %1327 = vmatprep.mubr.f32.mxu0 %v564
        %1328 = vmatmul.mubr.f32.gmra.mxu0 %v563
        %v1329 = vpop.f32.mrf.mxu0
        %v1330 = vadd.f32 0.0, %v1329
        %v1331 = vpop.f32.mrf.mxu0
        %1332 = vmatprep.mubr.f32.mxu0 %v567
        %1333 = vmatmul.mubr.f32.gmra.mxu0 %v566
        %v1334 = vpop.f32.mrf.mxu0
        %v1335 = vadd.f32 0.0, %v1334
        %v1336 = vpop.f32.mrf.mxu0
        %1337 = vmatprep.mubr.f32.mxu0 %v570
        %1338 = vmatmul.mubr.f32.gmra.mxu0 %v569
        %v1339 = vpop.f32.mrf.mxu0
        %v1340 = vadd.f32 0.0, %v1339
        %v1341 = vpop.f32.mrf.mxu0
        %1342 = vmatprep.mubr.f32.mxu0 %v573
        %1343 = vmatmul.mubr.f32.gmra.mxu0 %v572
        %v1344 = vpop.f32.mrf.mxu0
        %v1345 = vadd.f32 0.0, %v1344
        %v1346 = vpop.f32.mrf.mxu0
        %1347 = vmatprep.mubr.f32.mxu0 %v576
        %1348 = vmatmul.mubr.f32.gmra.mxu0 %v575
        %v1349 = vpop.f32.mrf.mxu0
        %v1350 = vadd.f32 0.0, %v1349
        %v1351 = vpop.f32.mrf.mxu0
        %1352 = vmatprep.mubr.f32.mxu0 %v579
        %1353 = vmatmul.mubr.f32.gmra.mxu0 %v578
        %v1354 = vpop.f32.mrf.mxu0
        %v1355 = vadd.f32 0.0, %v1354
        %v1356 = vpop.f32.mrf.mxu0
        %1357 = vmatprep.mubr.f32.mxu0 %v582
        %1358 = vmatmul.mubr.f32.gmra.mxu0 %v581
        %v1359 = vpop.f32.mrf.mxu0
        %v1360 = vadd.f32 0.0, %v1359
        %v1361 = vpop.f32.mrf.mxu0
        %1362 = vmatprep.mubr.f32.mxu0 %v585
        %1363 = vmatmul.mubr.f32.gmra.mxu0 %v584
        %v1364 = vpop.f32.mrf.mxu0
        %v1365 = vadd.f32 0.0, %v1364
        %v1366 = vpop.f32.mrf.mxu0
        %1367 = vmatprep.mubr.f32.mxu0 %v588
        %1368 = vmatmul.mubr.f32.gmra.mxu0 %v587
        %v1369 = vpop.f32.mrf.mxu0
        %v1370 = vadd.f32 0.0, %v1369
        %v1371 = vpop.f32.mrf.mxu0
        %1372 = vmatprep.mubr.f32.mxu0 %v591
        %1373 = vmatmul.mubr.f32.gmra.mxu0 %v590
        %v1374 = vpop.f32.mrf.mxu0
        %v1375 = vadd.f32 0.0, %v1374
        %v1376 = vpop.f32.mrf.mxu0
        %1377 = vmatprep.mubr.f32.mxu0 %v594
        %1378 = vmatmul.mubr.f32.gmra.mxu0 %v593
        %v1379 = vpop.f32.mrf.mxu0
        %v1380 = vadd.f32 0.0, %v1379
        %v1381 = vpop.f32.mrf.mxu0
        %1382 = vmatprep.mubr.f32.mxu0 %v597
        %1383 = vmatmul.mubr.f32.gmra.mxu0 %v596
        %v1384 = vpop.f32.mrf.mxu0
        %v1385 = vadd.f32 0.0, %v1384
        %v1386 = vpop.f32.mrf.mxu0
        %1387 = vmatprep.mubr.f32.mxu0 %v600
        %1388 = vmatmul.mubr.f32.gmra.mxu0 %v599
        %v1389 = vpop.f32.mrf.mxu0
        %v1390 = vadd.f32 0.0, %v1389
        %v1391 = vpop.f32.mrf.mxu0
        %1392 = vmatprep.mubr.f32.mxu0 %v603
        %1393 = vmatmul.mubr.f32.gmra.mxu0 %v602
        %v1394 = vpop.f32.mrf.mxu0
        %v1395 = vadd.f32 0.0, %v1394
        %v1396 = vpop.f32.mrf.mxu0
        %1397 = vmatprep.mubr.f32.mxu0 %v606
        %1398 = vmatmul.mubr.f32.gmra.mxu0 %v605
        %v1399 = vpop.f32.mrf.mxu0
        %v1400 = vadd.f32 0.0, %v1399
        %v1401 = vpop.f32.mrf.mxu0
        %1402 = vmatprep.mubr.f32.mxu0 %v609
        %1403 = vmatmul.mubr.f32.gmra.mxu0 %v608
        %v1404 = vpop.f32.mrf.mxu0
        %v1405 = vadd.f32 0.0, %v1404
        %v1406 = vpop.f32.mrf.mxu0
        %1407 = vmatprep.mubr.f32.mxu0 %v612
        %1408 = vmatmul.mubr.f32.gmra.mxu0 %v611
        %v1409 = vpop.f32.mrf.mxu0
        %v1410 = vadd.f32 0.0, %v1409
        %v1411 = vpop.f32.mrf.mxu0
        %1412 = vmatprep.mubr.f32.mxu0 %v615
        %1413 = vmatmul.mubr.f32.gmra.mxu0 %v614
        %v1414 = vpop.f32.mrf.mxu0
        %v1415 = vadd.f32 0.0, %v1414
        %v1416 = vpop.f32.mrf.mxu0
        %1417 = vmatprep.mubr.f32.mxu0 %v618
        %1418 = vmatmul.mubr.f32.gmra.mxu0 %v617
        %v1419 = vpop.f32.mrf.mxu0
        %v1420 = vadd.f32 0.0, %v1419
        %v1421 = vpop.f32.mrf.mxu0
        %1422 = vmatprep.mubr.f32.mxu0 %v621
        %1423 = vmatmul.mubr.f32.gmra.mxu0 %v620
        %v1424 = vpop.f32.mrf.mxu0
        %v1425 = vadd.f32 0.0, %v1424
        %v1426 = vpop.f32.mrf.mxu0
        %1427 = vmatprep.mubr.f32.mxu0 %v624
        %1428 = vmatmul.mubr.f32.gmra.mxu0 %v623
        %v1429 = vpop.f32.mrf.mxu0
        %v1430 = vadd.f32 0.0, %v1429
        %v1431 = vpop.f32.mrf.mxu0
        %1432 = vmatprep.mubr.f32.mxu0 %v627
        %1433 = vmatmul.mubr.f32.gmra.mxu0 %v626
        %v1434 = vpop.f32.mrf.mxu0
        %v1435 = vadd.f32 0.0, %v1434
        %v1436 = vpop.f32.mrf.mxu0
        %1437 = vmatprep.mubr.f32.mxu0 %v630
        %1438 = vmatmul.mubr.f32.gmra.mxu0 %v629
        %v1439 = vpop.f32.mrf.mxu0
        %v1440 = vadd.f32 0.0, %v1439
        %v1441 = vpop.f32.mrf.mxu0
        %1442 = vmatprep.mubr.f32.mxu0 %v633
        %1443 = vmatmul.mubr.f32.gmra.mxu0 %v632
        %v1444 = vpop.f32.mrf.mxu0
        %v1445 = vadd.f32 0.0, %v1444
        %v1446 = vpop.f32.mrf.mxu0
        %1447 = vmatprep.mubr.f32.mxu0 %v636
        %1448 = vmatmul.mubr.f32.gmra.mxu0 %v635
        %v1449 = vpop.f32.mrf.mxu0
        %v1450 = vadd.f32 0.0, %v1449
        %v1451 = vpop.f32.mrf.mxu0
        %1452 = vmatprep.mubr.f32.mxu0 %v639
        %1453 = vmatmul.mubr.f32.gmra.mxu0 %v638
        %v1454 = vpop.f32.mrf.mxu0
        %v1455 = vadd.f32 0.0, %v1454
        %v1456 = vpop.f32.mrf.mxu0
        %1457 = vmatprep.mubr.f32.mxu0 %v642
        %1458 = vmatmul.mubr.f32.gmra.mxu0 %v641
        %v1459 = vpop.f32.mrf.mxu0
        %v1460 = vadd.f32 0.0, %v1459
        %v1461 = vpop.f32.mrf.mxu0
        %1462 = vmatprep.mubr.f32.mxu0 %v645
        %1463 = vmatmul.mubr.f32.gmra.mxu0 %v644
        %v1464 = vpop.f32.mrf.mxu0
        %v1465 = vadd.f32 0.0, %v1464
        %v1466 = vpop.f32.mrf.mxu0
        %1467 = vmatprep.mubr.f32.mxu0 %v648
        %1468 = vmatmul.mubr.f32.gmra.mxu0 %v647
        %v1469 = vpop.f32.mrf.mxu0
        %v1470 = vadd.f32 0.0, %v1469
        %v1471 = vpop.f32.mrf.mxu0
        %1472 = vmatprep.mubr.f32.mxu0 %v651
        %1473 = vmatmul.mubr.f32.gmra.mxu0 %v650
        %v1474 = vpop.f32.mrf.mxu0
        %v1475 = vadd.f32 0.0, %v1474
        %v1476 = vpop.f32.mrf.mxu0
        %1477 = vmatprep.mubr.f32.mxu0 %v654
        %1478 = vmatmul.mubr.f32.gmra.mxu0 %v653
        %v1479 = vpop.f32.mrf.mxu0
        %v1480 = vadd.f32 0.0, %v1479
        %v1481 = vpop.f32.mrf.mxu0
        %1482 = vmatprep.mubr.f32.mxu0 %v657
        %1483 = vmatmul.mubr.f32.gmra.mxu0 %v656
        %v1484 = vpop.f32.mrf.mxu0
        %v1485 = vadd.f32 0.0, %v1484
        %v1486 = vpop.f32.mrf.mxu0
        %1487 = vmatprep.mubr.f32.mxu0 %v660
        %1488 = vmatmul.mubr.f32.gmra.mxu0 %v659
        %v1489 = vpop.f32.mrf.mxu0
        %v1490 = vadd.f32 0.0, %v1489
        %v1491 = vpop.f32.mrf.mxu0
        %1492 = vmatprep.mubr.f32.mxu0 %v663
        %1493 = vmatmul.mubr.f32.gmra.mxu0 %v662
        %v1494 = vpop.f32.mrf.mxu0
        %v1495 = vadd.f32 0.0, %v1494
        %v1496 = vpop.f32.mrf.mxu0
        %1497 = vdwg.mxu0
        %1498 = vmatprep.subr.mxu0 0.0
        %1499 = vmatpush1.msra.mxu0 %v712
        %1500 = vmatprep.subr.mxu0 0.0
        %1501 = vmatpush1.msra.mxu0 %v711
        %1502 = vmatprep.subr.mxu0 0.0
        %1503 = vmatpush1.msra.mxu0 %v710
        %1504 = vmatprep.subr.mxu0 0.0
        %1505 = vmatpush1.msra.mxu0 %v709
        %1506 = vmatprep.subr.mxu0 0.0
        %1507 = vmatpush1.msra.mxu0 %v708
        %1508 = vmatprep.subr.mxu0 0.0
        %1509 = vmatpush1.msra.mxu0 %v707
        %1510 = vmatprep.subr.mxu0 0.0
        %1511 = vmatpush1.msra.mxu0 %v706
        %1512 = vmatprep.subr.mxu0 0.0
        %1513 = vmatpush1.msra.mxu0 %v705
        %1514 = vmatprep.subr.mxu0 0.0
        %1515 = vmatpush1.msra.mxu0 %v704
        %1516 = vmatprep.subr.mxu0 0.0
        %1517 = vmatpush1.msra.mxu0 %v703
        %1518 = vmatprep.subr.mxu0 0.0
        %1519 = vmatpush1.msra.mxu0 %v702
        %1520 = vmatprep.subr.mxu0 0.0
        %1521 = vmatpush1.msra.mxu0 %v701
        %1522 = vmatprep.subr.mxu0 0.0
        %1523 = vmatpush1.msra.mxu0 %v700
        %1524 = vmatprep.subr.mxu0 0.0
        %1525 = vmatpush1.msra.mxu0 %v699
        %1526 = vmatprep.subr.mxu0 0.0
        %1527 = vmatpush1.msra.mxu0 %v698
        %1528 = vmatprep.subr.mxu0 0.0
        %1529 = vmatpush1.msra.mxu0 %v697
        %1530 = vmatprep.subr.mxu0 0.0
        %1531 = vmatpush2.msra.mxu0 0.0
        %1532 = vmatprep.subr.mxu0 0.0
        %1533 = vmatpush2.msra.mxu0 0.0
        %1534 = vmatprep.subr.mxu0 0.0
        %1535 = vmatpush2.msra.mxu0 0.0
        %1536 = vmatprep.subr.mxu0 0.0
        %1537 = vmatpush2.msra.mxu0 0.0
        %1538 = vmatprep.subr.mxu0 0.0
        %1539 = vmatpush2.msra.mxu0 0.0
        %1540 = vmatprep.subr.mxu0 0.0
        %1541 = vmatpush2.msra.mxu0 0.0
        %1542 = vmatprep.subr.mxu0 0.0
        %1543 = vmatpush2.msra.mxu0 0.0
        %1544 = vmatprep.subr.mxu0 0.0
        %1545 = vmatpush2.msra.mxu0 0.0
        %1546 = vmatprep.subr.mxu0 0.0
        %1547 = vmatpush2.msra.mxu0 0.0
        %1548 = vmatprep.subr.mxu0 0.0
        %1549 = vmatpush2.msra.mxu0 0.0
        %1550 = vmatprep.subr.mxu0 0.0
        %1551 = vmatpush2.msra.mxu0 0.0
        %1552 = vmatprep.subr.mxu0 0.0
        %1553 = vmatpush2.msra.mxu0 0.0
        %1554 = vmatprep.subr.mxu0 0.0
        %1555 = vmatpush2.msra.mxu0 0.0
        %1556 = vmatprep.subr.mxu0 0.0
        %1557 = vmatpush2.msra.mxu0 0.0
        %1558 = vmatprep.subr.mxu0 0.0
        %1559 = vmatpush2.msra.mxu0 0.0
        %1560 = vmatprep.subr.mxu0 0.0
        %1561 = vmatpush2.msra.mxu0 0.0
        %1562 = vmatprep.mubr.f32.mxu0 0.0
        %1563 = vmatmul.mubr.f32.gmra.mxu0 %v235
        %v1564 = vpop.f32.mrf.mxu0
        %v1565 = vadd.f32 %v780, %v1564
        %v1566 = vpop.f32.mrf.mxu0
        %1567 = vmatprep.mubr.f32.mxu0 0.0
        %1568 = vmatmul.mubr.f32.gmra.mxu0 %v238
        %v1569 = vpop.f32.mrf.mxu0
        %v1570 = vadd.f32 %v785, %v1569
        %v1571 = vpop.f32.mrf.mxu0
        %1572 = vmatprep.mubr.f32.mxu0 0.0
        %1573 = vmatmul.mubr.f32.gmra.mxu0 %v241
        %v1574 = vpop.f32.mrf.mxu0
        %v1575 = vadd.f32 %v790, %v1574
        %v1576 = vpop.f32.mrf.mxu0
        %1577 = vmatprep.mubr.f32.mxu0 0.0
        %1578 = vmatmul.mubr.f32.gmra.mxu0 %v244
        %v1579 = vpop.f32.mrf.mxu0
        %v1580 = vadd.f32 %v795, %v1579
        %v1581 = vpop.f32.mrf.mxu0
        %1582 = vmatprep.mubr.f32.mxu0 0.0
        %1583 = vmatmul.mubr.f32.gmra.mxu0 %v247
        %v1584 = vpop.f32.mrf.mxu0
        %v1585 = vadd.f32 %v800, %v1584
        %v1586 = vpop.f32.mrf.mxu0
        %1587 = vmatprep.mubr.f32.mxu0 0.0
        %1588 = vmatmul.mubr.f32.gmra.mxu0 %v250
        %v1589 = vpop.f32.mrf.mxu0
        %v1590 = vadd.f32 %v805, %v1589
        %v1591 = vpop.f32.mrf.mxu0
        %1592 = vmatprep.mubr.f32.mxu0 0.0
        %1593 = vmatmul.mubr.f32.gmra.mxu0 %v253
        %v1594 = vpop.f32.mrf.mxu0
        %v1595 = vadd.f32 %v810, %v1594
        %v1596 = vpop.f32.mrf.mxu0
        %1597 = vmatprep.mubr.f32.mxu0 0.0
        %1598 = vmatmul.mubr.f32.gmra.mxu0 %v256
        %v1599 = vpop.f32.mrf.mxu0
        %v1600 = vadd.f32 %v815, %v1599
        %v1601 = vpop.f32.mrf.mxu0
        %1602 = vmatprep.mubr.f32.mxu0 0.0
        %1603 = vmatmul.mubr.f32.gmra.mxu0 %v259
        %v1604 = vpop.f32.mrf.mxu0
        %v1605 = vadd.f32 %v820, %v1604
        %v1606 = vpop.f32.mrf.mxu0
        %1607 = vmatprep.mubr.f32.mxu0 0.0
        %1608 = vmatmul.mubr.f32.gmra.mxu0 %v262
        %v1609 = vpop.f32.mrf.mxu0
        %v1610 = vadd.f32 %v825, %v1609
        %v1611 = vpop.f32.mrf.mxu0
        %1612 = vmatprep.mubr.f32.mxu0 0.0
        %1613 = vmatmul.mubr.f32.gmra.mxu0 %v265
        %v1614 = vpop.f32.mrf.mxu0
        %v1615 = vadd.f32 %v830, %v1614
        %v1616 = vpop.f32.mrf.mxu0
        %1617 = vmatprep.mubr.f32.mxu0 0.0
        %1618 = vmatmul.mubr.f32.gmra.mxu0 %v268
        %v1619 = vpop.f32.mrf.mxu0
        %v1620 = vadd.f32 %v835, %v1619
        %v1621 = vpop.f32.mrf.mxu0
        %1622 = vmatprep.mubr.f32.mxu0 0.0
        %1623 = vmatmul.mubr.f32.gmra.mxu0 %v271
        %v1624 = vpop.f32.mrf.mxu0
        %v1625 = vadd.f32 %v840, %v1624
        %v1626 = vpop.f32.mrf.mxu0
        %1627 = vmatprep.mubr.f32.mxu0 0.0
        %1628 = vmatmul.mubr.f32.gmra.mxu0 %v274
        %v1629 = vpop.f32.mrf.mxu0
        %v1630 = vadd.f32 %v845, %v1629
        %v1631 = vpop.f32.mrf.mxu0
        %1632 = vmatprep.mubr.f32.mxu0 0.0
        %1633 = vmatmul.mubr.f32.gmra.mxu0 %v277
        %v1634 = vpop.f32.mrf.mxu0
        %v1635 = vadd.f32 %v850, %v1634
        %v1636 = vpop.f32.mrf.mxu0
        %1637 = vmatprep.mubr.f32.mxu0 0.0
        %1638 = vmatmul.mubr.f32.gmra.mxu0 %v280
        %v1639 = vpop.f32.mrf.mxu0
        %v1640 = vadd.f32 %v855, %v1639
        %v1641 = vpop.f32.mrf.mxu0
        %1642 = vmatprep.mubr.f32.mxu0 0.0
        %1643 = vmatmul.mubr.f32.gmra.mxu0 %v283
        %v1644 = vpop.f32.mrf.mxu0
        %v1645 = vadd.f32 %v860, %v1644
        %v1646 = vpop.f32.mrf.mxu0
        %1647 = vmatprep.mubr.f32.mxu0 0.0
        %1648 = vmatmul.mubr.f32.gmra.mxu0 %v286
        %v1649 = vpop.f32.mrf.mxu0
        %v1650 = vadd.f32 %v865, %v1649
        %v1651 = vpop.f32.mrf.mxu0
        %1652 = vmatprep.mubr.f32.mxu0 0.0
        %1653 = vmatmul.mubr.f32.gmra.mxu0 %v289
        %v1654 = vpop.f32.mrf.mxu0
        %v1655 = vadd.f32 %v870, %v1654
        %v1656 = vpop.f32.mrf.mxu0
        %1657 = vmatprep.mubr.f32.mxu0 0.0
        %1658 = vmatmul.mubr.f32.gmra.mxu0 %v292
        %v1659 = vpop.f32.mrf.mxu0
        %v1660 = vadd.f32 %v875, %v1659
        %v1661 = vpop.f32.mrf.mxu0
        %1662 = vmatprep.mubr.f32.mxu0 0.0
        %1663 = vmatmul.mubr.f32.gmra.mxu0 %v295
        %v1664 = vpop.f32.mrf.mxu0
        %v1665 = vadd.f32 %v880, %v1664
        %v1666 = vpop.f32.mrf.mxu0
        %1667 = vmatprep.mubr.f32.mxu0 0.0
        %1668 = vmatmul.mubr.f32.gmra.mxu0 %v298
        %v1669 = vpop.f32.mrf.mxu0
        %v1670 = vadd.f32 %v885, %v1669
        %v1671 = vpop.f32.mrf.mxu0
        %1672 = vmatprep.mubr.f32.mxu0 0.0
        %1673 = vmatmul.mubr.f32.gmra.mxu0 %v301
        %v1674 = vpop.f32.mrf.mxu0
        %v1675 = vadd.f32 %v890, %v1674
        %v1676 = vpop.f32.mrf.mxu0
        %1677 = vmatprep.mubr.f32.mxu0 0.0
        %1678 = vmatmul.mubr.f32.gmra.mxu0 %v304
        %v1679 = vpop.f32.mrf.mxu0
        %v1680 = vadd.f32 %v895, %v1679
        %v1681 = vpop.f32.mrf.mxu0
        %1682 = vmatprep.mubr.f32.mxu0 0.0
        %1683 = vmatmul.mubr.f32.gmra.mxu0 %v307
        %v1684 = vpop.f32.mrf.mxu0
        %v1685 = vadd.f32 %v900, %v1684
        %v1686 = vpop.f32.mrf.mxu0
        %1687 = vmatprep.mubr.f32.mxu0 0.0
        %1688 = vmatmul.mubr.f32.gmra.mxu0 %v310
        %v1689 = vpop.f32.mrf.mxu0
        %v1690 = vadd.f32 %v905, %v1689
        %v1691 = vpop.f32.mrf.mxu0
        %1692 = vmatprep.mubr.f32.mxu0 0.0
        %1693 = vmatmul.mubr.f32.gmra.mxu0 %v313
        %v1694 = vpop.f32.mrf.mxu0
        %v1695 = vadd.f32 %v910, %v1694
        %v1696 = vpop.f32.mrf.mxu0
        %1697 = vmatprep.mubr.f32.mxu0 0.0
        %1698 = vmatmul.mubr.f32.gmra.mxu0 %v316
        %v1699 = vpop.f32.mrf.mxu0
        %v1700 = vadd.f32 %v915, %v1699
        %v1701 = vpop.f32.mrf.mxu0
        %1702 = vmatprep.mubr.f32.mxu0 0.0
        %1703 = vmatmul.mubr.f32.gmra.mxu0 %v319
        %v1704 = vpop.f32.mrf.mxu0
        %v1705 = vadd.f32 %v920, %v1704
        %v1706 = vpop.f32.mrf.mxu0
        %1707 = vmatprep.mubr.f32.mxu0 0.0
        %1708 = vmatmul.mubr.f32.gmra.mxu0 %v322
        %v1709 = vpop.f32.mrf.mxu0
        %v1710 = vadd.f32 %v925, %v1709
        %v1711 = vpop.f32.mrf.mxu0
        %1712 = vmatprep.mubr.f32.mxu0 0.0
        %1713 = vmatmul.mubr.f32.gmra.mxu0 %v325
        %v1714 = vpop.f32.mrf.mxu0
        %v1715 = vadd.f32 %v930, %v1714
        %v1716 = vpop.f32.mrf.mxu0
        %1717 = vmatprep.mubr.f32.mxu0 0.0
        %1718 = vmatmul.mubr.f32.gmra.mxu0 %v328
        %v1719 = vpop.f32.mrf.mxu0
        %v1720 = vadd.f32 %v935, %v1719
        %v1721 = vpop.f32.mrf.mxu0
        %1722 = vmatprep.mubr.f32.mxu0 0.0
        %1723 = vmatmul.mubr.f32.gmra.mxu0 %v331
        %v1724 = vpop.f32.mrf.mxu0
        %v1725 = vadd.f32 %v940, %v1724
        %v1726 = vpop.f32.mrf.mxu0
        %1727 = vmatprep.mubr.f32.mxu0 0.0
        %1728 = vmatmul.mubr.f32.gmra.mxu0 %v334
        %v1729 = vpop.f32.mrf.mxu0
        %v1730 = vadd.f32 %v945, %v1729
        %v1731 = vpop.f32.mrf.mxu0
        %1732 = vmatprep.mubr.f32.mxu0 0.0
        %1733 = vmatmul.mubr.f32.gmra.mxu0 %v337
        %v1734 = vpop.f32.mrf.mxu0
        %v1735 = vadd.f32 %v950, %v1734
        %v1736 = vpop.f32.mrf.mxu0
        %1737 = vmatprep.mubr.f32.mxu0 0.0
        %1738 = vmatmul.mubr.f32.gmra.mxu0 %v340
        %v1739 = vpop.f32.mrf.mxu0
        %v1740 = vadd.f32 %v955, %v1739
        %v1741 = vpop.f32.mrf.mxu0
        %1742 = vmatprep.mubr.f32.mxu0 0.0
        %1743 = vmatmul.mubr.f32.gmra.mxu0 %v343
        %v1744 = vpop.f32.mrf.mxu0
        %v1745 = vadd.f32 %v960, %v1744
        %v1746 = vpop.f32.mrf.mxu0
        %1747 = vmatprep.mubr.f32.mxu0 0.0
        %1748 = vmatmul.mubr.f32.gmra.mxu0 %v346
        %v1749 = vpop.f32.mrf.mxu0
        %v1750 = vadd.f32 %v965, %v1749
        %v1751 = vpop.f32.mrf.mxu0
        %1752 = vmatprep.mubr.f32.mxu0 0.0
        %1753 = vmatmul.mubr.f32.gmra.mxu0 %v349
        %v1754 = vpop.f32.mrf.mxu0
        %v1755 = vadd.f32 %v970, %v1754
        %v1756 = vpop.f32.mrf.mxu0
        %1757 = vmatprep.mubr.f32.mxu0 0.0
        %1758 = vmatmul.mubr.f32.gmra.mxu0 %v352
        %v1759 = vpop.f32.mrf.mxu0
        %v1760 = vadd.f32 %v975, %v1759
        %v1761 = vpop.f32.mrf.mxu0
        %1762 = vmatprep.mubr.f32.mxu0 0.0
        %1763 = vmatmul.mubr.f32.gmra.mxu0 %v355
        %v1764 = vpop.f32.mrf.mxu0
        %v1765 = vadd.f32 %v980, %v1764
        %v1766 = vpop.f32.mrf.mxu0
        %1767 = vmatprep.mubr.f32.mxu0 0.0
        %1768 = vmatmul.mubr.f32.gmra.mxu0 %v358
        %v1769 = vpop.f32.mrf.mxu0
        %v1770 = vadd.f32 %v985, %v1769
        %v1771 = vpop.f32.mrf.mxu0
        %1772 = vmatprep.mubr.f32.mxu0 0.0
        %1773 = vmatmul.mubr.f32.gmra.mxu0 %v361
        %v1774 = vpop.f32.mrf.mxu0
        %v1775 = vadd.f32 %v990, %v1774
        %v1776 = vpop.f32.mrf.mxu0
        %1777 = vmatprep.mubr.f32.mxu0 0.0
        %1778 = vmatmul.mubr.f32.gmra.mxu0 %v364
        %v1779 = vpop.f32.mrf.mxu0
        %v1780 = vadd.f32 %v995, %v1779
        %v1781 = vpop.f32.mrf.mxu0
        %1782 = vmatprep.mubr.f32.mxu0 0.0
        %1783 = vmatmul.mubr.f32.gmra.mxu0 %v367
        %v1784 = vpop.f32.mrf.mxu0
        %v1785 = vadd.f32 %v1000, %v1784
        %v1786 = vpop.f32.mrf.mxu0
        %1787 = vmatprep.mubr.f32.mxu0 0.0
        %1788 = vmatmul.mubr.f32.gmra.mxu0 %v370
        %v1789 = vpop.f32.mrf.mxu0
        %v1790 = vadd.f32 %v1005, %v1789
        %v1791 = vpop.f32.mrf.mxu0
        %1792 = vmatprep.mubr.f32.mxu0 0.0
        %1793 = vmatmul.mubr.f32.gmra.mxu0 %v373
        %v1794 = vpop.f32.mrf.mxu0
        %v1795 = vadd.f32 %v1010, %v1794
        %v1796 = vpop.f32.mrf.mxu0
        %1797 = vmatprep.mubr.f32.mxu0 0.0
        %1798 = vmatmul.mubr.f32.gmra.mxu0 %v376
        %v1799 = vpop.f32.mrf.mxu0
        %v1800 = vadd.f32 %v1015, %v1799
        %v1801 = vpop.f32.mrf.mxu0
        %1802 = vmatprep.mubr.f32.mxu0 0.0
        %1803 = vmatmul.mubr.f32.gmra.mxu0 %v379
        %v1804 = vpop.f32.mrf.mxu0
        %v1805 = vadd.f32 %v1020, %v1804
        %v1806 = vpop.f32.mrf.mxu0
        %1807 = vmatprep.mubr.f32.mxu0 0.0
        %1808 = vmatmul.mubr.f32.gmra.mxu0 %v382
        %v1809 = vpop.f32.mrf.mxu0
        %v1810 = vadd.f32 %v1025, %v1809
        %v1811 = vpop.f32.mrf.mxu0
        %1812 = vmatprep.mubr.f32.mxu0 0.0
        %1813 = vmatmul.mubr.f32.gmra.mxu0 %v385
        %v1814 = vpop.f32.mrf.mxu0
        %v1815 = vadd.f32 %v1030, %v1814
        %v1816 = vpop.f32.mrf.mxu0
        %1817 = vmatprep.mubr.f32.mxu0 0.0
        %1818 = vmatmul.mubr.f32.gmra.mxu0 %v388
        %v1819 = vpop.f32.mrf.mxu0
        %v1820 = vadd.f32 %v1035, %v1819
        %v1821 = vpop.f32.mrf.mxu0
        %1822 = vmatprep.mubr.f32.mxu0 0.0
        %1823 = vmatmul.mubr.f32.gmra.mxu0 %v391
        %v1824 = vpop.f32.mrf.mxu0
        %v1825 = vadd.f32 %v1040, %v1824
        %v1826 = vpop.f32.mrf.mxu0
        %1827 = vmatprep.mubr.f32.mxu0 0.0
        %1828 = vmatmul.mubr.f32.gmra.mxu0 %v394
        %v1829 = vpop.f32.mrf.mxu0
        %v1830 = vadd.f32 %v1045, %v1829
        %v1831 = vpop.f32.mrf.mxu0
        %1832 = vmatprep.mubr.f32.mxu0 0.0
        %1833 = vmatmul.mubr.f32.gmra.mxu0 %v397
        %v1834 = vpop.f32.mrf.mxu0
        %v1835 = vadd.f32 %v1050, %v1834
        %v1836 = vpop.f32.mrf.mxu0
        %1837 = vmatprep.mubr.f32.mxu0 0.0
        %1838 = vmatmul.mubr.f32.gmra.mxu0 %v400
        %v1839 = vpop.f32.mrf.mxu0
        %v1840 = vadd.f32 %v1055, %v1839
        %v1841 = vpop.f32.mrf.mxu0
        %1842 = vmatprep.mubr.f32.mxu0 0.0
        %1843 = vmatmul.mubr.f32.gmra.mxu0 %v403
        %v1844 = vpop.f32.mrf.mxu0
        %v1845 = vadd.f32 %v1060, %v1844
        %v1846 = vpop.f32.mrf.mxu0
        %1847 = vmatprep.mubr.f32.mxu0 0.0
        %1848 = vmatmul.mubr.f32.gmra.mxu0 %v406
        %v1849 = vpop.f32.mrf.mxu0
        %v1850 = vadd.f32 %v1065, %v1849
        %v1851 = vpop.f32.mrf.mxu0
        %1852 = vmatprep.mubr.f32.mxu0 0.0
        %1853 = vmatmul.mubr.f32.gmra.mxu0 %v409
        %v1854 = vpop.f32.mrf.mxu0
        %v1855 = vadd.f32 %v1070, %v1854
        %v1856 = vpop.f32.mrf.mxu0
        %1857 = vmatprep.mubr.f32.mxu0 0.0
        %1858 = vmatmul.mubr.f32.gmra.mxu0 %v412
        %v1859 = vpop.f32.mrf.mxu0
        %v1860 = vadd.f32 %v1075, %v1859
        %v1861 = vpop.f32.mrf.mxu0
        %1862 = vmatprep.mubr.f32.mxu0 0.0
        %1863 = vmatmul.mubr.f32.gmra.mxu0 %v415
        %v1864 = vpop.f32.mrf.mxu0
        %v1865 = vadd.f32 %v1080, %v1864
        %v1866 = vpop.f32.mrf.mxu0
        %1867 = vmatprep.mubr.f32.mxu0 0.0
        %1868 = vmatmul.mubr.f32.gmra.mxu0 %v418
        %v1869 = vpop.f32.mrf.mxu0
        %v1870 = vadd.f32 %v1085, %v1869
        %v1871 = vpop.f32.mrf.mxu0
        %1872 = vmatprep.mubr.f32.mxu0 0.0
        %1873 = vmatmul.mubr.f32.gmra.mxu0 %v421
        %v1874 = vpop.f32.mrf.mxu0
        %v1875 = vadd.f32 %v1090, %v1874
        %v1876 = vpop.f32.mrf.mxu0
        %1877 = vmatprep.mubr.f32.mxu0 0.0
        %1878 = vmatmul.mubr.f32.gmra.mxu0 %v424
        %v1879 = vpop.f32.mrf.mxu0
        %v1880 = vadd.f32 %v1095, %v1879
        %v1881 = vpop.f32.mrf.mxu0
        %1882 = vmatprep.mubr.f32.mxu0 0.0
        %1883 = vmatmul.mubr.f32.gmra.mxu0 %v427
        %v1884 = vpop.f32.mrf.mxu0
        %v1885 = vadd.f32 %v1100, %v1884
        %v1886 = vpop.f32.mrf.mxu0
        %1887 = vmatprep.mubr.f32.mxu0 0.0
        %1888 = vmatmul.mubr.f32.gmra.mxu0 %v430
        %v1889 = vpop.f32.mrf.mxu0
        %v1890 = vadd.f32 %v1105, %v1889
        %v1891 = vpop.f32.mrf.mxu0
        %1892 = vmatprep.mubr.f32.mxu0 0.0
        %1893 = vmatmul.mubr.f32.gmra.mxu0 %v433
        %v1894 = vpop.f32.mrf.mxu0
        %v1895 = vadd.f32 %v1110, %v1894
        %v1896 = vpop.f32.mrf.mxu0
        %1897 = vmatprep.mubr.f32.mxu0 0.0
        %1898 = vmatmul.mubr.f32.gmra.mxu0 %v436
        %v1899 = vpop.f32.mrf.mxu0
        %v1900 = vadd.f32 %v1115, %v1899
        %v1901 = vpop.f32.mrf.mxu0
        %1902 = vmatprep.mubr.f32.mxu0 0.0
        %1903 = vmatmul.mubr.f32.gmra.mxu0 %v439
        %v1904 = vpop.f32.mrf.mxu0
        %v1905 = vadd.f32 %v1120, %v1904
        %v1906 = vpop.f32.mrf.mxu0
        %1907 = vmatprep.mubr.f32.mxu0 0.0
        %1908 = vmatmul.mubr.f32.gmra.mxu0 %v442
        %v1909 = vpop.f32.mrf.mxu0
        %v1910 = vadd.f32 %v1125, %v1909
        %v1911 = vpop.f32.mrf.mxu0
        %1912 = vmatprep.mubr.f32.mxu0 0.0
        %1913 = vmatmul.mubr.f32.gmra.mxu0 %v445
        %v1914 = vpop.f32.mrf.mxu0
        %v1915 = vadd.f32 %v1130, %v1914
        %v1916 = vpop.f32.mrf.mxu0
        %1917 = vmatprep.mubr.f32.mxu0 0.0
        %1918 = vmatmul.mubr.f32.gmra.mxu0 %v448
        %v1919 = vpop.f32.mrf.mxu0
        %v1920 = vadd.f32 %v1135, %v1919
        %v1921 = vpop.f32.mrf.mxu0
        %1922 = vmatprep.mubr.f32.mxu0 0.0
        %1923 = vmatmul.mubr.f32.gmra.mxu0 %v451
        %v1924 = vpop.f32.mrf.mxu0
        %v1925 = vadd.f32 %v1140, %v1924
        %v1926 = vpop.f32.mrf.mxu0
        %1927 = vmatprep.mubr.f32.mxu0 0.0
        %1928 = vmatmul.mubr.f32.gmra.mxu0 %v454
        %v1929 = vpop.f32.mrf.mxu0
        %v1930 = vadd.f32 %v1145, %v1929
        %v1931 = vpop.f32.mrf.mxu0
        %1932 = vmatprep.mubr.f32.mxu0 0.0
        %1933 = vmatmul.mubr.f32.gmra.mxu0 %v457
        %v1934 = vpop.f32.mrf.mxu0
        %v1935 = vadd.f32 %v1150, %v1934
        %v1936 = vpop.f32.mrf.mxu0
        %1937 = vmatprep.mubr.f32.mxu0 0.0
        %1938 = vmatmul.mubr.f32.gmra.mxu0 %v460
        %v1939 = vpop.f32.mrf.mxu0
        %v1940 = vadd.f32 %v1155, %v1939
        %v1941 = vpop.f32.mrf.mxu0
        %1942 = vmatprep.mubr.f32.mxu0 0.0
        %1943 = vmatmul.mubr.f32.gmra.mxu0 %v463
        %v1944 = vpop.f32.mrf.mxu0
        %v1945 = vadd.f32 %v1160, %v1944
        %v1946 = vpop.f32.mrf.mxu0
        %1947 = vmatprep.mubr.f32.mxu0 0.0
        %1948 = vmatmul.mubr.f32.gmra.mxu0 %v466
        %v1949 = vpop.f32.mrf.mxu0
        %v1950 = vadd.f32 %v1165, %v1949
        %v1951 = vpop.f32.mrf.mxu0
        %1952 = vmatprep.mubr.f32.mxu0 0.0
        %1953 = vmatmul.mubr.f32.gmra.mxu0 %v469
        %v1954 = vpop.f32.mrf.mxu0
        %v1955 = vadd.f32 %v1170, %v1954
        %v1956 = vpop.f32.mrf.mxu0
        %1957 = vmatprep.mubr.f32.mxu0 0.0
        %1958 = vmatmul.mubr.f32.gmra.mxu0 %v472
        %v1959 = vpop.f32.mrf.mxu0
        %v1960 = vadd.f32 %v1175, %v1959
        %v1961 = vpop.f32.mrf.mxu0
        %1962 = vmatprep.mubr.f32.mxu0 0.0
        %1963 = vmatmul.mubr.f32.gmra.mxu0 %v475
        %v1964 = vpop.f32.mrf.mxu0
        %v1965 = vadd.f32 %v1180, %v1964
        %v1966 = vpop.f32.mrf.mxu0
        %1967 = vmatprep.mubr.f32.mxu0 0.0
        %1968 = vmatmul.mubr.f32.gmra.mxu0 %v478
        %v1969 = vpop.f32.mrf.mxu0
        %v1970 = vadd.f32 %v1185, %v1969
        %v1971 = vpop.f32.mrf.mxu0
        %1972 = vmatprep.mubr.f32.mxu0 0.0
        %1973 = vmatmul.mubr.f32.gmra.mxu0 %v481
        %v1974 = vpop.f32.mrf.mxu0
        %v1975 = vadd.f32 %v1190, %v1974
        %v1976 = vpop.f32.mrf.mxu0
        %1977 = vmatprep.mubr.f32.mxu0 0.0
        %1978 = vmatmul.mubr.f32.gmra.mxu0 %v484
        %v1979 = vpop.f32.mrf.mxu0
        %v1980 = vadd.f32 %v1195, %v1979
        %v1981 = vpop.f32.mrf.mxu0
        %1982 = vmatprep.mubr.f32.mxu0 0.0
        %1983 = vmatmul.mubr.f32.gmra.mxu0 %v487
        %v1984 = vpop.f32.mrf.mxu0
        %v1985 = vadd.f32 %v1200, %v1984
        %v1986 = vpop.f32.mrf.mxu0
        %1987 = vmatprep.mubr.f32.mxu0 0.0
        %1988 = vmatmul.mubr.f32.gmra.mxu0 %v490
        %v1989 = vpop.f32.mrf.mxu0
        %v1990 = vadd.f32 %v1205, %v1989
        %v1991 = vpop.f32.mrf.mxu0
        %1992 = vmatprep.mubr.f32.mxu0 0.0
        %1993 = vmatmul.mubr.f32.gmra.mxu0 %v493
        %v1994 = vpop.f32.mrf.mxu0
        %v1995 = vadd.f32 %v1210, %v1994
        %v1996 = vpop.f32.mrf.mxu0
        %1997 = vmatprep.mubr.f32.mxu0 0.0
        %1998 = vmatmul.mubr.f32.gmra.mxu0 %v496
        %v1999 = vpop.f32.mrf.mxu0
        %v2000 = vadd.f32 %v1215, %v1999
        %v2001 = vpop.f32.mrf.mxu0
        %2002 = vmatprep.mubr.f32.mxu0 0.0
        %2003 = vmatmul.mubr.f32.gmra.mxu0 %v499
        %v2004 = vpop.f32.mrf.mxu0
        %v2005 = vadd.f32 %v1220, %v2004
        %v2006 = vpop.f32.mrf.mxu0
        %2007 = vmatprep.mubr.f32.mxu0 0.0
        %2008 = vmatmul.mubr.f32.gmra.mxu0 %v502
        %v2009 = vpop.f32.mrf.mxu0
        %v2010 = vadd.f32 %v1225, %v2009
        %v2011 = vpop.f32.mrf.mxu0
        %2012 = vmatprep.mubr.f32.mxu0 0.0
        %2013 = vmatmul.mubr.f32.gmra.mxu0 %v505
        %v2014 = vpop.f32.mrf.mxu0
        %v2015 = vadd.f32 %v1230, %v2014
        %v2016 = vpop.f32.mrf.mxu0
        %2017 = vmatprep.mubr.f32.mxu0 0.0
        %2018 = vmatmul.mubr.f32.gmra.mxu0 %v508
        %v2019 = vpop.f32.mrf.mxu0
        %v2020 = vadd.f32 %v1235, %v2019
        %v2021 = vpop.f32.mrf.mxu0
        %2022 = vmatprep.mubr.f32.mxu0 0.0
        %2023 = vmatmul.mubr.f32.gmra.mxu0 %v511
        %v2024 = vpop.f32.mrf.mxu0
        %v2025 = vadd.f32 %v1240, %v2024
        %v2026 = vpop.f32.mrf.mxu0
        %2027 = vmatprep.mubr.f32.mxu0 0.0
        %2028 = vmatmul.mubr.f32.gmra.mxu0 %v514
        %v2029 = vpop.f32.mrf.mxu0
        %v2030 = vadd.f32 %v1245, %v2029
        %v2031 = vpop.f32.mrf.mxu0
        %2032 = vmatprep.mubr.f32.mxu0 0.0
        %2033 = vmatmul.mubr.f32.gmra.mxu0 %v517
        %v2034 = vpop.f32.mrf.mxu0
        %v2035 = vadd.f32 %v1250, %v2034
        %v2036 = vpop.f32.mrf.mxu0
        %2037 = vmatprep.mubr.f32.mxu0 0.0
        %2038 = vmatmul.mubr.f32.gmra.mxu0 %v520
        %v2039 = vpop.f32.mrf.mxu0
        %v2040 = vadd.f32 %v1255, %v2039
        %v2041 = vpop.f32.mrf.mxu0
        %2042 = vmatprep.mubr.f32.mxu0 0.0
        %2043 = vmatmul.mubr.f32.gmra.mxu0 %v523
        %v2044 = vpop.f32.mrf.mxu0
        %v2045 = vadd.f32 %v1260, %v2044
        %v2046 = vpop.f32.mrf.mxu0
        %2047 = vmatprep.mubr.f32.mxu0 0.0
        %2048 = vmatmul.mubr.f32.gmra.mxu0 %v526
        %v2049 = vpop.f32.mrf.mxu0
        %v2050 = vadd.f32 %v1265, %v2049
        %v2051 = vpop.f32.mrf.mxu0
        %2052 = vmatprep.mubr.f32.mxu0 0.0
        %2053 = vmatmul.mubr.f32.gmra.mxu0 %v529
        %v2054 = vpop.f32.mrf.mxu0
        %v2055 = vadd.f32 %v1270, %v2054
        %v2056 = vpop.f32.mrf.mxu0
        %2057 = vmatprep.mubr.f32.mxu0 0.0
        %2058 = vmatmul.mubr.f32.gmra.mxu0 %v532
        %v2059 = vpop.f32.mrf.mxu0
        %v2060 = vadd.f32 %v1275, %v2059
        %v2061 = vpop.f32.mrf.mxu0
        %2062 = vmatprep.mubr.f32.mxu0 0.0
        %2063 = vmatmul.mubr.f32.gmra.mxu0 %v535
        %v2064 = vpop.f32.mrf.mxu0
        %v2065 = vadd.f32 %v1280, %v2064
        %v2066 = vpop.f32.mrf.mxu0
        %2067 = vmatprep.mubr.f32.mxu0 0.0
        %2068 = vmatmul.mubr.f32.gmra.mxu0 %v538
        %v2069 = vpop.f32.mrf.mxu0
        %v2070 = vadd.f32 %v1285, %v2069
        %v2071 = vpop.f32.mrf.mxu0
        %2072 = vmatprep.mubr.f32.mxu0 0.0
        %2073 = vmatmul.mubr.f32.gmra.mxu0 %v541
        %v2074 = vpop.f32.mrf.mxu0
        %v2075 = vadd.f32 %v1290, %v2074
        %v2076 = vpop.f32.mrf.mxu0
        %2077 = vmatprep.mubr.f32.mxu0 0.0
        %2078 = vmatmul.mubr.f32.gmra.mxu0 %v544
        %v2079 = vpop.f32.mrf.mxu0
        %v2080 = vadd.f32 %v1295, %v2079
        %v2081 = vpop.f32.mrf.mxu0
        %2082 = vmatprep.mubr.f32.mxu0 0.0
        %2083 = vmatmul.mubr.f32.gmra.mxu0 %v547
        %v2084 = vpop.f32.mrf.mxu0
        %v2085 = vadd.f32 %v1300, %v2084
        %v2086 = vpop.f32.mrf.mxu0
        %2087 = vmatprep.mubr.f32.mxu0 0.0
        %2088 = vmatmul.mubr.f32.gmra.mxu0 %v550
        %v2089 = vpop.f32.mrf.mxu0
        %v2090 = vadd.f32 %v1305, %v2089
        %v2091 = vpop.f32.mrf.mxu0
        %2092 = vmatprep.mubr.f32.mxu0 0.0
        %2093 = vmatmul.mubr.f32.gmra.mxu0 %v553
        %v2094 = vpop.f32.mrf.mxu0
        %v2095 = vadd.f32 %v1310, %v2094
        %v2096 = vpop.f32.mrf.mxu0
        %2097 = vmatprep.mubr.f32.mxu0 0.0
        %2098 = vmatmul.mubr.f32.gmra.mxu0 %v556
        %v2099 = vpop.f32.mrf.mxu0
        %v2100 = vadd.f32 %v1315, %v2099
        %v2101 = vpop.f32.mrf.mxu0
        %2102 = vmatprep.mubr.f32.mxu0 0.0
        %2103 = vmatmul.mubr.f32.gmra.mxu0 %v559
        %v2104 = vpop.f32.mrf.mxu0
        %v2105 = vadd.f32 %v1320, %v2104
        %v2106 = vpop.f32.mrf.mxu0
        %2107 = vmatprep.mubr.f32.mxu0 0.0
        %2108 = vmatmul.mubr.f32.gmra.mxu0 %v562
        %v2109 = vpop.f32.mrf.mxu0
        %v2110 = vadd.f32 %v1325, %v2109
        %v2111 = vpop.f32.mrf.mxu0
        %2112 = vmatprep.mubr.f32.mxu0 0.0
        %2113 = vmatmul.mubr.f32.gmra.mxu0 %v565
        %v2114 = vpop.f32.mrf.mxu0
        %v2115 = vadd.f32 %v1330, %v2114
        %v2116 = vpop.f32.mrf.mxu0
        %2117 = vmatprep.mubr.f32.mxu0 0.0
        %2118 = vmatmul.mubr.f32.gmra.mxu0 %v568
        %v2119 = vpop.f32.mrf.mxu0
        %v2120 = vadd.f32 %v1335, %v2119
        %v2121 = vpop.f32.mrf.mxu0
        %2122 = vmatprep.mubr.f32.mxu0 0.0
        %2123 = vmatmul.mubr.f32.gmra.mxu0 %v571
        %v2124 = vpop.f32.mrf.mxu0
        %v2125 = vadd.f32 %v1340, %v2124
        %v2126 = vpop.f32.mrf.mxu0
        %2127 = vmatprep.mubr.f32.mxu0 0.0
        %2128 = vmatmul.mubr.f32.gmra.mxu0 %v574
        %v2129 = vpop.f32.mrf.mxu0
        %v2130 = vadd.f32 %v1345, %v2129
        %v2131 = vpop.f32.mrf.mxu0
        %2132 = vmatprep.mubr.f32.mxu0 0.0
        %2133 = vmatmul.mubr.f32.gmra.mxu0 %v577
        %v2134 = vpop.f32.mrf.mxu0
        %v2135 = vadd.f32 %v1350, %v2134
        %v2136 = vpop.f32.mrf.mxu0
        %2137 = vmatprep.mubr.f32.mxu0 0.0
        %2138 = vmatmul.mubr.f32.gmra.mxu0 %v580
        %v2139 = vpop.f32.mrf.mxu0
        %v2140 = vadd.f32 %v1355, %v2139
        %v2141 = vpop.f32.mrf.mxu0
        %2142 = vmatprep.mubr.f32.mxu0 0.0
        %2143 = vmatmul.mubr.f32.gmra.mxu0 %v583
        %v2144 = vpop.f32.mrf.mxu0
        %v2145 = vadd.f32 %v1360, %v2144
        %v2146 = vpop.f32.mrf.mxu0
        %2147 = vmatprep.mubr.f32.mxu0 0.0
        %2148 = vmatmul.mubr.f32.gmra.mxu0 %v586
        %v2149 = vpop.f32.mrf.mxu0
        %v2150 = vadd.f32 %v1365, %v2149
        %v2151 = vpop.f32.mrf.mxu0
        %2152 = vmatprep.mubr.f32.mxu0 0.0
        %2153 = vmatmul.mubr.f32.gmra.mxu0 %v589
        %v2154 = vpop.f32.mrf.mxu0
        %v2155 = vadd.f32 %v1370, %v2154
        %v2156 = vpop.f32.mrf.mxu0
        %2157 = vmatprep.mubr.f32.mxu0 0.0
        %2158 = vmatmul.mubr.f32.gmra.mxu0 %v592
        %v2159 = vpop.f32.mrf.mxu0
        %v2160 = vadd.f32 %v1375, %v2159
        %v2161 = vpop.f32.mrf.mxu0
        %2162 = vmatprep.mubr.f32.mxu0 0.0
        %2163 = vmatmul.mubr.f32.gmra.mxu0 %v595
        %v2164 = vpop.f32.mrf.mxu0
        %v2165 = vadd.f32 %v1380, %v2164
        %v2166 = vpop.f32.mrf.mxu0
        %2167 = vmatprep.mubr.f32.mxu0 0.0
        %2168 = vmatmul.mubr.f32.gmra.mxu0 %v598
        %v2169 = vpop.f32.mrf.mxu0
        %v2170 = vadd.f32 %v1385, %v2169
        %v2171 = vpop.f32.mrf.mxu0
        %2172 = vmatprep.mubr.f32.mxu0 0.0
        %2173 = vmatmul.mubr.f32.gmra.mxu0 %v601
        %v2174 = vpop.f32.mrf.mxu0
        %v2175 = vadd.f32 %v1390, %v2174
        %v2176 = vpop.f32.mrf.mxu0
        %2177 = vmatprep.mubr.f32.mxu0 0.0
        %2178 = vmatmul.mubr.f32.gmra.mxu0 %v604
        %v2179 = vpop.f32.mrf.mxu0
        %v2180 = vadd.f32 %v1395, %v2179
        %v2181 = vpop.f32.mrf.mxu0
        %2182 = vmatprep.mubr.f32.mxu0 0.0
        %2183 = vmatmul.mubr.f32.gmra.mxu0 %v607
        %v2184 = vpop.f32.mrf.mxu0
        %v2185 = vadd.f32 %v1400, %v2184
        %v2186 = vpop.f32.mrf.mxu0
        %2187 = vmatprep.mubr.f32.mxu0 0.0
        %2188 = vmatmul.mubr.f32.gmra.mxu0 %v610
        %v2189 = vpop.f32.mrf.mxu0
        %v2190 = vadd.f32 %v1405, %v2189
        %v2191 = vpop.f32.mrf.mxu0
        %2192 = vmatprep.mubr.f32.mxu0 0.0
        %2193 = vmatmul.mubr.f32.gmra.mxu0 %v613
        %v2194 = vpop.f32.mrf.mxu0
        %v2195 = vadd.f32 %v1410, %v2194
        %v2196 = vpop.f32.mrf.mxu0
        %2197 = vmatprep.mubr.f32.mxu0 0.0
        %2198 = vmatmul.mubr.f32.gmra.mxu0 %v616
        %v2199 = vpop.f32.mrf.mxu0
        %v2200 = vadd.f32 %v1415, %v2199
        %v2201 = vpop.f32.mrf.mxu0
        %2202 = vmatprep.mubr.f32.mxu0 0.0
        %2203 = vmatmul.mubr.f32.gmra.mxu0 %v619
        %v2204 = vpop.f32.mrf.mxu0
        %v2205 = vadd.f32 %v1420, %v2204
        %v2206 = vpop.f32.mrf.mxu0
        %2207 = vmatprep.mubr.f32.mxu0 0.0
        %2208 = vmatmul.mubr.f32.gmra.mxu0 %v622
        %v2209 = vpop.f32.mrf.mxu0
        %v2210 = vadd.f32 %v1425, %v2209
        %v2211 = vpop.f32.mrf.mxu0
        %2212 = vmatprep.mubr.f32.mxu0 0.0
        %2213 = vmatmul.mubr.f32.gmra.mxu0 %v625
        %v2214 = vpop.f32.mrf.mxu0
        %v2215 = vadd.f32 %v1430, %v2214
        %v2216 = vpop.f32.mrf.mxu0
        %2217 = vmatprep.mubr.f32.mxu0 0.0
        %2218 = vmatmul.mubr.f32.gmra.mxu0 %v628
        %v2219 = vpop.f32.mrf.mxu0
        %v2220 = vadd.f32 %v1435, %v2219
        %v2221 = vpop.f32.mrf.mxu0
        %2222 = vmatprep.mubr.f32.mxu0 0.0
        %2223 = vmatmul.mubr.f32.gmra.mxu0 %v631
        %v2224 = vpop.f32.mrf.mxu0
        %v2225 = vadd.f32 %v1440, %v2224
        %v2226 = vpop.f32.mrf.mxu0
        %2227 = vmatprep.mubr.f32.mxu0 0.0
        %2228 = vmatmul.mubr.f32.gmra.mxu0 %v634
        %v2229 = vpop.f32.mrf.mxu0
        %v2230 = vadd.f32 %v1445, %v2229
        %v2231 = vpop.f32.mrf.mxu0
        %2232 = vmatprep.mubr.f32.mxu0 0.0
        %2233 = vmatmul.mubr.f32.gmra.mxu0 %v637
        %v2234 = vpop.f32.mrf.mxu0
        %v2235 = vadd.f32 %v1450, %v2234
        %v2236 = vpop.f32.mrf.mxu0
        %2237 = vmatprep.mubr.f32.mxu0 0.0
        %2238 = vmatmul.mubr.f32.gmra.mxu0 %v640
        %v2239 = vpop.f32.mrf.mxu0
        %v2240 = vadd.f32 %v1455, %v2239
        %v2241 = vpop.f32.mrf.mxu0
        %2242 = vmatprep.mubr.f32.mxu0 0.0
        %2243 = vmatmul.mubr.f32.gmra.mxu0 %v643
        %v2244 = vpop.f32.mrf.mxu0
        %v2245 = vadd.f32 %v1460, %v2244
        %v2246 = vpop.f32.mrf.mxu0
        %2247 = vmatprep.mubr.f32.mxu0 0.0
        %2248 = vmatmul.mubr.f32.gmra.mxu0 %v646
        %v2249 = vpop.f32.mrf.mxu0
        %v2250 = vadd.f32 %v1465, %v2249
        %v2251 = vpop.f32.mrf.mxu0
        %2252 = vmatprep.mubr.f32.mxu0 0.0
        %2253 = vmatmul.mubr.f32.gmra.mxu0 %v649
        %v2254 = vpop.f32.mrf.mxu0
        %v2255 = vadd.f32 %v1470, %v2254
        %v2256 = vpop.f32.mrf.mxu0
        %2257 = vmatprep.mubr.f32.mxu0 0.0
        %2258 = vmatmul.mubr.f32.gmra.mxu0 %v652
        %v2259 = vpop.f32.mrf.mxu0
        %v2260 = vadd.f32 %v1475, %v2259
        %v2261 = vpop.f32.mrf.mxu0
        %2262 = vmatprep.mubr.f32.mxu0 0.0
        %2263 = vmatmul.mubr.f32.gmra.mxu0 %v655
        %v2264 = vpop.f32.mrf.mxu0
        %v2265 = vadd.f32 %v1480, %v2264
        %v2266 = vpop.f32.mrf.mxu0
        %2267 = vmatprep.mubr.f32.mxu0 0.0
        %2268 = vmatmul.mubr.f32.gmra.mxu0 %v658
        %v2269 = vpop.f32.mrf.mxu0
        %v2270 = vadd.f32 %v1485, %v2269
        %v2271 = vpop.f32.mrf.mxu0
        %2272 = vmatprep.mubr.f32.mxu0 0.0
        %2273 = vmatmul.mubr.f32.gmra.mxu0 %v661
        %v2274 = vpop.f32.mrf.mxu0
        %v2275 = vadd.f32 %v1490, %v2274
        %v2276 = vpop.f32.mrf.mxu0
        %2277 = vmatprep.mubr.f32.mxu0 0.0
        %2278 = vmatmul.mubr.f32.gmra.mxu0 %v664
        %v2279 = vpop.f32.mrf.mxu0
        %v2280 = vadd.f32 %v1495, %v2279
        %v2281 = vpop.f32.mrf.mxu0
        %2282 = vdwg.mxu0
        %vm2283 = vcmask 400384
        %v2284 = vsel %vm2283, %v1565, 0.0
        %2285 = vadd.xlane.f32.xlu0 %v2284
        %v2286 = vpop.xlane.xlu0 %2285
        %v2287 = vsel %vm2283, %v1570, 0.0
        %2288 = vadd.xlane.f32.xlu0 %v2287
        %v2289 = vpop.xlane.xlu0 %2288
        %v2290 = vsel %vm2283, %v1575, 0.0
        %2291 = vadd.xlane.f32.xlu0 %v2290
        %v2292 = vpop.xlane.xlu0 %2291
        %v2293 = vsel %vm2283, %v1580, 0.0
        %2294 = vadd.xlane.f32.xlu0 %v2293
        %v2295 = vpop.xlane.xlu0 %2294
        %v2296 = vsel %vm2283, %v1585, 0.0
        %2297 = vadd.xlane.f32.xlu0 %v2296
        %v2298 = vpop.xlane.xlu0 %2297
        %v2299 = vsel %vm2283, %v1590, 0.0
        %2300 = vadd.xlane.f32.xlu0 %v2299
        %v2301 = vpop.xlane.xlu0 %2300
        %v2302 = vsel %vm2283, %v1595, 0.0
        %2303 = vadd.xlane.f32.xlu0 %v2302
        %v2304 = vpop.xlane.xlu0 %2303
        %v2305 = vsel %vm2283, %v1600, 0.0
        %2306 = vadd.xlane.f32.xlu0 %v2305
        %v2307 = vpop.xlane.xlu0 %2306
        %v2308 = vsel %vm2283, %v1605, 0.0
        %2309 = vadd.xlane.f32.xlu0 %v2308
        %v2310 = vpop.xlane.xlu0 %2309
        %v2311 = vsel %vm2283, %v1610, 0.0
        %2312 = vadd.xlane.f32.xlu0 %v2311
        %v2313 = vpop.xlane.xlu0 %2312
        %v2314 = vsel %vm2283, %v1615, 0.0
        %2315 = vadd.xlane.f32.xlu0 %v2314
        %v2316 = vpop.xlane.xlu0 %2315
        %v2317 = vsel %vm2283, %v1620, 0.0
        %2318 = vadd.xlane.f32.xlu0 %v2317
        %v2319 = vpop.xlane.xlu0 %2318
        %v2320 = vsel %vm2283, %v1625, 0.0
        %2321 = vadd.xlane.f32.xlu0 %v2320
        %v2322 = vpop.xlane.xlu0 %2321
        %v2323 = vsel %vm2283, %v1630, 0.0
        %2324 = vadd.xlane.f32.xlu0 %v2323
        %v2325 = vpop.xlane.xlu0 %2324
        %v2326 = vsel %vm2283, %v1635, 0.0
        %2327 = vadd.xlane.f32.xlu0 %v2326
        %v2328 = vpop.xlane.xlu0 %2327
        %v2329 = vsel %vm2283, %v1640, 0.0
        %2330 = vadd.xlane.f32.xlu0 %v2329
        %v2331 = vpop.xlane.xlu0 %2330
        %v2332 = vsel %vm2283, %v1645, 0.0
        %2333 = vadd.xlane.f32.xlu0 %v2332
        %v2334 = vpop.xlane.xlu0 %2333
        %v2335 = vsel %vm2283, %v1650, 0.0
        %2336 = vadd.xlane.f32.xlu0 %v2335
        %v2337 = vpop.xlane.xlu0 %2336
        %v2338 = vsel %vm2283, %v1655, 0.0
        %2339 = vadd.xlane.f32.xlu0 %v2338
        %v2340 = vpop.xlane.xlu0 %2339
        %v2341 = vsel %vm2283, %v1660, 0.0
        %2342 = vadd.xlane.f32.xlu0 %v2341
        %v2343 = vpop.xlane.xlu0 %2342
        %v2344 = vsel %vm2283, %v1665, 0.0
        %2345 = vadd.xlane.f32.xlu0 %v2344
        %v2346 = vpop.xlane.xlu0 %2345
        %v2347 = vsel %vm2283, %v1670, 0.0
        %2348 = vadd.xlane.f32.xlu0 %v2347
        %v2349 = vpop.xlane.xlu0 %2348
        %v2350 = vsel %vm2283, %v1675, 0.0
        %2351 = vadd.xlane.f32.xlu0 %v2350
        %v2352 = vpop.xlane.xlu0 %2351
        %v2353 = vsel %vm2283, %v1680, 0.0
        %2354 = vadd.xlane.f32.xlu0 %v2353
        %v2355 = vpop.xlane.xlu0 %2354
        %v2356 = vsel %vm2283, %v1685, 0.0
        %2357 = vadd.xlane.f32.xlu0 %v2356
        %v2358 = vpop.xlane.xlu0 %2357
        %v2359 = vsel %vm2283, %v1690, 0.0
        %2360 = vadd.xlane.f32.xlu0 %v2359
        %v2361 = vpop.xlane.xlu0 %2360
        %v2362 = vsel %vm2283, %v1695, 0.0
        %2363 = vadd.xlane.f32.xlu0 %v2362
        %v2364 = vpop.xlane.xlu0 %2363
        %v2365 = vsel %vm2283, %v1700, 0.0
        %2366 = vadd.xlane.f32.xlu0 %v2365
        %v2367 = vpop.xlane.xlu0 %2366
        %v2368 = vsel %vm2283, %v1705, 0.0
        %2369 = vadd.xlane.f32.xlu0 %v2368
        %v2370 = vpop.xlane.xlu0 %2369
        %v2371 = vsel %vm2283, %v1710, 0.0
        %2372 = vadd.xlane.f32.xlu0 %v2371
        %v2373 = vpop.xlane.xlu0 %2372
        %v2374 = vsel %vm2283, %v1715, 0.0
        %2375 = vadd.xlane.f32.xlu0 %v2374
        %v2376 = vpop.xlane.xlu0 %2375
        %v2377 = vsel %vm2283, %v1720, 0.0
        %2378 = vadd.xlane.f32.xlu0 %v2377
        %v2379 = vpop.xlane.xlu0 %2378
        %v2380 = vsel %vm2283, %v1725, 0.0
        %2381 = vadd.xlane.f32.xlu0 %v2380
        %v2382 = vpop.xlane.xlu0 %2381
        %v2383 = vsel %vm2283, %v1730, 0.0
        %2384 = vadd.xlane.f32.xlu0 %v2383
        %v2385 = vpop.xlane.xlu0 %2384
        %v2386 = vsel %vm2283, %v1735, 0.0
        %2387 = vadd.xlane.f32.xlu0 %v2386
        %v2388 = vpop.xlane.xlu0 %2387
        %v2389 = vsel %vm2283, %v1740, 0.0
        %2390 = vadd.xlane.f32.xlu0 %v2389
        %v2391 = vpop.xlane.xlu0 %2390
        %v2392 = vsel %vm2283, %v1745, 0.0
        %2393 = vadd.xlane.f32.xlu0 %v2392
        %v2394 = vpop.xlane.xlu0 %2393
        %v2395 = vsel %vm2283, %v1750, 0.0
        %2396 = vadd.xlane.f32.xlu0 %v2395
        %v2397 = vpop.xlane.xlu0 %2396
        %v2398 = vsel %vm2283, %v1755, 0.0
        %2399 = vadd.xlane.f32.xlu0 %v2398
        %v2400 = vpop.xlane.xlu0 %2399
        %v2401 = vsel %vm2283, %v1760, 0.0
        %2402 = vadd.xlane.f32.xlu0 %v2401
        %v2403 = vpop.xlane.xlu0 %2402
        %v2404 = vsel %vm2283, %v1765, 0.0
        %2405 = vadd.xlane.f32.xlu0 %v2404
        %v2406 = vpop.xlane.xlu0 %2405
        %v2407 = vsel %vm2283, %v1770, 0.0
        %2408 = vadd.xlane.f32.xlu0 %v2407
        %v2409 = vpop.xlane.xlu0 %2408
        %v2410 = vsel %vm2283, %v1775, 0.0
        %2411 = vadd.xlane.f32.xlu0 %v2410
        %v2412 = vpop.xlane.xlu0 %2411
        %v2413 = vsel %vm2283, %v1780, 0.0
        %2414 = vadd.xlane.f32.xlu0 %v2413
        %v2415 = vpop.xlane.xlu0 %2414
        %v2416 = vsel %vm2283, %v1785, 0.0
        %2417 = vadd.xlane.f32.xlu0 %v2416
        %v2418 = vpop.xlane.xlu0 %2417
        %v2419 = vsel %vm2283, %v1790, 0.0
        %2420 = vadd.xlane.f32.xlu0 %v2419
        %v2421 = vpop.xlane.xlu0 %2420
        %v2422 = vsel %vm2283, %v1795, 0.0
        %2423 = vadd.xlane.f32.xlu0 %v2422
        %v2424 = vpop.xlane.xlu0 %2423
        %v2425 = vsel %vm2283, %v1800, 0.0
        %2426 = vadd.xlane.f32.xlu0 %v2425
        %v2427 = vpop.xlane.xlu0 %2426
        %v2428 = vsel %vm2283, %v1805, 0.0
        %2429 = vadd.xlane.f32.xlu0 %v2428
        %v2430 = vpop.xlane.xlu0 %2429
        %v2431 = vsel %vm2283, %v1810, 0.0
        %2432 = vadd.xlane.f32.xlu0 %v2431
        %v2433 = vpop.xlane.xlu0 %2432
        %v2434 = vsel %vm2283, %v1815, 0.0
        %2435 = vadd.xlane.f32.xlu0 %v2434
        %v2436 = vpop.xlane.xlu0 %2435
        %v2437 = vsel %vm2283, %v1820, 0.0
        %2438 = vadd.xlane.f32.xlu0 %v2437
        %v2439 = vpop.xlane.xlu0 %2438
        %v2440 = vsel %vm2283, %v1825, 0.0
        %2441 = vadd.xlane.f32.xlu0 %v2440
        %v2442 = vpop.xlane.xlu0 %2441
        %v2443 = vsel %vm2283, %v1830, 0.0
        %2444 = vadd.xlane.f32.xlu0 %v2443
        %v2445 = vpop.xlane.xlu0 %2444
        %v2446 = vsel %vm2283, %v1835, 0.0
        %2447 = vadd.xlane.f32.xlu0 %v2446
        %v2448 = vpop.xlane.xlu0 %2447
        %v2449 = vsel %vm2283, %v1840, 0.0
        %2450 = vadd.xlane.f32.xlu0 %v2449
        %v2451 = vpop.xlane.xlu0 %2450
        %v2452 = vsel %vm2283, %v1845, 0.0
        %2453 = vadd.xlane.f32.xlu0 %v2452
        %v2454 = vpop.xlane.xlu0 %2453
        %v2455 = vsel %vm2283, %v1850, 0.0
        %2456 = vadd.xlane.f32.xlu0 %v2455
        %v2457 = vpop.xlane.xlu0 %2456
        %v2458 = vsel %vm2283, %v1855, 0.0
        %2459 = vadd.xlane.f32.xlu0 %v2458
        %v2460 = vpop.xlane.xlu0 %2459
        %v2461 = vsel %vm2283, %v1860, 0.0
        %2462 = vadd.xlane.f32.xlu0 %v2461
        %v2463 = vpop.xlane.xlu0 %2462
        %v2464 = vsel %vm2283, %v1865, 0.0
        %2465 = vadd.xlane.f32.xlu0 %v2464
        %v2466 = vpop.xlane.xlu0 %2465
        %v2467 = vsel %vm2283, %v1870, 0.0
        %2468 = vadd.xlane.f32.xlu0 %v2467
        %v2469 = vpop.xlane.xlu0 %2468
        %v2470 = vsel %vm2283, %v1875, 0.0
        %2471 = vadd.xlane.f32.xlu0 %v2470
        %v2472 = vpop.xlane.xlu0 %2471
        %v2473 = vsel %vm2283, %v1880, 0.0
        %2474 = vadd.xlane.f32.xlu0 %v2473
        %v2475 = vpop.xlane.xlu0 %2474
        %v2476 = vsel %vm2283, %v1885, 0.0
        %2477 = vadd.xlane.f32.xlu0 %v2476
        %v2478 = vpop.xlane.xlu0 %2477
        %v2479 = vsel %vm2283, %v1890, 0.0
        %2480 = vadd.xlane.f32.xlu0 %v2479
        %v2481 = vpop.xlane.xlu0 %2480
        %v2482 = vsel %vm2283, %v1895, 0.0
        %2483 = vadd.xlane.f32.xlu0 %v2482
        %v2484 = vpop.xlane.xlu0 %2483
        %v2485 = vsel %vm2283, %v1900, 0.0
        %2486 = vadd.xlane.f32.xlu0 %v2485
        %v2487 = vpop.xlane.xlu0 %2486
        %v2488 = vsel %vm2283, %v1905, 0.0
        %2489 = vadd.xlane.f32.xlu0 %v2488
        %v2490 = vpop.xlane.xlu0 %2489
        %v2491 = vsel %vm2283, %v1910, 0.0
        %2492 = vadd.xlane.f32.xlu0 %v2491
        %v2493 = vpop.xlane.xlu0 %2492
        %v2494 = vsel %vm2283, %v1915, 0.0
        %2495 = vadd.xlane.f32.xlu0 %v2494
        %v2496 = vpop.xlane.xlu0 %2495
        %v2497 = vsel %vm2283, %v1920, 0.0
        %2498 = vadd.xlane.f32.xlu0 %v2497
        %v2499 = vpop.xlane.xlu0 %2498
        %v2500 = vsel %vm2283, %v1925, 0.0
        %2501 = vadd.xlane.f32.xlu0 %v2500
        %v2502 = vpop.xlane.xlu0 %2501
        %v2503 = vsel %vm2283, %v1930, 0.0
        %2504 = vadd.xlane.f32.xlu0 %v2503
        %v2505 = vpop.xlane.xlu0 %2504
        %v2506 = vsel %vm2283, %v1935, 0.0
        %2507 = vadd.xlane.f32.xlu0 %v2506
        %v2508 = vpop.xlane.xlu0 %2507
        %v2509 = vsel %vm2283, %v1940, 0.0
        %2510 = vadd.xlane.f32.xlu0 %v2509
        %v2511 = vpop.xlane.xlu0 %2510
        %v2512 = vsel %vm2283, %v1945, 0.0
        %2513 = vadd.xlane.f32.xlu0 %v2512
        %v2514 = vpop.xlane.xlu0 %2513
        %v2515 = vsel %vm2283, %v1950, 0.0
        %2516 = vadd.xlane.f32.xlu0 %v2515
        %v2517 = vpop.xlane.xlu0 %2516
        %v2518 = vsel %vm2283, %v1955, 0.0
        %2519 = vadd.xlane.f32.xlu0 %v2518
        %v2520 = vpop.xlane.xlu0 %2519
        %v2521 = vsel %vm2283, %v1960, 0.0
        %2522 = vadd.xlane.f32.xlu0 %v2521
        %v2523 = vpop.xlane.xlu0 %2522
        %v2524 = vsel %vm2283, %v1965, 0.0
        %2525 = vadd.xlane.f32.xlu0 %v2524
        %v2526 = vpop.xlane.xlu0 %2525
        %v2527 = vsel %vm2283, %v1970, 0.0
        %2528 = vadd.xlane.f32.xlu0 %v2527
        %v2529 = vpop.xlane.xlu0 %2528
        %v2530 = vsel %vm2283, %v1975, 0.0
        %2531 = vadd.xlane.f32.xlu0 %v2530
        %v2532 = vpop.xlane.xlu0 %2531
        %v2533 = vsel %vm2283, %v1980, 0.0
        %2534 = vadd.xlane.f32.xlu0 %v2533
        %v2535 = vpop.xlane.xlu0 %2534
        %v2536 = vsel %vm2283, %v1985, 0.0
        %2537 = vadd.xlane.f32.xlu0 %v2536
        %v2538 = vpop.xlane.xlu0 %2537
        %v2539 = vsel %vm2283, %v1990, 0.0
        %2540 = vadd.xlane.f32.xlu0 %v2539
        %v2541 = vpop.xlane.xlu0 %2540
        %v2542 = vsel %vm2283, %v1995, 0.0
        %2543 = vadd.xlane.f32.xlu0 %v2542
        %v2544 = vpop.xlane.xlu0 %2543
        %v2545 = vsel %vm2283, %v2000, 0.0
        %2546 = vadd.xlane.f32.xlu0 %v2545
        %v2547 = vpop.xlane.xlu0 %2546
        %v2548 = vsel %vm2283, %v2005, 0.0
        %2549 = vadd.xlane.f32.xlu0 %v2548
        %v2550 = vpop.xlane.xlu0 %2549
        %v2551 = vsel %vm2283, %v2010, 0.0
        %2552 = vadd.xlane.f32.xlu0 %v2551
        %v2553 = vpop.xlane.xlu0 %2552
        %v2554 = vsel %vm2283, %v2015, 0.0
        %2555 = vadd.xlane.f32.xlu0 %v2554
        %v2556 = vpop.xlane.xlu0 %2555
        %v2557 = vsel %vm2283, %v2020, 0.0
        %2558 = vadd.xlane.f32.xlu0 %v2557
        %v2559 = vpop.xlane.xlu0 %2558
        %v2560 = vsel %vm2283, %v2025, 0.0
        %2561 = vadd.xlane.f32.xlu0 %v2560
        %v2562 = vpop.xlane.xlu0 %2561
        %v2563 = vsel %vm2283, %v2030, 0.0
        %2564 = vadd.xlane.f32.xlu0 %v2563
        %v2565 = vpop.xlane.xlu0 %2564
        %v2566 = vsel %vm2283, %v2035, 0.0
        %2567 = vadd.xlane.f32.xlu0 %v2566
        %v2568 = vpop.xlane.xlu0 %2567
        %v2569 = vsel %vm2283, %v2040, 0.0
        %2570 = vadd.xlane.f32.xlu0 %v2569
        %v2571 = vpop.xlane.xlu0 %2570
        %v2572 = vsel %vm2283, %v2045, 0.0
        %2573 = vadd.xlane.f32.xlu0 %v2572
        %v2574 = vpop.xlane.xlu0 %2573
        %v2575 = vsel %vm2283, %v2050, 0.0
        %2576 = vadd.xlane.f32.xlu0 %v2575
        %v2577 = vpop.xlane.xlu0 %2576
        %v2578 = vsel %vm2283, %v2055, 0.0
        %2579 = vadd.xlane.f32.xlu0 %v2578
        %v2580 = vpop.xlane.xlu0 %2579
        %v2581 = vsel %vm2283, %v2060, 0.0
        %2582 = vadd.xlane.f32.xlu0 %v2581
        %v2583 = vpop.xlane.xlu0 %2582
        %v2584 = vsel %vm2283, %v2065, 0.0
        %2585 = vadd.xlane.f32.xlu0 %v2584
        %v2586 = vpop.xlane.xlu0 %2585
        %v2587 = vsel %vm2283, %v2070, 0.0
        %2588 = vadd.xlane.f32.xlu0 %v2587
        %v2589 = vpop.xlane.xlu0 %2588
        %v2590 = vsel %vm2283, %v2075, 0.0
        %2591 = vadd.xlane.f32.xlu0 %v2590
        %v2592 = vpop.xlane.xlu0 %2591
        %v2593 = vsel %vm2283, %v2080, 0.0
        %2594 = vadd.xlane.f32.xlu0 %v2593
        %v2595 = vpop.xlane.xlu0 %2594
        %v2596 = vsel %vm2283, %v2085, 0.0
        %2597 = vadd.xlane.f32.xlu0 %v2596
        %v2598 = vpop.xlane.xlu0 %2597
        %v2599 = vsel %vm2283, %v2090, 0.0
        %2600 = vadd.xlane.f32.xlu0 %v2599
        %v2601 = vpop.xlane.xlu0 %2600
        %v2602 = vsel %vm2283, %v2095, 0.0
        %2603 = vadd.xlane.f32.xlu0 %v2602
        %v2604 = vpop.xlane.xlu0 %2603
        %v2605 = vsel %vm2283, %v2100, 0.0
        %2606 = vadd.xlane.f32.xlu0 %v2605
        %v2607 = vpop.xlane.xlu0 %2606
        %v2608 = vsel %vm2283, %v2105, 0.0
        %2609 = vadd.xlane.f32.xlu0 %v2608
        %v2610 = vpop.xlane.xlu0 %2609
        %v2611 = vsel %vm2283, %v2110, 0.0
        %2612 = vadd.xlane.f32.xlu0 %v2611
        %v2613 = vpop.xlane.xlu0 %2612
        %v2614 = vsel %vm2283, %v2115, 0.0
        %2615 = vadd.xlane.f32.xlu0 %v2614
        %v2616 = vpop.xlane.xlu0 %2615
        %v2617 = vsel %vm2283, %v2120, 0.0
        %2618 = vadd.xlane.f32.xlu0 %v2617
        %v2619 = vpop.xlane.xlu0 %2618
        %v2620 = vsel %vm2283, %v2125, 0.0
        %2621 = vadd.xlane.f32.xlu0 %v2620
        %v2622 = vpop.xlane.xlu0 %2621
        %v2623 = vsel %vm2283, %v2130, 0.0
        %2624 = vadd.xlane.f32.xlu0 %v2623
        %v2625 = vpop.xlane.xlu0 %2624
        %v2626 = vsel %vm2283, %v2135, 0.0
        %2627 = vadd.xlane.f32.xlu0 %v2626
        %v2628 = vpop.xlane.xlu0 %2627
        %v2629 = vsel %vm2283, %v2140, 0.0
        %2630 = vadd.xlane.f32.xlu0 %v2629
        %v2631 = vpop.xlane.xlu0 %2630
        %v2632 = vsel %vm2283, %v2145, 0.0
        %2633 = vadd.xlane.f32.xlu0 %v2632
        %v2634 = vpop.xlane.xlu0 %2633
        %v2635 = vsel %vm2283, %v2150, 0.0
        %2636 = vadd.xlane.f32.xlu0 %v2635
        %v2637 = vpop.xlane.xlu0 %2636
        %v2638 = vsel %vm2283, %v2155, 0.0
        %2639 = vadd.xlane.f32.xlu0 %v2638
        %v2640 = vpop.xlane.xlu0 %2639
        %v2641 = vsel %vm2283, %v2160, 0.0
        %2642 = vadd.xlane.f32.xlu0 %v2641
        %v2643 = vpop.xlane.xlu0 %2642
        %v2644 = vsel %vm2283, %v2165, 0.0
        %2645 = vadd.xlane.f32.xlu0 %v2644
        %v2646 = vpop.xlane.xlu0 %2645
        %v2647 = vsel %vm2283, %v2170, 0.0
        %2648 = vadd.xlane.f32.xlu0 %v2647
        %v2649 = vpop.xlane.xlu0 %2648
        %v2650 = vsel %vm2283, %v2175, 0.0
        %2651 = vadd.xlane.f32.xlu0 %v2650
        %v2652 = vpop.xlane.xlu0 %2651
        %v2653 = vsel %vm2283, %v2180, 0.0
        %2654 = vadd.xlane.f32.xlu0 %v2653
        %v2655 = vpop.xlane.xlu0 %2654
        %v2656 = vsel %vm2283, %v2185, 0.0
        %2657 = vadd.xlane.f32.xlu0 %v2656
        %v2658 = vpop.xlane.xlu0 %2657
        %v2659 = vsel %vm2283, %v2190, 0.0
        %2660 = vadd.xlane.f32.xlu0 %v2659
        %v2661 = vpop.xlane.xlu0 %2660
        %v2662 = vsel %vm2283, %v2195, 0.0
        %2663 = vadd.xlane.f32.xlu0 %v2662
        %v2664 = vpop.xlane.xlu0 %2663
        %v2665 = vsel %vm2283, %v2200, 0.0
        %2666 = vadd.xlane.f32.xlu0 %v2665
        %v2667 = vpop.xlane.xlu0 %2666
        %v2668 = vsel %vm2283, %v2205, 0.0
        %2669 = vadd.xlane.f32.xlu0 %v2668
        %v2670 = vpop.xlane.xlu0 %2669
        %v2671 = vsel %vm2283, %v2210, 0.0
        %2672 = vadd.xlane.f32.xlu0 %v2671
        %v2673 = vpop.xlane.xlu0 %2672
        %v2674 = vsel %vm2283, %v2215, 0.0
        %2675 = vadd.xlane.f32.xlu0 %v2674
        %v2676 = vpop.xlane.xlu0 %2675
        %v2677 = vsel %vm2283, %v2220, 0.0
        %2678 = vadd.xlane.f32.xlu0 %v2677
        %v2679 = vpop.xlane.xlu0 %2678
        %v2680 = vsel %vm2283, %v2225, 0.0
        %2681 = vadd.xlane.f32.xlu0 %v2680
        %v2682 = vpop.xlane.xlu0 %2681
        %v2683 = vsel %vm2283, %v2230, 0.0
        %2684 = vadd.xlane.f32.xlu0 %v2683
        %v2685 = vpop.xlane.xlu0 %2684
        %v2686 = vsel %vm2283, %v2235, 0.0
        %2687 = vadd.xlane.f32.xlu0 %v2686
        %v2688 = vpop.xlane.xlu0 %2687
        %v2689 = vsel %vm2283, %v2240, 0.0
        %2690 = vadd.xlane.f32.xlu0 %v2689
        %v2691 = vpop.xlane.xlu0 %2690
        %v2692 = vsel %vm2283, %v2245, 0.0
        %2693 = vadd.xlane.f32.xlu0 %v2692
        %v2694 = vpop.xlane.xlu0 %2693
        %v2695 = vsel %vm2283, %v2250, 0.0
        %2696 = vadd.xlane.f32.xlu0 %v2695
        %v2697 = vpop.xlane.xlu0 %2696
        %v2698 = vsel %vm2283, %v2255, 0.0
        %2699 = vadd.xlane.f32.xlu0 %v2698
        %v2700 = vpop.xlane.xlu0 %2699
        %v2701 = vsel %vm2283, %v2260, 0.0
        %2702 = vadd.xlane.f32.xlu0 %v2701
        %v2703 = vpop.xlane.xlu0 %2702
        %v2704 = vsel %vm2283, %v2265, 0.0
        %2705 = vadd.xlane.f32.xlu0 %v2704
        %v2706 = vpop.xlane.xlu0 %2705
        %v2707 = vsel %vm2283, %v2270, 0.0
        %2708 = vadd.xlane.f32.xlu0 %v2707
        %v2709 = vpop.xlane.xlu0 %2708
        %v2710 = vsel %vm2283, %v2275, 0.0
        %2711 = vadd.xlane.f32.xlu0 %v2710
        %v2712 = vpop.xlane.xlu0 %2711
        %v2713 = vsel %vm2283, %v2280, 0.0
        %2714 = vadd.xlane.f32.xlu0 %v2713
        %v2715 = vpop.xlane.xlu0 %2714
        %v2716 = vrcp.pop 49.0
        %v2717 = vmul.f32 %v2286, %v2716
        %v2718 = vmul.f32 %v2289, %v2716
        %v2719 = vmul.f32 %v2292, %v2716
        %v2720 = vmul.f32 %v2295, %v2716
        %v2721 = vmul.f32 %v2298, %v2716
        %v2722 = vmul.f32 %v2301, %v2716
        %v2723 = vmul.f32 %v2304, %v2716
        %v2724 = vmul.f32 %v2307, %v2716
        %v2725 = vmul.f32 %v2310, %v2716
        %v2726 = vmul.f32 %v2313, %v2716
        %v2727 = vmul.f32 %v2316, %v2716
        %v2728 = vmul.f32 %v2319, %v2716
        %v2729 = vmul.f32 %v2322, %v2716
        %v2730 = vmul.f32 %v2325, %v2716
        %v2731 = vmul.f32 %v2328, %v2716
        %v2732 = vmul.f32 %v2331, %v2716
        %v2733 = vmul.f32 %v2334, %v2716
        %v2734 = vmul.f32 %v2337, %v2716
        %v2735 = vmul.f32 %v2340, %v2716
        %v2736 = vmul.f32 %v2343, %v2716
        %v2737 = vmul.f32 %v2346, %v2716
        %v2738 = vmul.f32 %v2349, %v2716
        %v2739 = vmul.f32 %v2352, %v2716
        %v2740 = vmul.f32 %v2355, %v2716
        %v2741 = vmul.f32 %v2358, %v2716
        %v2742 = vmul.f32 %v2361, %v2716
        %v2743 = vmul.f32 %v2364, %v2716
        %v2744 = vmul.f32 %v2367, %v2716
        %v2745 = vmul.f32 %v2370, %v2716
        %v2746 = vmul.f32 %v2373, %v2716
        %v2747 = vmul.f32 %v2376, %v2716
        %v2748 = vmul.f32 %v2379, %v2716
        %v2749 = vmul.f32 %v2382, %v2716
        %v2750 = vmul.f32 %v2385, %v2716
        %v2751 = vmul.f32 %v2388, %v2716
        %v2752 = vmul.f32 %v2391, %v2716
        %v2753 = vmul.f32 %v2394, %v2716
        %v2754 = vmul.f32 %v2397, %v2716
        %v2755 = vmul.f32 %v2400, %v2716
        %v2756 = vmul.f32 %v2403, %v2716
        %v2757 = vmul.f32 %v2406, %v2716
        %v2758 = vmul.f32 %v2409, %v2716
        %v2759 = vmul.f32 %v2412, %v2716
        %v2760 = vmul.f32 %v2415, %v2716
        %v2761 = vmul.f32 %v2418, %v2716
        %v2762 = vmul.f32 %v2421, %v2716
        %v2763 = vmul.f32 %v2424, %v2716
        %v2764 = vmul.f32 %v2427, %v2716
        %v2765 = vmul.f32 %v2430, %v2716
        %v2766 = vmul.f32 %v2433, %v2716
        %v2767 = vmul.f32 %v2436, %v2716
        %v2768 = vmul.f32 %v2439, %v2716
        %v2769 = vmul.f32 %v2442, %v2716
        %v2770 = vmul.f32 %v2445, %v2716
        %v2771 = vmul.f32 %v2448, %v2716
        %v2772 = vmul.f32 %v2451, %v2716
        %v2773 = vmul.f32 %v2454, %v2716
        %v2774 = vmul.f32 %v2457, %v2716
        %v2775 = vmul.f32 %v2460, %v2716
        %v2776 = vmul.f32 %v2463, %v2716
        %v2777 = vmul.f32 %v2466, %v2716
        %v2778 = vmul.f32 %v2469, %v2716
        %v2779 = vmul.f32 %v2472, %v2716
        %v2780 = vmul.f32 %v2475, %v2716
        %v2781 = vmul.f32 %v2478, %v2716
        %v2782 = vmul.f32 %v2481, %v2716
        %v2783 = vmul.f32 %v2484, %v2716
        %v2784 = vmul.f32 %v2487, %v2716
        %v2785 = vmul.f32 %v2490, %v2716
        %v2786 = vmul.f32 %v2493, %v2716
        %v2787 = vmul.f32 %v2496, %v2716
        %v2788 = vmul.f32 %v2499, %v2716
        %v2789 = vmul.f32 %v2502, %v2716
        %v2790 = vmul.f32 %v2505, %v2716
        %v2791 = vmul.f32 %v2508, %v2716
        %v2792 = vmul.f32 %v2511, %v2716
        %v2793 = vmul.f32 %v2514, %v2716
        %v2794 = vmul.f32 %v2517, %v2716
        %v2795 = vmul.f32 %v2520, %v2716
        %v2796 = vmul.f32 %v2523, %v2716
        %v2797 = vmul.f32 %v2526, %v2716
        %v2798 = vmul.f32 %v2529, %v2716
        %v2799 = vmul.f32 %v2532, %v2716
        %v2800 = vmul.f32 %v2535, %v2716
        %v2801 = vmul.f32 %v2538, %v2716
        %v2802 = vmul.f32 %v2541, %v2716
        %v2803 = vmul.f32 %v2544, %v2716
        %v2804 = vmul.f32 %v2547, %v2716
        %v2805 = vmul.f32 %v2550, %v2716
        %v2806 = vmul.f32 %v2553, %v2716
        %v2807 = vmul.f32 %v2556, %v2716
        %v2808 = vmul.f32 %v2559, %v2716
        %v2809 = vmul.f32 %v2562, %v2716
        %v2810 = vmul.f32 %v2565, %v2716
        %v2811 = vmul.f32 %v2568, %v2716
        %v2812 = vmul.f32 %v2571, %v2716
        %v2813 = vmul.f32 %v2574, %v2716
        %v2814 = vmul.f32 %v2577, %v2716
        %v2815 = vmul.f32 %v2580, %v2716
        %v2816 = vmul.f32 %v2583, %v2716
        %v2817 = vmul.f32 %v2586, %v2716
        %v2818 = vmul.f32 %v2589, %v2716
        %v2819 = vmul.f32 %v2592, %v2716
        %v2820 = vmul.f32 %v2595, %v2716
        %v2821 = vmul.f32 %v2598, %v2716
        %v2822 = vmul.f32 %v2601, %v2716
        %v2823 = vmul.f32 %v2604, %v2716
        %v2824 = vmul.f32 %v2607, %v2716
        %v2825 = vmul.f32 %v2610, %v2716
        %v2826 = vmul.f32 %v2613, %v2716
        %v2827 = vmul.f32 %v2616, %v2716
        %v2828 = vmul.f32 %v2619, %v2716
        %v2829 = vmul.f32 %v2622, %v2716
        %v2830 = vmul.f32 %v2625, %v2716
        %v2831 = vmul.f32 %v2628, %v2716
        %v2832 = vmul.f32 %v2631, %v2716
        %v2833 = vmul.f32 %v2634, %v2716
        %v2834 = vmul.f32 %v2637, %v2716
        %v2835 = vmul.f32 %v2640, %v2716
        %v2836 = vmul.f32 %v2643, %v2716
        %v2837 = vmul.f32 %v2646, %v2716
        %v2838 = vmul.f32 %v2649, %v2716
        %v2839 = vmul.f32 %v2652, %v2716
        %v2840 = vmul.f32 %v2655, %v2716
        %v2841 = vmul.f32 %v2658, %v2716
        %v2842 = vmul.f32 %v2661, %v2716
        %v2843 = vmul.f32 %v2664, %v2716
        %v2844 = vmul.f32 %v2667, %v2716
        %v2845 = vmul.f32 %v2670, %v2716
        %v2846 = vmul.f32 %v2673, %v2716
        %v2847 = vmul.f32 %v2676, %v2716
        %v2848 = vmul.f32 %v2679, %v2716
        %v2849 = vmul.f32 %v2682, %v2716
        %v2850 = vmul.f32 %v2685, %v2716
        %v2851 = vmul.f32 %v2688, %v2716
        %v2852 = vmul.f32 %v2691, %v2716
        %v2853 = vmul.f32 %v2694, %v2716
        %v2854 = vmul.f32 %v2697, %v2716
        %v2855 = vmul.f32 %v2700, %v2716
        %v2856 = vmul.f32 %v2703, %v2716
        %v2857 = vmul.f32 %v2706, %v2716
        %v2858 = vmul.f32 %v2709, %v2716
        %v2859 = vmul.f32 %v2712, %v2716
        %v2860 = vmul.f32 %v2715, %v2716
        %v2861 = vsub.f32 %v1565, %v2717
        %v2862 = vsub.f32 %v1570, %v2718
        %v2863 = vsub.f32 %v1575, %v2719
        %v2864 = vsub.f32 %v1580, %v2720
        %v2865 = vsub.f32 %v1585, %v2721
        %v2866 = vsub.f32 %v1590, %v2722
        %v2867 = vsub.f32 %v1595, %v2723
        %v2868 = vsub.f32 %v1600, %v2724
        %v2869 = vsub.f32 %v1605, %v2725
        %v2870 = vsub.f32 %v1610, %v2726
        %v2871 = vsub.f32 %v1615, %v2727
        %v2872 = vsub.f32 %v1620, %v2728
        %v2873 = vsub.f32 %v1625, %v2729
        %v2874 = vsub.f32 %v1630, %v2730
        %v2875 = vsub.f32 %v1635, %v2731
        %v2876 = vsub.f32 %v1640, %v2732
        %v2877 = vsub.f32 %v1645, %v2733
        %v2878 = vsub.f32 %v1650, %v2734
        %v2879 = vsub.f32 %v1655, %v2735
        %v2880 = vsub.f32 %v1660, %v2736
        %v2881 = vsub.f32 %v1665, %v2737
        %v2882 = vsub.f32 %v1670, %v2738
        %v2883 = vsub.f32 %v1675, %v2739
        %v2884 = vsub.f32 %v1680, %v2740
        %v2885 = vsub.f32 %v1685, %v2741
        %v2886 = vsub.f32 %v1690, %v2742
        %v2887 = vsub.f32 %v1695, %v2743
        %v2888 = vsub.f32 %v1700, %v2744
        %v2889 = vsub.f32 %v1705, %v2745
        %v2890 = vsub.f32 %v1710, %v2746
        %v2891 = vsub.f32 %v1715, %v2747
        %v2892 = vsub.f32 %v1720, %v2748
        %v2893 = vsub.f32 %v1725, %v2749
        %v2894 = vsub.f32 %v1730, %v2750
        %v2895 = vsub.f32 %v1735, %v2751
        %v2896 = vsub.f32 %v1740, %v2752
        %v2897 = vsub.f32 %v1745, %v2753
        %v2898 = vsub.f32 %v1750, %v2754
        %v2899 = vsub.f32 %v1755, %v2755
        %v2900 = vsub.f32 %v1760, %v2756
        %v2901 = vsub.f32 %v1765, %v2757
        %v2902 = vsub.f32 %v1770, %v2758
        %v2903 = vsub.f32 %v1775, %v2759
        %v2904 = vsub.f32 %v1780, %v2760
        %v2905 = vsub.f32 %v1785, %v2761
        %v2906 = vsub.f32 %v1790, %v2762
        %v2907 = vsub.f32 %v1795, %v2763
        %v2908 = vsub.f32 %v1800, %v2764
        %v2909 = vsub.f32 %v1805, %v2765
        %v2910 = vsub.f32 %v1810, %v2766
        %v2911 = vsub.f32 %v1815, %v2767
        %v2912 = vsub.f32 %v1820, %v2768
        %v2913 = vsub.f32 %v1825, %v2769
        %v2914 = vsub.f32 %v1830, %v2770
        %v2915 = vsub.f32 %v1835, %v2771
        %v2916 = vsub.f32 %v1840, %v2772
        %v2917 = vsub.f32 %v1845, %v2773
        %v2918 = vsub.f32 %v1850, %v2774
        %v2919 = vsub.f32 %v1855, %v2775
        %v2920 = vsub.f32 %v1860, %v2776
        %v2921 = vsub.f32 %v1865, %v2777
        %v2922 = vsub.f32 %v1870, %v2778
        %v2923 = vsub.f32 %v1875, %v2779
        %v2924 = vsub.f32 %v1880, %v2780
        %v2925 = vsub.f32 %v1885, %v2781
        %v2926 = vsub.f32 %v1890, %v2782
        %v2927 = vsub.f32 %v1895, %v2783
        %v2928 = vsub.f32 %v1900, %v2784
        %v2929 = vsub.f32 %v1905, %v2785
        %v2930 = vsub.f32 %v1910, %v2786
        %v2931 = vsub.f32 %v1915, %v2787
        %v2932 = vsub.f32 %v1920, %v2788
        %v2933 = vsub.f32 %v1925, %v2789
        %v2934 = vsub.f32 %v1930, %v2790
        %v2935 = vsub.f32 %v1935, %v2791
        %v2936 = vsub.f32 %v1940, %v2792
        %v2937 = vsub.f32 %v1945, %v2793
        %v2938 = vsub.f32 %v1950, %v2794
        %v2939 = vsub.f32 %v1955, %v2795
        %v2940 = vsub.f32 %v1960, %v2796
        %v2941 = vsub.f32 %v1965, %v2797
        %v2942 = vsub.f32 %v1970, %v2798
        %v2943 = vsub.f32 %v1975, %v2799
        %v2944 = vsub.f32 %v1980, %v2800
        %v2945 = vsub.f32 %v1985, %v2801
        %v2946 = vsub.f32 %v1990, %v2802
        %v2947 = vsub.f32 %v1995, %v2803
        %v2948 = vsub.f32 %v2000, %v2804
        %v2949 = vsub.f32 %v2005, %v2805
        %v2950 = vsub.f32 %v2010, %v2806
        %v2951 = vsub.f32 %v2015, %v2807
        %v2952 = vsub.f32 %v2020, %v2808
        %v2953 = vsub.f32 %v2025, %v2809
        %v2954 = vsub.f32 %v2030, %v2810
        %v2955 = vsub.f32 %v2035, %v2811
        %v2956 = vsub.f32 %v2040, %v2812
        %v2957 = vsub.f32 %v2045, %v2813
        %v2958 = vsub.f32 %v2050, %v2814
        %v2959 = vsub.f32 %v2055, %v2815
        %v2960 = vsub.f32 %v2060, %v2816
        %v2961 = vsub.f32 %v2065, %v2817
        %v2962 = vsub.f32 %v2070, %v2818
        %v2963 = vsub.f32 %v2075, %v2819
        %v2964 = vsub.f32 %v2080, %v2820
        %v2965 = vsub.f32 %v2085, %v2821
        %v2966 = vsub.f32 %v2090, %v2822
        %v2967 = vsub.f32 %v2095, %v2823
        %v2968 = vsub.f32 %v2100, %v2824
        %v2969 = vsub.f32 %v2105, %v2825
        %v2970 = vsub.f32 %v2110, %v2826
        %v2971 = vsub.f32 %v2115, %v2827
        %v2972 = vsub.f32 %v2120, %v2828
        %v2973 = vsub.f32 %v2125, %v2829
        %v2974 = vsub.f32 %v2130, %v2830
        %v2975 = vsub.f32 %v2135, %v2831
        %v2976 = vsub.f32 %v2140, %v2832
        %v2977 = vsub.f32 %v2145, %v2833
        %v2978 = vsub.f32 %v2150, %v2834
        %v2979 = vsub.f32 %v2155, %v2835
        %v2980 = vsub.f32 %v2160, %v2836
        %v2981 = vsub.f32 %v2165, %v2837
        %v2982 = vsub.f32 %v2170, %v2838
        %v2983 = vsub.f32 %v2175, %v2839
        %v2984 = vsub.f32 %v2180, %v2840
        %v2985 = vsub.f32 %v2185, %v2841
        %v2986 = vsub.f32 %v2190, %v2842
        %v2987 = vsub.f32 %v2195, %v2843
        %v2988 = vsub.f32 %v2200, %v2844
        %v2989 = vsub.f32 %v2205, %v2845
        %v2990 = vsub.f32 %v2210, %v2846
        %v2991 = vsub.f32 %v2215, %v2847
        %v2992 = vsub.f32 %v2220, %v2848
        %v2993 = vsub.f32 %v2225, %v2849
        %v2994 = vsub.f32 %v2230, %v2850
        %v2995 = vsub.f32 %v2235, %v2851
        %v2996 = vsub.f32 %v2240, %v2852
        %v2997 = vsub.f32 %v2245, %v2853
        %v2998 = vsub.f32 %v2250, %v2854
        %v2999 = vsub.f32 %v2255, %v2855
        %v3000 = vsub.f32 %v2260, %v2856
        %v3001 = vsub.f32 %v2265, %v2857
        %v3002 = vsub.f32 %v2270, %v2858
        %v3003 = vsub.f32 %v2275, %v2859
        %v3004 = vsub.f32 %v2280, %v2860
        %v3005 = vmul.f32 %v2861, %v2861
        %v3006 = vmul.f32 %v2862, %v2862
        %v3007 = vmul.f32 %v2863, %v2863
        %v3008 = vmul.f32 %v2864, %v2864
        %v3009 = vmul.f32 %v2865, %v2865
        %v3010 = vmul.f32 %v2866, %v2866
        %v3011 = vmul.f32 %v2867, %v2867
        %v3012 = vmul.f32 %v2868, %v2868
        %v3013 = vmul.f32 %v2869, %v2869
        %v3014 = vmul.f32 %v2870, %v2870
        %v3015 = vmul.f32 %v2871, %v2871
        %v3016 = vmul.f32 %v2872, %v2872
        %v3017 = vmul.f32 %v2873, %v2873
        %v3018 = vmul.f32 %v2874, %v2874
        %v3019 = vmul.f32 %v2875, %v2875
        %v3020 = vmul.f32 %v2876, %v2876
        %v3021 = vmul.f32 %v2877, %v2877
        %v3022 = vmul.f32 %v2878, %v2878
        %v3023 = vmul.f32 %v2879, %v2879
        %v3024 = vmul.f32 %v2880, %v2880
        %v3025 = vmul.f32 %v2881, %v2881
        %v3026 = vmul.f32 %v2882, %v2882
        %v3027 = vmul.f32 %v2883, %v2883
        %v3028 = vmul.f32 %v2884, %v2884
        %v3029 = vmul.f32 %v2885, %v2885
        %v3030 = vmul.f32 %v2886, %v2886
        %v3031 = vmul.f32 %v2887, %v2887
        %v3032 = vmul.f32 %v2888, %v2888
        %v3033 = vmul.f32 %v2889, %v2889
        %v3034 = vmul.f32 %v2890, %v2890
        %v3035 = vmul.f32 %v2891, %v2891
        %v3036 = vmul.f32 %v2892, %v2892
        %v3037 = vmul.f32 %v2893, %v2893
        %v3038 = vmul.f32 %v2894, %v2894
        %v3039 = vmul.f32 %v2895, %v2895
        %v3040 = vmul.f32 %v2896, %v2896
        %v3041 = vmul.f32 %v2897, %v2897
        %v3042 = vmul.f32 %v2898, %v2898
        %v3043 = vmul.f32 %v2899, %v2899
        %v3044 = vmul.f32 %v2900, %v2900
        %v3045 = vmul.f32 %v2901, %v2901
        %v3046 = vmul.f32 %v2902, %v2902
        %v3047 = vmul.f32 %v2903, %v2903
        %v3048 = vmul.f32 %v2904, %v2904
        %v3049 = vmul.f32 %v2905, %v2905
        %v3050 = vmul.f32 %v2906, %v2906
        %v3051 = vmul.f32 %v2907, %v2907
        %v3052 = vmul.f32 %v2908, %v2908
        %v3053 = vmul.f32 %v2909, %v2909
        %v3054 = vmul.f32 %v2910, %v2910
        %v3055 = vmul.f32 %v2911, %v2911
        %v3056 = vmul.f32 %v2912, %v2912
        %v3057 = vmul.f32 %v2913, %v2913
        %v3058 = vmul.f32 %v2914, %v2914
        %v3059 = vmul.f32 %v2915, %v2915
        %v3060 = vmul.f32 %v2916, %v2916
        %v3061 = vmul.f32 %v2917, %v2917
        %v3062 = vmul.f32 %v2918, %v2918
        %v3063 = vmul.f32 %v2919, %v2919
        %v3064 = vmul.f32 %v2920, %v2920
        %v3065 = vmul.f32 %v2921, %v2921
        %v3066 = vmul.f32 %v2922, %v2922
        %v3067 = vmul.f32 %v2923, %v2923
        %v3068 = vmul.f32 %v2924, %v2924
        %v3069 = vmul.f32 %v2925, %v2925
        %v3070 = vmul.f32 %v2926, %v2926
        %v3071 = vmul.f32 %v2927, %v2927
        %v3072 = vmul.f32 %v2928, %v2928
        %v3073 = vmul.f32 %v2929, %v2929
        %v3074 = vmul.f32 %v2930, %v2930
        %v3075 = vmul.f32 %v2931, %v2931
        %v3076 = vmul.f32 %v2932, %v2932
        %v3077 = vmul.f32 %v2933, %v2933
        %v3078 = vmul.f32 %v2934, %v2934
        %v3079 = vmul.f32 %v2935, %v2935
        %v3080 = vmul.f32 %v2936, %v2936
        %v3081 = vmul.f32 %v2937, %v2937
        %v3082 = vmul.f32 %v2938, %v2938
        %v3083 = vmul.f32 %v2939, %v2939
        %v3084 = vmul.f32 %v2940, %v2940
        %v3085 = vmul.f32 %v2941, %v2941
        %v3086 = vmul.f32 %v2942, %v2942
        %v3087 = vmul.f32 %v2943, %v2943
        %v3088 = vmul.f32 %v2944, %v2944
        %v3089 = vmul.f32 %v2945, %v2945
        %v3090 = vmul.f32 %v2946, %v2946
        %v3091 = vmul.f32 %v2947, %v2947
        %v3092 = vmul.f32 %v2948, %v2948
        %v3093 = vmul.f32 %v2949, %v2949
        %v3094 = vmul.f32 %v2950, %v2950
        %v3095 = vmul.f32 %v2951, %v2951
        %v3096 = vmul.f32 %v2952, %v2952
        %v3097 = vmul.f32 %v2953, %v2953
        %v3098 = vmul.f32 %v2954, %v2954
        %v3099 = vmul.f32 %v2955, %v2955
        %v3100 = vmul.f32 %v2956, %v2956
        %v3101 = vmul.f32 %v2957, %v2957
        %v3102 = vmul.f32 %v2958, %v2958
        %v3103 = vmul.f32 %v2959, %v2959
        %v3104 = vmul.f32 %v2960, %v2960
        %v3105 = vmul.f32 %v2961, %v2961
        %v3106 = vmul.f32 %v2962, %v2962
        %v3107 = vmul.f32 %v2963, %v2963
        %v3108 = vmul.f32 %v2964, %v2964
        %v3109 = vmul.f32 %v2965, %v2965
        %v3110 = vmul.f32 %v2966, %v2966
        %v3111 = vmul.f32 %v2967, %v2967
        %v3112 = vmul.f32 %v2968, %v2968
        %v3113 = vmul.f32 %v2969, %v2969
        %v3114 = vmul.f32 %v2970, %v2970
        %v3115 = vmul.f32 %v2971, %v2971
        %v3116 = vmul.f32 %v2972, %v2972
        %v3117 = vmul.f32 %v2973, %v2973
        %v3118 = vmul.f32 %v2974, %v2974
        %v3119 = vmul.f32 %v2975, %v2975
        %v3120 = vmul.f32 %v2976, %v2976
        %v3121 = vmul.f32 %v2977, %v2977
        %v3122 = vmul.f32 %v2978, %v2978
        %v3123 = vmul.f32 %v2979, %v2979
        %v3124 = vmul.f32 %v2980, %v2980
        %v3125 = vmul.f32 %v2981, %v2981
        %v3126 = vmul.f32 %v2982, %v2982
        %v3127 = vmul.f32 %v2983, %v2983
        %v3128 = vmul.f32 %v2984, %v2984
        %v3129 = vmul.f32 %v2985, %v2985
        %v3130 = vmul.f32 %v2986, %v2986
        %v3131 = vmul.f32 %v2987, %v2987
        %v3132 = vmul.f32 %v2988, %v2988
        %v3133 = vmul.f32 %v2989, %v2989
        %v3134 = vmul.f32 %v2990, %v2990
        %v3135 = vmul.f32 %v2991, %v2991
        %v3136 = vmul.f32 %v2992, %v2992
        %v3137 = vmul.f32 %v2993, %v2993
        %v3138 = vmul.f32 %v2994, %v2994
        %v3139 = vmul.f32 %v2995, %v2995
        %v3140 = vmul.f32 %v2996, %v2996
        %v3141 = vmul.f32 %v2997, %v2997
        %v3142 = vmul.f32 %v2998, %v2998
        %v3143 = vmul.f32 %v2999, %v2999
        %v3144 = vmul.f32 %v3000, %v3000
        %v3145 = vmul.f32 %v3001, %v3001
        %v3146 = vmul.f32 %v3002, %v3002
        %v3147 = vmul.f32 %v3003, %v3003
        %v3148 = vmul.f32 %v3004, %v3004
        %v3149 = vsel %vm2283, %v3005, 0.0
        %3150 = vadd.xlane.f32.xlu0 %v3149
        %v3151 = vpop.xlane.xlu0 %3150
        %v3152 = vsel %vm2283, %v3006, 0.0
        %3153 = vadd.xlane.f32.xlu0 %v3152
        %v3154 = vpop.xlane.xlu0 %3153
        %v3155 = vsel %vm2283, %v3007, 0.0
        %3156 = vadd.xlane.f32.xlu0 %v3155
        %v3157 = vpop.xlane.xlu0 %3156
        %v3158 = vsel %vm2283, %v3008, 0.0
        %3159 = vadd.xlane.f32.xlu0 %v3158
        %v3160 = vpop.xlane.xlu0 %3159
        %v3161 = vsel %vm2283, %v3009, 0.0
        %3162 = vadd.xlane.f32.xlu0 %v3161
        %v3163 = vpop.xlane.xlu0 %3162
        %v3164 = vsel %vm2283, %v3010, 0.0
        %3165 = vadd.xlane.f32.xlu0 %v3164
        %v3166 = vpop.xlane.xlu0 %3165
        %v3167 = vsel %vm2283, %v3011, 0.0
        %3168 = vadd.xlane.f32.xlu0 %v3167
        %v3169 = vpop.xlane.xlu0 %3168
        %v3170 = vsel %vm2283, %v3012, 0.0
        %3171 = vadd.xlane.f32.xlu0 %v3170
        %v3172 = vpop.xlane.xlu0 %3171
        %v3173 = vsel %vm2283, %v3013, 0.0
        %3174 = vadd.xlane.f32.xlu0 %v3173
        %v3175 = vpop.xlane.xlu0 %3174
        %v3176 = vsel %vm2283, %v3014, 0.0
        %3177 = vadd.xlane.f32.xlu0 %v3176
        %v3178 = vpop.xlane.xlu0 %3177
        %v3179 = vsel %vm2283, %v3015, 0.0
        %3180 = vadd.xlane.f32.xlu0 %v3179
        %v3181 = vpop.xlane.xlu0 %3180
        %v3182 = vsel %vm2283, %v3016, 0.0
        %3183 = vadd.xlane.f32.xlu0 %v3182
        %v3184 = vpop.xlane.xlu0 %3183
        %v3185 = vsel %vm2283, %v3017, 0.0
        %3186 = vadd.xlane.f32.xlu0 %v3185
        %v3187 = vpop.xlane.xlu0 %3186
        %v3188 = vsel %vm2283, %v3018, 0.0
        %3189 = vadd.xlane.f32.xlu0 %v3188
        %v3190 = vpop.xlane.xlu0 %3189
        %v3191 = vsel %vm2283, %v3019, 0.0
        %3192 = vadd.xlane.f32.xlu0 %v3191
        %v3193 = vpop.xlane.xlu0 %3192
        %v3194 = vsel %vm2283, %v3020, 0.0
        %3195 = vadd.xlane.f32.xlu0 %v3194
        %v3196 = vpop.xlane.xlu0 %3195
        %v3197 = vsel %vm2283, %v3021, 0.0
        %3198 = vadd.xlane.f32.xlu0 %v3197
        %v3199 = vpop.xlane.xlu0 %3198
        %v3200 = vsel %vm2283, %v3022, 0.0
        %3201 = vadd.xlane.f32.xlu0 %v3200
        %v3202 = vpop.xlane.xlu0 %3201
        %v3203 = vsel %vm2283, %v3023, 0.0
        %3204 = vadd.xlane.f32.xlu0 %v3203
        %v3205 = vpop.xlane.xlu0 %3204
        %v3206 = vsel %vm2283, %v3024, 0.0
        %3207 = vadd.xlane.f32.xlu0 %v3206
        %v3208 = vpop.xlane.xlu0 %3207
        %v3209 = vsel %vm2283, %v3025, 0.0
        %3210 = vadd.xlane.f32.xlu0 %v3209
        %v3211 = vpop.xlane.xlu0 %3210
        %v3212 = vsel %vm2283, %v3026, 0.0
        %3213 = vadd.xlane.f32.xlu0 %v3212
        %v3214 = vpop.xlane.xlu0 %3213
        %v3215 = vsel %vm2283, %v3027, 0.0
        %3216 = vadd.xlane.f32.xlu0 %v3215
        %v3217 = vpop.xlane.xlu0 %3216
        %v3218 = vsel %vm2283, %v3028, 0.0
        %3219 = vadd.xlane.f32.xlu0 %v3218
        %v3220 = vpop.xlane.xlu0 %3219
        %v3221 = vsel %vm2283, %v3029, 0.0
        %3222 = vadd.xlane.f32.xlu0 %v3221
        %v3223 = vpop.xlane.xlu0 %3222
        %v3224 = vsel %vm2283, %v3030, 0.0
        %3225 = vadd.xlane.f32.xlu0 %v3224
        %v3226 = vpop.xlane.xlu0 %3225
        %v3227 = vsel %vm2283, %v3031, 0.0
        %3228 = vadd.xlane.f32.xlu0 %v3227
        %v3229 = vpop.xlane.xlu0 %3228
        %v3230 = vsel %vm2283, %v3032, 0.0
        %3231 = vadd.xlane.f32.xlu0 %v3230
        %v3232 = vpop.xlane.xlu0 %3231
        %v3233 = vsel %vm2283, %v3033, 0.0
        %3234 = vadd.xlane.f32.xlu0 %v3233
        %v3235 = vpop.xlane.xlu0 %3234
        %v3236 = vsel %vm2283, %v3034, 0.0
        %3237 = vadd.xlane.f32.xlu0 %v3236
        %v3238 = vpop.xlane.xlu0 %3237
        %v3239 = vsel %vm2283, %v3035, 0.0
        %3240 = vadd.xlane.f32.xlu0 %v3239
        %v3241 = vpop.xlane.xlu0 %3240
        %v3242 = vsel %vm2283, %v3036, 0.0
        %3243 = vadd.xlane.f32.xlu0 %v3242
        %v3244 = vpop.xlane.xlu0 %3243
        %v3245 = vsel %vm2283, %v3037, 0.0
        %3246 = vadd.xlane.f32.xlu0 %v3245
        %v3247 = vpop.xlane.xlu0 %3246
        %v3248 = vsel %vm2283, %v3038, 0.0
        %3249 = vadd.xlane.f32.xlu0 %v3248
        %v3250 = vpop.xlane.xlu0 %3249
        %v3251 = vsel %vm2283, %v3039, 0.0
        %3252 = vadd.xlane.f32.xlu0 %v3251
        %v3253 = vpop.xlane.xlu0 %3252
        %v3254 = vsel %vm2283, %v3040, 0.0
        %3255 = vadd.xlane.f32.xlu0 %v3254
        %v3256 = vpop.xlane.xlu0 %3255
        %v3257 = vsel %vm2283, %v3041, 0.0
        %3258 = vadd.xlane.f32.xlu0 %v3257
        %v3259 = vpop.xlane.xlu0 %3258
        %v3260 = vsel %vm2283, %v3042, 0.0
        %3261 = vadd.xlane.f32.xlu0 %v3260
        %v3262 = vpop.xlane.xlu0 %3261
        %v3263 = vsel %vm2283, %v3043, 0.0
        %3264 = vadd.xlane.f32.xlu0 %v3263
        %v3265 = vpop.xlane.xlu0 %3264
        %v3266 = vsel %vm2283, %v3044, 0.0
        %3267 = vadd.xlane.f32.xlu0 %v3266
        %v3268 = vpop.xlane.xlu0 %3267
        %v3269 = vsel %vm2283, %v3045, 0.0
        %3270 = vadd.xlane.f32.xlu0 %v3269
        %v3271 = vpop.xlane.xlu0 %3270
        %v3272 = vsel %vm2283, %v3046, 0.0
        %3273 = vadd.xlane.f32.xlu0 %v3272
        %v3274 = vpop.xlane.xlu0 %3273
        %v3275 = vsel %vm2283, %v3047, 0.0
        %3276 = vadd.xlane.f32.xlu0 %v3275
        %v3277 = vpop.xlane.xlu0 %3276
        %v3278 = vsel %vm2283, %v3048, 0.0
        %3279 = vadd.xlane.f32.xlu0 %v3278
        %v3280 = vpop.xlane.xlu0 %3279
        %v3281 = vsel %vm2283, %v3049, 0.0
        %3282 = vadd.xlane.f32.xlu0 %v3281
        %v3283 = vpop.xlane.xlu0 %3282
        %v3284 = vsel %vm2283, %v3050, 0.0
        %3285 = vadd.xlane.f32.xlu0 %v3284
        %v3286 = vpop.xlane.xlu0 %3285
        %v3287 = vsel %vm2283, %v3051, 0.0
        %3288 = vadd.xlane.f32.xlu0 %v3287
        %v3289 = vpop.xlane.xlu0 %3288
        %v3290 = vsel %vm2283, %v3052, 0.0
        %3291 = vadd.xlane.f32.xlu0 %v3290
        %v3292 = vpop.xlane.xlu0 %3291
        %v3293 = vsel %vm2283, %v3053, 0.0
        %3294 = vadd.xlane.f32.xlu0 %v3293
        %v3295 = vpop.xlane.xlu0 %3294
        %v3296 = vsel %vm2283, %v3054, 0.0
        %3297 = vadd.xlane.f32.xlu0 %v3296
        %v3298 = vpop.xlane.xlu0 %3297
        %v3299 = vsel %vm2283, %v3055, 0.0
        %3300 = vadd.xlane.f32.xlu0 %v3299
        %v3301 = vpop.xlane.xlu0 %3300
        %v3302 = vsel %vm2283, %v3056, 0.0
        %3303 = vadd.xlane.f32.xlu0 %v3302
        %v3304 = vpop.xlane.xlu0 %3303
        %v3305 = vsel %vm2283, %v3057, 0.0
        %3306 = vadd.xlane.f32.xlu0 %v3305
        %v3307 = vpop.xlane.xlu0 %3306
        %v3308 = vsel %vm2283, %v3058, 0.0
        %3309 = vadd.xlane.f32.xlu0 %v3308
        %v3310 = vpop.xlane.xlu0 %3309
        %v3311 = vsel %vm2283, %v3059, 0.0
        %3312 = vadd.xlane.f32.xlu0 %v3311
        %v3313 = vpop.xlane.xlu0 %3312
        %v3314 = vsel %vm2283, %v3060, 0.0
        %3315 = vadd.xlane.f32.xlu0 %v3314
        %v3316 = vpop.xlane.xlu0 %3315
        %v3317 = vsel %vm2283, %v3061, 0.0
        %3318 = vadd.xlane.f32.xlu0 %v3317
        %v3319 = vpop.xlane.xlu0 %3318
        %v3320 = vsel %vm2283, %v3062, 0.0
        %3321 = vadd.xlane.f32.xlu0 %v3320
        %v3322 = vpop.xlane.xlu0 %3321
        %v3323 = vsel %vm2283, %v3063, 0.0
        %3324 = vadd.xlane.f32.xlu0 %v3323
        %v3325 = vpop.xlane.xlu0 %3324
        %v3326 = vsel %vm2283, %v3064, 0.0
        %3327 = vadd.xlane.f32.xlu0 %v3326
        %v3328 = vpop.xlane.xlu0 %3327
        %v3329 = vsel %vm2283, %v3065, 0.0
        %3330 = vadd.xlane.f32.xlu0 %v3329
        %v3331 = vpop.xlane.xlu0 %3330
        %v3332 = vsel %vm2283, %v3066, 0.0
        %3333 = vadd.xlane.f32.xlu0 %v3332
        %v3334 = vpop.xlane.xlu0 %3333
        %v3335 = vsel %vm2283, %v3067, 0.0
        %3336 = vadd.xlane.f32.xlu0 %v3335
        %v3337 = vpop.xlane.xlu0 %3336
        %v3338 = vsel %vm2283, %v3068, 0.0
        %3339 = vadd.xlane.f32.xlu0 %v3338
        %v3340 = vpop.xlane.xlu0 %3339
        %v3341 = vsel %vm2283, %v3069, 0.0
        %3342 = vadd.xlane.f32.xlu0 %v3341
        %v3343 = vpop.xlane.xlu0 %3342
        %v3344 = vsel %vm2283, %v3070, 0.0
        %3345 = vadd.xlane.f32.xlu0 %v3344
        %v3346 = vpop.xlane.xlu0 %3345
        %v3347 = vsel %vm2283, %v3071, 0.0
        %3348 = vadd.xlane.f32.xlu0 %v3347
        %v3349 = vpop.xlane.xlu0 %3348
        %v3350 = vsel %vm2283, %v3072, 0.0
        %3351 = vadd.xlane.f32.xlu0 %v3350
        %v3352 = vpop.xlane.xlu0 %3351
        %v3353 = vsel %vm2283, %v3073, 0.0
        %3354 = vadd.xlane.f32.xlu0 %v3353
        %v3355 = vpop.xlane.xlu0 %3354
        %v3356 = vsel %vm2283, %v3074, 0.0
        %3357 = vadd.xlane.f32.xlu0 %v3356
        %v3358 = vpop.xlane.xlu0 %3357
        %v3359 = vsel %vm2283, %v3075, 0.0
        %3360 = vadd.xlane.f32.xlu0 %v3359
        %v3361 = vpop.xlane.xlu0 %3360
        %v3362 = vsel %vm2283, %v3076, 0.0
        %3363 = vadd.xlane.f32.xlu0 %v3362
        %v3364 = vpop.xlane.xlu0 %3363
        %v3365 = vsel %vm2283, %v3077, 0.0
        %3366 = vadd.xlane.f32.xlu0 %v3365
        %v3367 = vpop.xlane.xlu0 %3366
        %v3368 = vsel %vm2283, %v3078, 0.0
        %3369 = vadd.xlane.f32.xlu0 %v3368
        %v3370 = vpop.xlane.xlu0 %3369
        %v3371 = vsel %vm2283, %v3079, 0.0
        %3372 = vadd.xlane.f32.xlu0 %v3371
        %v3373 = vpop.xlane.xlu0 %3372
        %v3374 = vsel %vm2283, %v3080, 0.0
        %3375 = vadd.xlane.f32.xlu0 %v3374
        %v3376 = vpop.xlane.xlu0 %3375
        %v3377 = vsel %vm2283, %v3081, 0.0
        %3378 = vadd.xlane.f32.xlu0 %v3377
        %v3379 = vpop.xlane.xlu0 %3378
        %v3380 = vsel %vm2283, %v3082, 0.0
        %3381 = vadd.xlane.f32.xlu0 %v3380
        %v3382 = vpop.xlane.xlu0 %3381
        %v3383 = vsel %vm2283, %v3083, 0.0
        %3384 = vadd.xlane.f32.xlu0 %v3383
        %v3385 = vpop.xlane.xlu0 %3384
        %v3386 = vsel %vm2283, %v3084, 0.0
        %3387 = vadd.xlane.f32.xlu0 %v3386
        %v3388 = vpop.xlane.xlu0 %3387
        %v3389 = vsel %vm2283, %v3085, 0.0
        %3390 = vadd.xlane.f32.xlu0 %v3389
        %v3391 = vpop.xlane.xlu0 %3390
        %v3392 = vsel %vm2283, %v3086, 0.0
        %3393 = vadd.xlane.f32.xlu0 %v3392
        %v3394 = vpop.xlane.xlu0 %3393
        %v3395 = vsel %vm2283, %v3087, 0.0
        %3396 = vadd.xlane.f32.xlu0 %v3395
        %v3397 = vpop.xlane.xlu0 %3396
        %v3398 = vsel %vm2283, %v3088, 0.0
        %3399 = vadd.xlane.f32.xlu0 %v3398
        %v3400 = vpop.xlane.xlu0 %3399
        %v3401 = vsel %vm2283, %v3089, 0.0
        %3402 = vadd.xlane.f32.xlu0 %v3401
        %v3403 = vpop.xlane.xlu0 %3402
        %v3404 = vsel %vm2283, %v3090, 0.0
        %3405 = vadd.xlane.f32.xlu0 %v3404
        %v3406 = vpop.xlane.xlu0 %3405
        %v3407 = vsel %vm2283, %v3091, 0.0
        %3408 = vadd.xlane.f32.xlu0 %v3407
        %v3409 = vpop.xlane.xlu0 %3408
        %v3410 = vsel %vm2283, %v3092, 0.0
        %3411 = vadd.xlane.f32.xlu0 %v3410
        %v3412 = vpop.xlane.xlu0 %3411
        %v3413 = vsel %vm2283, %v3093, 0.0
        %3414 = vadd.xlane.f32.xlu0 %v3413
        %v3415 = vpop.xlane.xlu0 %3414
        %v3416 = vsel %vm2283, %v3094, 0.0
        %3417 = vadd.xlane.f32.xlu0 %v3416
        %v3418 = vpop.xlane.xlu0 %3417
        %v3419 = vsel %vm2283, %v3095, 0.0
        %3420 = vadd.xlane.f32.xlu0 %v3419
        %v3421 = vpop.xlane.xlu0 %3420
        %v3422 = vsel %vm2283, %v3096, 0.0
        %3423 = vadd.xlane.f32.xlu0 %v3422
        %v3424 = vpop.xlane.xlu0 %3423
        %v3425 = vsel %vm2283, %v3097, 0.0
        %3426 = vadd.xlane.f32.xlu0 %v3425
        %v3427 = vpop.xlane.xlu0 %3426
        %v3428 = vsel %vm2283, %v3098, 0.0
        %3429 = vadd.xlane.f32.xlu0 %v3428
        %v3430 = vpop.xlane.xlu0 %3429
        %v3431 = vsel %vm2283, %v3099, 0.0
        %3432 = vadd.xlane.f32.xlu0 %v3431
        %v3433 = vpop.xlane.xlu0 %3432
        %v3434 = vsel %vm2283, %v3100, 0.0
        %3435 = vadd.xlane.f32.xlu0 %v3434
        %v3436 = vpop.xlane.xlu0 %3435
        %v3437 = vsel %vm2283, %v3101, 0.0
        %3438 = vadd.xlane.f32.xlu0 %v3437
        %v3439 = vpop.xlane.xlu0 %3438
        %v3440 = vsel %vm2283, %v3102, 0.0
        %3441 = vadd.xlane.f32.xlu0 %v3440
        %v3442 = vpop.xlane.xlu0 %3441
        %v3443 = vsel %vm2283, %v3103, 0.0
        %3444 = vadd.xlane.f32.xlu0 %v3443
        %v3445 = vpop.xlane.xlu0 %3444
        %v3446 = vsel %vm2283, %v3104, 0.0
        %3447 = vadd.xlane.f32.xlu0 %v3446
        %v3448 = vpop.xlane.xlu0 %3447
        %v3449 = vsel %vm2283, %v3105, 0.0
        %3450 = vadd.xlane.f32.xlu0 %v3449
        %v3451 = vpop.xlane.xlu0 %3450
        %v3452 = vsel %vm2283, %v3106, 0.0
        %3453 = vadd.xlane.f32.xlu0 %v3452
        %v3454 = vpop.xlane.xlu0 %3453
        %v3455 = vsel %vm2283, %v3107, 0.0
        %3456 = vadd.xlane.f32.xlu0 %v3455
        %v3457 = vpop.xlane.xlu0 %3456
        %v3458 = vsel %vm2283, %v3108, 0.0
        %3459 = vadd.xlane.f32.xlu0 %v3458
        %v3460 = vpop.xlane.xlu0 %3459
        %v3461 = vsel %vm2283, %v3109, 0.0
        %3462 = vadd.xlane.f32.xlu0 %v3461
        %v3463 = vpop.xlane.xlu0 %3462
        %v3464 = vsel %vm2283, %v3110, 0.0
        %3465 = vadd.xlane.f32.xlu0 %v3464
        %v3466 = vpop.xlane.xlu0 %3465
        %v3467 = vsel %vm2283, %v3111, 0.0
        %3468 = vadd.xlane.f32.xlu0 %v3467
        %v3469 = vpop.xlane.xlu0 %3468
        %v3470 = vsel %vm2283, %v3112, 0.0
        %3471 = vadd.xlane.f32.xlu0 %v3470
        %v3472 = vpop.xlane.xlu0 %3471
        %v3473 = vsel %vm2283, %v3113, 0.0
        %3474 = vadd.xlane.f32.xlu0 %v3473
        %v3475 = vpop.xlane.xlu0 %3474
        %v3476 = vsel %vm2283, %v3114, 0.0
        %3477 = vadd.xlane.f32.xlu0 %v3476
        %v3478 = vpop.xlane.xlu0 %3477
        %v3479 = vsel %vm2283, %v3115, 0.0
        %3480 = vadd.xlane.f32.xlu0 %v3479
        %v3481 = vpop.xlane.xlu0 %3480
        %v3482 = vsel %vm2283, %v3116, 0.0
        %3483 = vadd.xlane.f32.xlu0 %v3482
        %v3484 = vpop.xlane.xlu0 %3483
        %v3485 = vsel %vm2283, %v3117, 0.0
        %3486 = vadd.xlane.f32.xlu0 %v3485
        %v3487 = vpop.xlane.xlu0 %3486
        %v3488 = vsel %vm2283, %v3118, 0.0
        %3489 = vadd.xlane.f32.xlu0 %v3488
        %v3490 = vpop.xlane.xlu0 %3489
        %v3491 = vsel %vm2283, %v3119, 0.0
        %3492 = vadd.xlane.f32.xlu0 %v3491
        %v3493 = vpop.xlane.xlu0 %3492
        %v3494 = vsel %vm2283, %v3120, 0.0
        %3495 = vadd.xlane.f32.xlu0 %v3494
        %v3496 = vpop.xlane.xlu0 %3495
        %v3497 = vsel %vm2283, %v3121, 0.0
        %3498 = vadd.xlane.f32.xlu0 %v3497
        %v3499 = vpop.xlane.xlu0 %3498
        %v3500 = vsel %vm2283, %v3122, 0.0
        %3501 = vadd.xlane.f32.xlu0 %v3500
        %v3502 = vpop.xlane.xlu0 %3501
        %v3503 = vsel %vm2283, %v3123, 0.0
        %3504 = vadd.xlane.f32.xlu0 %v3503
        %v3505 = vpop.xlane.xlu0 %3504
        %v3506 = vsel %vm2283, %v3124, 0.0
        %3507 = vadd.xlane.f32.xlu0 %v3506
        %v3508 = vpop.xlane.xlu0 %3507
        %v3509 = vsel %vm2283, %v3125, 0.0
        %3510 = vadd.xlane.f32.xlu0 %v3509
        %v3511 = vpop.xlane.xlu0 %3510
        %v3512 = vsel %vm2283, %v3126, 0.0
        %3513 = vadd.xlane.f32.xlu0 %v3512
        %v3514 = vpop.xlane.xlu0 %3513
        %v3515 = vsel %vm2283, %v3127, 0.0
        %3516 = vadd.xlane.f32.xlu0 %v3515
        %v3517 = vpop.xlane.xlu0 %3516
        %v3518 = vsel %vm2283, %v3128, 0.0
        %3519 = vadd.xlane.f32.xlu0 %v3518
        %v3520 = vpop.xlane.xlu0 %3519
        %v3521 = vsel %vm2283, %v3129, 0.0
        %3522 = vadd.xlane.f32.xlu0 %v3521
        %v3523 = vpop.xlane.xlu0 %3522
        %v3524 = vsel %vm2283, %v3130, 0.0
        %3525 = vadd.xlane.f32.xlu0 %v3524
        %v3526 = vpop.xlane.xlu0 %3525
        %v3527 = vsel %vm2283, %v3131, 0.0
        %3528 = vadd.xlane.f32.xlu0 %v3527
        %v3529 = vpop.xlane.xlu0 %3528
        %v3530 = vsel %vm2283, %v3132, 0.0
        %3531 = vadd.xlane.f32.xlu0 %v3530
        %v3532 = vpop.xlane.xlu0 %3531
        %v3533 = vsel %vm2283, %v3133, 0.0
        %3534 = vadd.xlane.f32.xlu0 %v3533
        %v3535 = vpop.xlane.xlu0 %3534
        %v3536 = vsel %vm2283, %v3134, 0.0
        %3537 = vadd.xlane.f32.xlu0 %v3536
        %v3538 = vpop.xlane.xlu0 %3537
        %v3539 = vsel %vm2283, %v3135, 0.0
        %3540 = vadd.xlane.f32.xlu0 %v3539
        %v3541 = vpop.xlane.xlu0 %3540
        %v3542 = vsel %vm2283, %v3136, 0.0
        %3543 = vadd.xlane.f32.xlu0 %v3542
        %v3544 = vpop.xlane.xlu0 %3543
        %v3545 = vsel %vm2283, %v3137, 0.0
        %3546 = vadd.xlane.f32.xlu0 %v3545
        %v3547 = vpop.xlane.xlu0 %3546
        %v3548 = vsel %vm2283, %v3138, 0.0
        %3549 = vadd.xlane.f32.xlu0 %v3548
        %v3550 = vpop.xlane.xlu0 %3549
        %v3551 = vsel %vm2283, %v3139, 0.0
        %3552 = vadd.xlane.f32.xlu0 %v3551
        %v3553 = vpop.xlane.xlu0 %3552
        %v3554 = vsel %vm2283, %v3140, 0.0
        %3555 = vadd.xlane.f32.xlu0 %v3554
        %v3556 = vpop.xlane.xlu0 %3555
        %v3557 = vsel %vm2283, %v3141, 0.0
        %3558 = vadd.xlane.f32.xlu0 %v3557
        %v3559 = vpop.xlane.xlu0 %3558
        %v3560 = vsel %vm2283, %v3142, 0.0
        %3561 = vadd.xlane.f32.xlu0 %v3560
        %v3562 = vpop.xlane.xlu0 %3561
        %v3563 = vsel %vm2283, %v3143, 0.0
        %3564 = vadd.xlane.f32.xlu0 %v3563
        %v3565 = vpop.xlane.xlu0 %3564
        %v3566 = vsel %vm2283, %v3144, 0.0
        %3567 = vadd.xlane.f32.xlu0 %v3566
        %v3568 = vpop.xlane.xlu0 %3567
        %v3569 = vsel %vm2283, %v3145, 0.0
        %3570 = vadd.xlane.f32.xlu0 %v3569
        %v3571 = vpop.xlane.xlu0 %3570
        %v3572 = vsel %vm2283, %v3146, 0.0
        %3573 = vadd.xlane.f32.xlu0 %v3572
        %v3574 = vpop.xlane.xlu0 %3573
        %v3575 = vsel %vm2283, %v3147, 0.0
        %3576 = vadd.xlane.f32.xlu0 %v3575
        %v3577 = vpop.xlane.xlu0 %3576
        %v3578 = vsel %vm2283, %v3148, 0.0
        %3579 = vadd.xlane.f32.xlu0 %v3578
        %v3580 = vpop.xlane.xlu0 %3579
        %v3581 = vmul.f32 %v3151, %v2716
        %v3582 = vmul.f32 %v3154, %v2716
        %v3583 = vmul.f32 %v3157, %v2716
        %v3584 = vmul.f32 %v3160, %v2716
        %v3585 = vmul.f32 %v3163, %v2716
        %v3586 = vmul.f32 %v3166, %v2716
        %v3587 = vmul.f32 %v3169, %v2716
        %v3588 = vmul.f32 %v3172, %v2716
        %v3589 = vmul.f32 %v3175, %v2716
        %v3590 = vmul.f32 %v3178, %v2716
        %v3591 = vmul.f32 %v3181, %v2716
        %v3592 = vmul.f32 %v3184, %v2716
        %v3593 = vmul.f32 %v3187, %v2716
        %v3594 = vmul.f32 %v3190, %v2716
        %v3595 = vmul.f32 %v3193, %v2716
        %v3596 = vmul.f32 %v3196, %v2716
        %v3597 = vmul.f32 %v3199, %v2716
        %v3598 = vmul.f32 %v3202, %v2716
        %v3599 = vmul.f32 %v3205, %v2716
        %v3600 = vmul.f32 %v3208, %v2716
        %v3601 = vmul.f32 %v3211, %v2716
        %v3602 = vmul.f32 %v3214, %v2716
        %v3603 = vmul.f32 %v3217, %v2716
        %v3604 = vmul.f32 %v3220, %v2716
        %v3605 = vmul.f32 %v3223, %v2716
        %v3606 = vmul.f32 %v3226, %v2716
        %v3607 = vmul.f32 %v3229, %v2716
        %v3608 = vmul.f32 %v3232, %v2716
        %v3609 = vmul.f32 %v3235, %v2716
        %v3610 = vmul.f32 %v3238, %v2716
        %v3611 = vmul.f32 %v3241, %v2716
        %v3612 = vmul.f32 %v3244, %v2716
        %v3613 = vmul.f32 %v3247, %v2716
        %v3614 = vmul.f32 %v3250, %v2716
        %v3615 = vmul.f32 %v3253, %v2716
        %v3616 = vmul.f32 %v3256, %v2716
        %v3617 = vmul.f32 %v3259, %v2716
        %v3618 = vmul.f32 %v3262, %v2716
        %v3619 = vmul.f32 %v3265, %v2716
        %v3620 = vmul.f32 %v3268, %v2716
        %v3621 = vmul.f32 %v3271, %v2716
        %v3622 = vmul.f32 %v3274, %v2716
        %v3623 = vmul.f32 %v3277, %v2716
        %v3624 = vmul.f32 %v3280, %v2716
        %v3625 = vmul.f32 %v3283, %v2716
        %v3626 = vmul.f32 %v3286, %v2716
        %v3627 = vmul.f32 %v3289, %v2716
        %v3628 = vmul.f32 %v3292, %v2716
        %v3629 = vmul.f32 %v3295, %v2716
        %v3630 = vmul.f32 %v3298, %v2716
        %v3631 = vmul.f32 %v3301, %v2716
        %v3632 = vmul.f32 %v3304, %v2716
        %v3633 = vmul.f32 %v3307, %v2716
        %v3634 = vmul.f32 %v3310, %v2716
        %v3635 = vmul.f32 %v3313, %v2716
        %v3636 = vmul.f32 %v3316, %v2716
        %v3637 = vmul.f32 %v3319, %v2716
        %v3638 = vmul.f32 %v3322, %v2716
        %v3639 = vmul.f32 %v3325, %v2716
        %v3640 = vmul.f32 %v3328, %v2716
        %v3641 = vmul.f32 %v3331, %v2716
        %v3642 = vmul.f32 %v3334, %v2716
        %v3643 = vmul.f32 %v3337, %v2716
        %v3644 = vmul.f32 %v3340, %v2716
        %v3645 = vmul.f32 %v3343, %v2716
        %v3646 = vmul.f32 %v3346, %v2716
        %v3647 = vmul.f32 %v3349, %v2716
        %v3648 = vmul.f32 %v3352, %v2716
        %v3649 = vmul.f32 %v3355, %v2716
        %v3650 = vmul.f32 %v3358, %v2716
        %v3651 = vmul.f32 %v3361, %v2716
        %v3652 = vmul.f32 %v3364, %v2716
        %v3653 = vmul.f32 %v3367, %v2716
        %v3654 = vmul.f32 %v3370, %v2716
        %v3655 = vmul.f32 %v3373, %v2716
        %v3656 = vmul.f32 %v3376, %v2716
        %v3657 = vmul.f32 %v3379, %v2716
        %v3658 = vmul.f32 %v3382, %v2716
        %v3659 = vmul.f32 %v3385, %v2716
        %v3660 = vmul.f32 %v3388, %v2716
        %v3661 = vmul.f32 %v3391, %v2716
        %v3662 = vmul.f32 %v3394, %v2716
        %v3663 = vmul.f32 %v3397, %v2716
        %v3664 = vmul.f32 %v3400, %v2716
        %v3665 = vmul.f32 %v3403, %v2716
        %v3666 = vmul.f32 %v3406, %v2716
        %v3667 = vmul.f32 %v3409, %v2716
        %v3668 = vmul.f32 %v3412, %v2716
        %v3669 = vmul.f32 %v3415, %v2716
        %v3670 = vmul.f32 %v3418, %v2716
        %v3671 = vmul.f32 %v3421, %v2716
        %v3672 = vmul.f32 %v3424, %v2716
        %v3673 = vmul.f32 %v3427, %v2716
        %v3674 = vmul.f32 %v3430, %v2716
        %v3675 = vmul.f32 %v3433, %v2716
        %v3676 = vmul.f32 %v3436, %v2716
        %v3677 = vmul.f32 %v3439, %v2716
        %v3678 = vmul.f32 %v3442, %v2716
        %v3679 = vmul.f32 %v3445, %v2716
        %v3680 = vmul.f32 %v3448, %v2716
        %v3681 = vmul.f32 %v3451, %v2716
        %v3682 = vmul.f32 %v3454, %v2716
        %v3683 = vmul.f32 %v3457, %v2716
        %v3684 = vmul.f32 %v3460, %v2716
        %v3685 = vmul.f32 %v3463, %v2716
        %v3686 = vmul.f32 %v3466, %v2716
        %v3687 = vmul.f32 %v3469, %v2716
        %v3688 = vmul.f32 %v3472, %v2716
        %v3689 = vmul.f32 %v3475, %v2716
        %v3690 = vmul.f32 %v3478, %v2716
        %v3691 = vmul.f32 %v3481, %v2716
        %v3692 = vmul.f32 %v3484, %v2716
        %v3693 = vmul.f32 %v3487, %v2716
        %v3694 = vmul.f32 %v3490, %v2716
        %v3695 = vmul.f32 %v3493, %v2716
        %v3696 = vmul.f32 %v3496, %v2716
        %v3697 = vmul.f32 %v3499, %v2716
        %v3698 = vmul.f32 %v3502, %v2716
        %v3699 = vmul.f32 %v3505, %v2716
        %v3700 = vmul.f32 %v3508, %v2716
        %v3701 = vmul.f32 %v3511, %v2716
        %v3702 = vmul.f32 %v3514, %v2716
        %v3703 = vmul.f32 %v3517, %v2716
        %v3704 = vmul.f32 %v3520, %v2716
        %v3705 = vmul.f32 %v3523, %v2716
        %v3706 = vmul.f32 %v3526, %v2716
        %v3707 = vmul.f32 %v3529, %v2716
        %v3708 = vmul.f32 %v3532, %v2716
        %v3709 = vmul.f32 %v3535, %v2716
        %v3710 = vmul.f32 %v3538, %v2716
        %v3711 = vmul.f32 %v3541, %v2716
        %v3712 = vmul.f32 %v3544, %v2716
        %v3713 = vmul.f32 %v3547, %v2716
        %v3714 = vmul.f32 %v3550, %v2716
        %v3715 = vmul.f32 %v3553, %v2716
        %v3716 = vmul.f32 %v3556, %v2716
        %v3717 = vmul.f32 %v3559, %v2716
        %v3718 = vmul.f32 %v3562, %v2716
        %v3719 = vmul.f32 %v3565, %v2716
        %v3720 = vmul.f32 %v3568, %v2716
        %v3721 = vmul.f32 %v3571, %v2716
        %v3722 = vmul.f32 %v3574, %v2716
        %v3723 = vmul.f32 %v3577, %v2716
        %v3724 = vmul.f32 %v3580, %v2716
        %v3725 = vld [vmem:[%s197] sm:$0xff]
        %v3726 = vld [vmem:[%s197 + $0x8] sm:$0xff]
        %v3727 = vld [vmem:[%s197 + $0x10] sm:$0xff]
        %v3728 = vld [vmem:[%s197 + $0x18] sm:$0xff]
        %v3729 = vld [vmem:[%s197 + $0x20] sm:$0xff]
        %v3730 = vld [vmem:[%s197 + $0x28] sm:$0xff]
        %v3731 = vld [vmem:[%s197 + $0x30] sm:$0xff]
        %v3732 = vld [vmem:[%s197 + $0x38] sm:$0xff]
        %v3733 = vld [vmem:[%s197 + $0x40] sm:$0xff]
        %3734 = vxpose.xlu0.b32.start [1/16] %v3725, 128
        %3735 = vxpose.xlu0.b32.cont [2/16] 0.0, 128
        %3736 = vxpose.xlu0.b32.cont [3/16] 0.0, 128
        %3737 = vxpose.xlu0.b32.cont [4/16] 0.0, 128
        %3738 = vxpose.xlu0.b32.cont [5/16] 0.0, 128
        %3739 = vxpose.xlu0.b32.cont [6/16] 0.0, 128
        %3740 = vxpose.xlu0.b32.cont [7/16] 0.0, 128
        %3741 = vxpose.xlu0.b32.cont [8/16] 0.0, 128
        %3742 = vxpose.xlu0.b32.cont [9/16] 0.0, 128
        %3743 = vxpose.xlu0.b32.cont [10/16] 0.0, 128
        %3744 = vxpose.xlu0.b32.cont [11/16] 0.0, 128
        %3745 = vxpose.xlu0.b32.cont [12/16] 0.0, 128
        %3746 = vxpose.xlu0.b32.cont [13/16] 0.0, 128
        %3747 = vxpose.xlu0.b32.cont [14/16] 0.0, 128
        %3748 = vxpose.xlu0.b32.cont [15/16] 0.0, 128
        %3749 = vxpose.xlu0.b32.end [16/16] 0.0, 128
        %v3750 = vpop.trf.xlu0
        %v3751 = vpop.trf.xlu0
        %v3752 = vpop.trf.xlu0
        %v3753 = vpop.trf.xlu0
        %v3754 = vpop.trf.xlu0
        %v3755 = vpop.trf.xlu0
        %v3756 = vpop.trf.xlu0
        %v3757 = vpop.trf.xlu0
        %v3758 = vpop.trf.xlu0
        %v3759 = vpop.trf.xlu0
        %v3760 = vpop.trf.xlu0
        %v3761 = vpop.trf.xlu0
        %v3762 = vpop.trf.xlu0
        %v3763 = vpop.trf.xlu0
        %v3764 = vpop.trf.xlu0
        %v3765 = vpop.trf.xlu0
        %3766 = vxpose.xlu0.b32.start [1/16] %v3726, 128
        %3767 = vxpose.xlu0.b32.cont [2/16] 0.0, 128
        %3768 = vxpose.xlu0.b32.cont [3/16] 0.0, 128
        %3769 = vxpose.xlu0.b32.cont [4/16] 0.0, 128
        %3770 = vxpose.xlu0.b32.cont [5/16] 0.0, 128
        %3771 = vxpose.xlu0.b32.cont [6/16] 0.0, 128
        %3772 = vxpose.xlu0.b32.cont [7/16] 0.0, 128
        %3773 = vxpose.xlu0.b32.cont [8/16] 0.0, 128
        %3774 = vxpose.xlu0.b32.cont [9/16] 0.0, 128
        %3775 = vxpose.xlu0.b32.cont [10/16] 0.0, 128
        %3776 = vxpose.xlu0.b32.cont [11/16] 0.0, 128
        %3777 = vxpose.xlu0.b32.cont [12/16] 0.0, 128
        %3778 = vxpose.xlu0.b32.cont [13/16] 0.0, 128
        %3779 = vxpose.xlu0.b32.cont [14/16] 0.0, 128
        %3780 = vxpose.xlu0.b32.cont [15/16] 0.0, 128
        %3781 = vxpose.xlu0.b32.end [16/16] 0.0, 128
        %v3782 = vpop.trf.xlu0
        %v3783 = vpop.trf.xlu0
        %v3784 = vpop.trf.xlu0
        %v3785 = vpop.trf.xlu0
        %v3786 = vpop.trf.xlu0
        %v3787 = vpop.trf.xlu0
        %v3788 = vpop.trf.xlu0
        %v3789 = vpop.trf.xlu0
        %v3790 = vpop.trf.xlu0
        %v3791 = vpop.trf.xlu0
        %v3792 = vpop.trf.xlu0
        %v3793 = vpop.trf.xlu0
        %v3794 = vpop.trf.xlu0
        %v3795 = vpop.trf.xlu0
        %v3796 = vpop.trf.xlu0
        %v3797 = vpop.trf.xlu0
        %3798 = vxpose.xlu0.b32.start [1/16] %v3727, 128
        %3799 = vxpose.xlu0.b32.cont [2/16] 0.0, 128
        %3800 = vxpose.xlu0.b32.cont [3/16] 0.0, 128
        %3801 = vxpose.xlu0.b32.cont [4/16] 0.0, 128
        %3802 = vxpose.xlu0.b32.cont [5/16] 0.0, 128
        %3803 = vxpose.xlu0.b32.cont [6/16] 0.0, 128
        %3804 = vxpose.xlu0.b32.cont [7/16] 0.0, 128
        %3805 = vxpose.xlu0.b32.cont [8/16] 0.0, 128
        %3806 = vxpose.xlu0.b32.cont [9/16] 0.0, 128
        %3807 = vxpose.xlu0.b32.cont [10/16] 0.0, 128
        %3808 = vxpose.xlu0.b32.cont [11/16] 0.0, 128
        %3809 = vxpose.xlu0.b32.cont [12/16] 0.0, 128
        %3810 = vxpose.xlu0.b32.cont [13/16] 0.0, 128
        %3811 = vxpose.xlu0.b32.cont [14/16] 0.0, 128
        %3812 = vxpose.xlu0.b32.cont [15/16] 0.0, 128
        %3813 = vxpose.xlu0.b32.end [16/16] 0.0, 128
        %v3814 = vpop.trf.xlu0
        %v3815 = vpop.trf.xlu0
        %v3816 = vpop.trf.xlu0
        %v3817 = vpop.trf.xlu0
        %v3818 = vpop.trf.xlu0
        %v3819 = vpop.trf.xlu0
        %v3820 = vpop.trf.xlu0
        %v3821 = vpop.trf.xlu0
        %v3822 = vpop.trf.xlu0
        %v3823 = vpop.trf.xlu0
        %v3824 = vpop.trf.xlu0
        %v3825 = vpop.trf.xlu0
        %v3826 = vpop.trf.xlu0
        %v3827 = vpop.trf.xlu0
        %v3828 = vpop.trf.xlu0
        %v3829 = vpop.trf.xlu0
        %3830 = vxpose.xlu0.b32.start [1/16] %v3728, 128
        %3831 = vxpose.xlu0.b32.cont [2/16] 0.0, 128
        %3832 = vxpose.xlu0.b32.cont [3/16] 0.0, 128
        %3833 = vxpose.xlu0.b32.cont [4/16] 0.0, 128
        %3834 = vxpose.xlu0.b32.cont [5/16] 0.0, 128
        %3835 = vxpose.xlu0.b32.cont [6/16] 0.0, 128
        %3836 = vxpose.xlu0.b32.cont [7/16] 0.0, 128
        %3837 = vxpose.xlu0.b32.cont [8/16] 0.0, 128
        %3838 = vxpose.xlu0.b32.cont [9/16] 0.0, 128
        %3839 = vxpose.xlu0.b32.cont [10/16] 0.0, 128
        %3840 = vxpose.xlu0.b32.cont [11/16] 0.0, 128
        %3841 = vxpose.xlu0.b32.cont [12/16] 0.0, 128
        %3842 = vxpose.xlu0.b32.cont [13/16] 0.0, 128
        %3843 = vxpose.xlu0.b32.cont [14/16] 0.0, 128
        %3844 = vxpose.xlu0.b32.cont [15/16] 0.0, 128
        %3845 = vxpose.xlu0.b32.end [16/16] 0.0, 128
        %v3846 = vpop.trf.xlu0
        %v3847 = vpop.trf.xlu0
        %v3848 = vpop.trf.xlu0
        %v3849 = vpop.trf.xlu0
        %v3850 = vpop.trf.xlu0
        %v3851 = vpop.trf.xlu0
        %v3852 = vpop.trf.xlu0
        %v3853 = vpop.trf.xlu0
        %v3854 = vpop.trf.xlu0
        %v3855 = vpop.trf.xlu0
        %v3856 = vpop.trf.xlu0
        %v3857 = vpop.trf.xlu0
        %v3858 = vpop.trf.xlu0
        %v3859 = vpop.trf.xlu0
        %v3860 = vpop.trf.xlu0
        %v3861 = vpop.trf.xlu0
        %3862 = vxpose.xlu0.b32.start [1/16] %v3729, 128
        %3863 = vxpose.xlu0.b32.cont [2/16] 0.0, 128
        %3864 = vxpose.xlu0.b32.cont [3/16] 0.0, 128
        %3865 = vxpose.xlu0.b32.cont [4/16] 0.0, 128
        %3866 = vxpose.xlu0.b32.cont [5/16] 0.0, 128
        %3867 = vxpose.xlu0.b32.cont [6/16] 0.0, 128
        %3868 = vxpose.xlu0.b32.cont [7/16] 0.0, 128
        %3869 = vxpose.xlu0.b32.cont [8/16] 0.0, 128
        %3870 = vxpose.xlu0.b32.cont [9/16] 0.0, 128
        %3871 = vxpose.xlu0.b32.cont [10/16] 0.0, 128
        %3872 = vxpose.xlu0.b32.cont [11/16] 0.0, 128
        %3873 = vxpose.xlu0.b32.cont [12/16] 0.0, 128
        %3874 = vxpose.xlu0.b32.cont [13/16] 0.0, 128
        %3875 = vxpose.xlu0.b32.cont [14/16] 0.0, 128
        %3876 = vxpose.xlu0.b32.cont [15/16] 0.0, 128
        %3877 = vxpose.xlu0.b32.end [16/16] 0.0, 128
        %v3878 = vpop.trf.xlu0
        %v3879 = vpop.trf.xlu0
        %v3880 = vpop.trf.xlu0
        %v3881 = vpop.trf.xlu0
        %v3882 = vpop.trf.xlu0
        %v3883 = vpop.trf.xlu0
        %v3884 = vpop.trf.xlu0
        %v3885 = vpop.trf.xlu0
        %v3886 = vpop.trf.xlu0
        %v3887 = vpop.trf.xlu0
        %v3888 = vpop.trf.xlu0
        %v3889 = vpop.trf.xlu0
        %v3890 = vpop.trf.xlu0
        %v3891 = vpop.trf.xlu0
        %v3892 = vpop.trf.xlu0
        %v3893 = vpop.trf.xlu0
        %3894 = vxpose.xlu0.b32.start [1/16] %v3730, 128
        %3895 = vxpose.xlu0.b32.cont [2/16] 0.0, 128
        %3896 = vxpose.xlu0.b32.cont [3/16] 0.0, 128
        %3897 = vxpose.xlu0.b32.cont [4/16] 0.0, 128
        %3898 = vxpose.xlu0.b32.cont [5/16] 0.0, 128
        %3899 = vxpose.xlu0.b32.cont [6/16] 0.0, 128
        %3900 = vxpose.xlu0.b32.cont [7/16] 0.0, 128
        %3901 = vxpose.xlu0.b32.cont [8/16] 0.0, 128
        %3902 = vxpose.xlu0.b32.cont [9/16] 0.0, 128
        %3903 = vxpose.xlu0.b32.cont [10/16] 0.0, 128
        %3904 = vxpose.xlu0.b32.cont [11/16] 0.0, 128
        %3905 = vxpose.xlu0.b32.cont [12/16] 0.0, 128
        %3906 = vxpose.xlu0.b32.cont [13/16] 0.0, 128
        %3907 = vxpose.xlu0.b32.cont [14/16] 0.0, 128
        %3908 = vxpose.xlu0.b32.cont [15/16] 0.0, 128
        %3909 = vxpose.xlu0.b32.end [16/16] 0.0, 128
        %v3910 = vpop.trf.xlu0
        %v3911 = vpop.trf.xlu0
        %v3912 = vpop.trf.xlu0
        %v3913 = vpop.trf.xlu0
        %v3914 = vpop.trf.xlu0
        %v3915 = vpop.trf.xlu0
        %v3916 = vpop.trf.xlu0
        %v3917 = vpop.trf.xlu0
        %v3918 = vpop.trf.xlu0
        %v3919 = vpop.trf.xlu0
        %v3920 = vpop.trf.xlu0
        %v3921 = vpop.trf.xlu0
        %v3922 = vpop.trf.xlu0
        %v3923 = vpop.trf.xlu0
        %v3924 = vpop.trf.xlu0
        %v3925 = vpop.trf.xlu0
        %3926 = vxpose.xlu0.b32.start [1/16] %v3731, 128
        %3927 = vxpose.xlu0.b32.cont [2/16] 0.0, 128
        %3928 = vxpose.xlu0.b32.cont [3/16] 0.0, 128
        %3929 = vxpose.xlu0.b32.cont [4/16] 0.0, 128
        %3930 = vxpose.xlu0.b32.cont [5/16] 0.0, 128
        %3931 = vxpose.xlu0.b32.cont [6/16] 0.0, 128
        %3932 = vxpose.xlu0.b32.cont [7/16] 0.0, 128
        %3933 = vxpose.xlu0.b32.cont [8/16] 0.0, 128
        %3934 = vxpose.xlu0.b32.cont [9/16] 0.0, 128
        %3935 = vxpose.xlu0.b32.cont [10/16] 0.0, 128
        %3936 = vxpose.xlu0.b32.cont [11/16] 0.0, 128
        %3937 = vxpose.xlu0.b32.cont [12/16] 0.0, 128
        %3938 = vxpose.xlu0.b32.cont [13/16] 0.0, 128
        %3939 = vxpose.xlu0.b32.cont [14/16] 0.0, 128
        %3940 = vxpose.xlu0.b32.cont [15/16] 0.0, 128
        %3941 = vxpose.xlu0.b32.end [16/16] 0.0, 128
        %v3942 = vpop.trf.xlu0
        %v3943 = vpop.trf.xlu0
        %v3944 = vpop.trf.xlu0
        %v3945 = vpop.trf.xlu0
        %v3946 = vpop.trf.xlu0
        %v3947 = vpop.trf.xlu0
        %v3948 = vpop.trf.xlu0
        %v3949 = vpop.trf.xlu0
        %v3950 = vpop.trf.xlu0
        %v3951 = vpop.trf.xlu0
        %v3952 = vpop.trf.xlu0
        %v3953 = vpop.trf.xlu0
        %v3954 = vpop.trf.xlu0
        %v3955 = vpop.trf.xlu0
        %v3956 = vpop.trf.xlu0
        %v3957 = vpop.trf.xlu0
        %3958 = vxpose.xlu0.b32.start [1/16] %v3732, 128
        %3959 = vxpose.xlu0.b32.cont [2/16] 0.0, 128
        %3960 = vxpose.xlu0.b32.cont [3/16] 0.0, 128
        %3961 = vxpose.xlu0.b32.cont [4/16] 0.0, 128
        %3962 = vxpose.xlu0.b32.cont [5/16] 0.0, 128
        %3963 = vxpose.xlu0.b32.cont [6/16] 0.0, 128
        %3964 = vxpose.xlu0.b32.cont [7/16] 0.0, 128
        %3965 = vxpose.xlu0.b32.cont [8/16] 0.0, 128
        %3966 = vxpose.xlu0.b32.cont [9/16] 0.0, 128
        %3967 = vxpose.xlu0.b32.cont [10/16] 0.0, 128
        %3968 = vxpose.xlu0.b32.cont [11/16] 0.0, 128
        %3969 = vxpose.xlu0.b32.cont [12/16] 0.0, 128
        %3970 = vxpose.xlu0.b32.cont [13/16] 0.0, 128
        %3971 = vxpose.xlu0.b32.cont [14/16] 0.0, 128
        %3972 = vxpose.xlu0.b32.cont [15/16] 0.0, 128
        %3973 = vxpose.xlu0.b32.end [16/16] 0.0, 128
        %v3974 = vpop.trf.xlu0
        %v3975 = vpop.trf.xlu0
        %v3976 = vpop.trf.xlu0
        %v3977 = vpop.trf.xlu0
        %v3978 = vpop.trf.xlu0
        %v3979 = vpop.trf.xlu0
        %v3980 = vpop.trf.xlu0
        %v3981 = vpop.trf.xlu0
        %v3982 = vpop.trf.xlu0
        %v3983 = vpop.trf.xlu0
        %v3984 = vpop.trf.xlu0
        %v3985 = vpop.trf.xlu0
        %v3986 = vpop.trf.xlu0
        %v3987 = vpop.trf.xlu0
        %v3988 = vpop.trf.xlu0
        %v3989 = vpop.trf.xlu0
        %3990 = vxpose.xlu0.b32.start [1/16] %v3733, 128
        %3991 = vxpose.xlu0.b32.cont [2/16] 0.0, 128
        %3992 = vxpose.xlu0.b32.cont [3/16] 0.0, 128
        %3993 = vxpose.xlu0.b32.cont [4/16] 0.0, 128
        %3994 = vxpose.xlu0.b32.cont [5/16] 0.0, 128
        %3995 = vxpose.xlu0.b32.cont [6/16] 0.0, 128
        %3996 = vxpose.xlu0.b32.cont [7/16] 0.0, 128
        %3997 = vxpose.xlu0.b32.cont [8/16] 0.0, 128
        %3998 = vxpose.xlu0.b32.cont [9/16] 0.0, 128
        %3999 = vxpose.xlu0.b32.cont [10/16] 0.0, 128
        %4000 = vxpose.xlu0.b32.cont [11/16] 0.0, 128
        %4001 = vxpose.xlu0.b32.cont [12/16] 0.0, 128
        %4002 = vxpose.xlu0.b32.cont [13/16] 0.0, 128
        %4003 = vxpose.xlu0.b32.cont [14/16] 0.0, 128
        %4004 = vxpose.xlu0.b32.cont [15/16] 0.0, 128
        %4005 = vxpose.xlu0.b32.end [16/16] 0.0, 128
        %v4006 = vpop.trf.xlu0
        %v4007 = vpop.trf.xlu0
        %v4008 = vpop.trf.xlu0
        %v4009 = vpop.trf.xlu0
        %v4010 = vpop.trf.xlu0
        %v4011 = vpop.trf.xlu0
        %v4012 = vpop.trf.xlu0
        %v4013 = vpop.trf.xlu0
        %v4014 = vpop.trf.xlu0
        %v4015 = vpop.trf.xlu0
        %v4016 = vpop.trf.xlu0
        %v4017 = vpop.trf.xlu0
        %v4018 = vpop.trf.xlu0
        %v4019 = vpop.trf.xlu0
        %v4020 = vpop.trf.xlu0
        %v4021 = vpop.trf.xlu0
        %v4022 = vadd.f32 %v3581, 0.001
        %v4023 = vadd.f32 %v3582, 0.001
        %v4024 = vadd.f32 %v3583, 0.001
        %v4025 = vadd.f32 %v3584, 0.001
        %v4026 = vadd.f32 %v3585, 0.001
        %v4027 = vadd.f32 %v3586, 0.001
        %v4028 = vadd.f32 %v3587, 0.001
        %v4029 = vadd.f32 %v3588, 0.001
        %v4030 = vadd.f32 %v3589, 0.001
        %v4031 = vadd.f32 %v3590, 0.001
        %v4032 = vadd.f32 %v3591, 0.001
        %v4033 = vadd.f32 %v3592, 0.001
        %v4034 = vadd.f32 %v3593, 0.001
        %v4035 = vadd.f32 %v3594, 0.001
        %v4036 = vadd.f32 %v3595, 0.001
        %v4037 = vadd.f32 %v3596, 0.001
        %v4038 = vadd.f32 %v3597, 0.001
        %v4039 = vadd.f32 %v3598, 0.001
        %v4040 = vadd.f32 %v3599, 0.001
        %v4041 = vadd.f32 %v3600, 0.001
        %v4042 = vadd.f32 %v3601, 0.001
        %v4043 = vadd.f32 %v3602, 0.001
        %v4044 = vadd.f32 %v3603, 0.001
        %v4045 = vadd.f32 %v3604, 0.001
        %v4046 = vadd.f32 %v3605, 0.001
        %v4047 = vadd.f32 %v3606, 0.001
        %v4048 = vadd.f32 %v3607, 0.001
        %v4049 = vadd.f32 %v3608, 0.001
        %v4050 = vadd.f32 %v3609, 0.001
        %v4051 = vadd.f32 %v3610, 0.001
        %v4052 = vadd.f32 %v3611, 0.001
        %v4053 = vadd.f32 %v3612, 0.001
        %v4054 = vadd.f32 %v3613, 0.001
        %v4055 = vadd.f32 %v3614, 0.001
        %v4056 = vadd.f32 %v3615, 0.001
        %v4057 = vadd.f32 %v3616, 0.001
        %v4058 = vadd.f32 %v3617, 0.001
        %v4059 = vadd.f32 %v3618, 0.001
        %v4060 = vadd.f32 %v3619, 0.001
        %v4061 = vadd.f32 %v3620, 0.001
        %v4062 = vadd.f32 %v3621, 0.001
        %v4063 = vadd.f32 %v3622, 0.001
        %v4064 = vadd.f32 %v3623, 0.001
        %v4065 = vadd.f32 %v3624, 0.001
        %v4066 = vadd.f32 %v3625, 0.001
        %v4067 = vadd.f32 %v3626, 0.001
        %v4068 = vadd.f32 %v3627, 0.001
        %v4069 = vadd.f32 %v3628, 0.001
        %v4070 = vadd.f32 %v3629, 0.001
        %v4071 = vadd.f32 %v3630, 0.001
        %v4072 = vadd.f32 %v3631, 0.001
        %v4073 = vadd.f32 %v3632, 0.001
        %v4074 = vadd.f32 %v3633, 0.001
        %v4075 = vadd.f32 %v3634, 0.001
        %v4076 = vadd.f32 %v3635, 0.001
        %v4077 = vadd.f32 %v3636, 0.001
        %v4078 = vadd.f32 %v3637, 0.001
        %v4079 = vadd.f32 %v3638, 0.001
        %v4080 = vadd.f32 %v3639, 0.001
        %v4081 = vadd.f32 %v3640, 0.001
        %v4082 = vadd.f32 %v3641, 0.001
        %v4083 = vadd.f32 %v3642, 0.001
        %v4084 = vadd.f32 %v3643, 0.001
        %v4085 = vadd.f32 %v3644, 0.001
        %v4086 = vadd.f32 %v3645, 0.001
        %v4087 = vadd.f32 %v3646, 0.001
        %v4088 = vadd.f32 %v3647, 0.001
        %v4089 = vadd.f32 %v3648, 0.001
        %v4090 = vadd.f32 %v3649, 0.001
        %v4091 = vadd.f32 %v3650, 0.001
        %v4092 = vadd.f32 %v3651, 0.001
        %v4093 = vadd.f32 %v3652, 0.001
        %v4094 = vadd.f32 %v3653, 0.001
        %v4095 = vadd.f32 %v3654, 0.001
        %v4096 = vadd.f32 %v3655, 0.001
        %v4097 = vadd.f32 %v3656, 0.001
        %v4098 = vadd.f32 %v3657, 0.001
        %v4099 = vadd.f32 %v3658, 0.001
        %v4100 = vadd.f32 %v3659, 0.001
        %v4101 = vadd.f32 %v3660, 0.001
        %v4102 = vadd.f32 %v3661, 0.001
        %v4103 = vadd.f32 %v3662, 0.001
        %v4104 = vadd.f32 %v3663, 0.001
        %v4105 = vadd.f32 %v3664, 0.001
        %v4106 = vadd.f32 %v3665, 0.001
        %v4107 = vadd.f32 %v3666, 0.001
        %v4108 = vadd.f32 %v3667, 0.001
        %v4109 = vadd.f32 %v3668, 0.001
        %v4110 = vadd.f32 %v3669, 0.001
        %v4111 = vadd.f32 %v3670, 0.001
        %v4112 = vadd.f32 %v3671, 0.001
        %v4113 = vadd.f32 %v3672, 0.001
        %v4114 = vadd.f32 %v3673, 0.001
        %v4115 = vadd.f32 %v3674, 0.001
        %v4116 = vadd.f32 %v3675, 0.001
        %v4117 = vadd.f32 %v3676, 0.001
        %v4118 = vadd.f32 %v3677, 0.001
        %v4119 = vadd.f32 %v3678, 0.001
        %v4120 = vadd.f32 %v3679, 0.001
        %v4121 = vadd.f32 %v3680, 0.001
        %v4122 = vadd.f32 %v3681, 0.001
        %v4123 = vadd.f32 %v3682, 0.001
        %v4124 = vadd.f32 %v3683, 0.001
        %v4125 = vadd.f32 %v3684, 0.001
        %v4126 = vadd.f32 %v3685, 0.001
        %v4127 = vadd.f32 %v3686, 0.001
        %v4128 = vadd.f32 %v3687, 0.001
        %v4129 = vadd.f32 %v3688, 0.001
        %v4130 = vadd.f32 %v3689, 0.001
        %v4131 = vadd.f32 %v3690, 0.001
        %v4132 = vadd.f32 %v3691, 0.001
        %v4133 = vadd.f32 %v3692, 0.001
        %v4134 = vadd.f32 %v3693, 0.001
        %v4135 = vadd.f32 %v3694, 0.001
        %v4136 = vadd.f32 %v3695, 0.001
        %v4137 = vadd.f32 %v3696, 0.001
        %v4138 = vadd.f32 %v3697, 0.001
        %v4139 = vadd.f32 %v3698, 0.001
        %v4140 = vadd.f32 %v3699, 0.001
        %v4141 = vadd.f32 %v3700, 0.001
        %v4142 = vadd.f32 %v3701, 0.001
        %v4143 = vadd.f32 %v3702, 0.001
        %v4144 = vadd.f32 %v3703, 0.001
        %v4145 = vadd.f32 %v3704, 0.001
        %v4146 = vadd.f32 %v3705, 0.001
        %v4147 = vadd.f32 %v3706, 0.001
        %v4148 = vadd.f32 %v3707, 0.001
        %v4149 = vadd.f32 %v3708, 0.001
        %v4150 = vadd.f32 %v3709, 0.001
        %v4151 = vadd.f32 %v3710, 0.001
        %v4152 = vadd.f32 %v3711, 0.001
        %v4153 = vadd.f32 %v3712, 0.001
        %v4154 = vadd.f32 %v3713, 0.001
        %v4155 = vadd.f32 %v3714, 0.001
        %v4156 = vadd.f32 %v3715, 0.001
        %v4157 = vadd.f32 %v3716, 0.001
        %v4158 = vadd.f32 %v3717, 0.001
        %v4159 = vadd.f32 %v3718, 0.001
        %v4160 = vadd.f32 %v3719, 0.001
        %v4161 = vadd.f32 %v3720, 0.001
        %v4162 = vadd.f32 %v3721, 0.001
        %v4163 = vadd.f32 %v3722, 0.001
        %v4164 = vadd.f32 %v3723, 0.001
        %v4165 = vadd.f32 %v3724, 0.001
        %v4166 = vrsqrt.pop %v4022
        %v4167 = vrsqrt.pop %v4023
        %v4168 = vrsqrt.pop %v4024
        %v4169 = vrsqrt.pop %v4025
        %v4170 = vrsqrt.pop %v4026
        %v4171 = vrsqrt.pop %v4027
        %v4172 = vrsqrt.pop %v4028
        %v4173 = vrsqrt.pop %v4029
        %v4174 = vrsqrt.pop %v4030
        %v4175 = vrsqrt.pop %v4031
        %v4176 = vrsqrt.pop %v4032
        %v4177 = vrsqrt.pop %v4033
        %v4178 = vrsqrt.pop %v4034
        %v4179 = vrsqrt.pop %v4035
        %v4180 = vrsqrt.pop %v4036
        %v4181 = vrsqrt.pop %v4037
        %v4182 = vrsqrt.pop %v4038
        %v4183 = vrsqrt.pop %v4039
        %v4184 = vrsqrt.pop %v4040
        %v4185 = vrsqrt.pop %v4041
        %v4186 = vrsqrt.pop %v4042
        %v4187 = vrsqrt.pop %v4043
        %v4188 = vrsqrt.pop %v4044
        %v4189 = vrsqrt.pop %v4045
        %v4190 = vrsqrt.pop %v4046
        %v4191 = vrsqrt.pop %v4047
        %v4192 = vrsqrt.pop %v4048
        %v4193 = vrsqrt.pop %v4049
        %v4194 = vrsqrt.pop %v4050
        %v4195 = vrsqrt.pop %v4051
        %v4196 = vrsqrt.pop %v4052
        %v4197 = vrsqrt.pop %v4053
        %v4198 = vrsqrt.pop %v4054
        %v4199 = vrsqrt.pop %v4055
        %v4200 = vrsqrt.pop %v4056
        %v4201 = vrsqrt.pop %v4057
        %v4202 = vrsqrt.pop %v4058
        %v4203 = vrsqrt.pop %v4059
        %v4204 = vrsqrt.pop %v4060
        %v4205 = vrsqrt.pop %v4061
        %v4206 = vrsqrt.pop %v4062
        %v4207 = vrsqrt.pop %v4063
        %v4208 = vrsqrt.pop %v4064
        %v4209 = vrsqrt.pop %v4065
        %v4210 = vrsqrt.pop %v4066
        %v4211 = vrsqrt.pop %v4067
        %v4212 = vrsqrt.pop %v4068
        %v4213 = vrsqrt.pop %v4069
        %v4214 = vrsqrt.pop %v4070
        %v4215 = vrsqrt.pop %v4071
        %v4216 = vrsqrt.pop %v4072
        %v4217 = vrsqrt.pop %v4073
        %v4218 = vrsqrt.pop %v4074
        %v4219 = vrsqrt.pop %v4075
        %v4220 = vrsqrt.pop %v4076
        %v4221 = vrsqrt.pop %v4077
        %v4222 = vrsqrt.pop %v4078
        %v4223 = vrsqrt.pop %v4079
        %v4224 = vrsqrt.pop %v4080
        %v4225 = vrsqrt.pop %v4081
        %v4226 = vrsqrt.pop %v4082
        %v4227 = vrsqrt.pop %v4083
        %v4228 = vrsqrt.pop %v4084
        %v4229 = vrsqrt.pop %v4085
        %v4230 = vrsqrt.pop %v4086
        %v4231 = vrsqrt.pop %v4087
        %v4232 = vrsqrt.pop %v4088
        %v4233 = vrsqrt.pop %v4089
        %v4234 = vrsqrt.pop %v4090
        %v4235 = vrsqrt.pop %v4091
        %v4236 = vrsqrt.pop %v4092
        %v4237 = vrsqrt.pop %v4093
        %v4238 = vrsqrt.pop %v4094
        %v4239 = vrsqrt.pop %v4095
        %v4240 = vrsqrt.pop %v4096
        %v4241 = vrsqrt.pop %v4097
        %v4242 = vrsqrt.pop %v4098
        %v4243 = vrsqrt.pop %v4099
        %v4244 = vrsqrt.pop %v4100
        %v4245 = vrsqrt.pop %v4101
        %v4246 = vrsqrt.pop %v4102
        %v4247 = vrsqrt.pop %v4103
        %v4248 = vrsqrt.pop %v4104
        %v4249 = vrsqrt.pop %v4105
        %v4250 = vrsqrt.pop %v4106
        %v4251 = vrsqrt.pop %v4107
        %v4252 = vrsqrt.pop %v4108
        %v4253 = vrsqrt.pop %v4109
        %v4254 = vrsqrt.pop %v4110
        %v4255 = vrsqrt.pop %v4111
        %v4256 = vrsqrt.pop %v4112
        %v4257 = vrsqrt.pop %v4113
        %v4258 = vrsqrt.pop %v4114
        %v4259 = vrsqrt.pop %v4115
        %v4260 = vrsqrt.pop %v4116
        %v4261 = vrsqrt.pop %v4117
        %v4262 = vrsqrt.pop %v4118
        %v4263 = vrsqrt.pop %v4119
        %v4264 = vrsqrt.pop %v4120
        %v4265 = vrsqrt.pop %v4121
        %v4266 = vrsqrt.pop %v4122
        %v4267 = vrsqrt.pop %v4123
        %v4268 = vrsqrt.pop %v4124
        %v4269 = vrsqrt.pop %v4125
        %v4270 = vrsqrt.pop %v4126
        %v4271 = vrsqrt.pop %v4127
        %v4272 = vrsqrt.pop %v4128
        %v4273 = vrsqrt.pop %v4129
        %v4274 = vrsqrt.pop %v4130
        %v4275 = vrsqrt.pop %v4131
        %v4276 = vrsqrt.pop %v4132
        %v4277 = vrsqrt.pop %v4133
        %v4278 = vrsqrt.pop %v4134
        %v4279 = vrsqrt.pop %v4135
        %v4280 = vrsqrt.pop %v4136
        %v4281 = vrsqrt.pop %v4137
        %v4282 = vrsqrt.pop %v4138
        %v4283 = vrsqrt.pop %v4139
        %v4284 = vrsqrt.pop %v4140
        %v4285 = vrsqrt.pop %v4141
        %v4286 = vrsqrt.pop %v4142
        %v4287 = vrsqrt.pop %v4143
        %v4288 = vrsqrt.pop %v4144
        %v4289 = vrsqrt.pop %v4145
        %v4290 = vrsqrt.pop %v4146
        %v4291 = vrsqrt.pop %v4147
        %v4292 = vrsqrt.pop %v4148
        %v4293 = vrsqrt.pop %v4149
        %v4294 = vrsqrt.pop %v4150
        %v4295 = vrsqrt.pop %v4151
        %v4296 = vrsqrt.pop %v4152
        %v4297 = vrsqrt.pop %v4153
        %v4298 = vrsqrt.pop %v4154
        %v4299 = vrsqrt.pop %v4155
        %v4300 = vrsqrt.pop %v4156
        %v4301 = vrsqrt.pop %v4157
        %v4302 = vrsqrt.pop %v4158
        %v4303 = vrsqrt.pop %v4159
        %v4304 = vrsqrt.pop %v4160
        %v4305 = vrsqrt.pop %v4161
        %v4306 = vrsqrt.pop %v4162
        %v4307 = vrsqrt.pop %v4163
        %v4308 = vrsqrt.pop %v4164
        %v4309 = vrsqrt.pop %v4165
        %v4310 = vmul.f32 %v3750, %v4166
        %v4311 = vmul.f32 %v3751, %v4167
        %v4312 = vmul.f32 %v3752, %v4168
        %v4313 = vmul.f32 %v3753, %v4169
        %v4314 = vmul.f32 %v3754, %v4170
        %v4315 = vmul.f32 %v3755, %v4171
        %v4316 = vmul.f32 %v3756, %v4172
        %v4317 = vmul.f32 %v3757, %v4173
        %v4318 = vmul.f32 %v3758, %v4174
        %v4319 = vmul.f32 %v3759, %v4175
        %v4320 = vmul.f32 %v3760, %v4176
        %v4321 = vmul.f32 %v3761, %v4177
        %v4322 = vmul.f32 %v3762, %v4178
        %v4323 = vmul.f32 %v3763, %v4179
        %v4324 = vmul.f32 %v3764, %v4180
        %v4325 = vmul.f32 %v3765, %v4181
        %v4326 = vmul.f32 %v3782, %v4182
        %v4327 = vmul.f32 %v3783, %v4183
        %v4328 = vmul.f32 %v3784, %v4184
        %v4329 = vmul.f32 %v3785, %v4185
        %v4330 = vmul.f32 %v3786, %v4186
        %v4331 = vmul.f32 %v3787, %v4187
        %v4332 = vmul.f32 %v3788, %v4188
        %v4333 = vmul.f32 %v3789, %v4189
        %v4334 = vmul.f32 %v3790, %v4190
        %v4335 = vmul.f32 %v3791, %v4191
        %v4336 = vmul.f32 %v3792, %v4192
        %v4337 = vmul.f32 %v3793, %v4193
        %v4338 = vmul.f32 %v3794, %v4194
        %v4339 = vmul.f32 %v3795, %v4195
        %v4340 = vmul.f32 %v3796, %v4196
        %v4341 = vmul.f32 %v3797, %v4197
        %v4342 = vmul.f32 %v3814, %v4198
        %v4343 = vmul.f32 %v3815, %v4199
        %v4344 = vmul.f32 %v3816, %v4200
        %v4345 = vmul.f32 %v3817, %v4201
        %v4346 = vmul.f32 %v3818, %v4202
        %v4347 = vmul.f32 %v3819, %v4203
        %v4348 = vmul.f32 %v3820, %v4204
        %v4349 = vmul.f32 %v3821, %v4205
        %v4350 = vmul.f32 %v3822, %v4206
        %v4351 = vmul.f32 %v3823, %v4207
        %v4352 = vmul.f32 %v3824, %v4208
        %v4353 = vmul.f32 %v3825, %v4209
        %v4354 = vmul.f32 %v3826, %v4210
        %v4355 = vmul.f32 %v3827, %v4211
        %v4356 = vmul.f32 %v3828, %v4212
        %v4357 = vmul.f32 %v3829, %v4213
        %v4358 = vmul.f32 %v3846, %v4214
        %v4359 = vmul.f32 %v3847, %v4215
        %v4360 = vmul.f32 %v3848, %v4216
        %v4361 = vmul.f32 %v3849, %v4217
        %v4362 = vmul.f32 %v3850, %v4218
        %v4363 = vmul.f32 %v3851, %v4219
        %v4364 = vmul.f32 %v3852, %v4220
        %v4365 = vmul.f32 %v3853, %v4221
        %v4366 = vmul.f32 %v3854, %v4222
        %v4367 = vmul.f32 %v3855, %v4223
        %v4368 = vmul.f32 %v3856, %v4224
        %v4369 = vmul.f32 %v3857, %v4225
        %v4370 = vmul.f32 %v3858, %v4226
        %v4371 = vmul.f32 %v3859, %v4227
        %v4372 = vmul.f32 %v3860, %v4228
        %v4373 = vmul.f32 %v3861, %v4229
        %v4374 = vmul.f32 %v3878, %v4230
        %v4375 = vmul.f32 %v3879, %v4231
        %v4376 = vmul.f32 %v3880, %v4232
        %v4377 = vmul.f32 %v3881, %v4233
        %v4378 = vmul.f32 %v3882, %v4234
        %v4379 = vmul.f32 %v3883, %v4235
        %v4380 = vmul.f32 %v3884, %v4236
        %v4381 = vmul.f32 %v3885, %v4237
        %v4382 = vmul.f32 %v3886, %v4238
        %v4383 = vmul.f32 %v3887, %v4239
        %v4384 = vmul.f32 %v3888, %v4240
        %v4385 = vmul.f32 %v3889, %v4241
        %v4386 = vmul.f32 %v3890, %v4242
        %v4387 = vmul.f32 %v3891, %v4243
        %v4388 = vmul.f32 %v3892, %v4244
        %v4389 = vmul.f32 %v3893, %v4245
        %v4390 = vmul.f32 %v3910, %v4246
        %v4391 = vmul.f32 %v3911, %v4247
        %v4392 = vmul.f32 %v3912, %v4248
        %v4393 = vmul.f32 %v3913, %v4249
        %v4394 = vmul.f32 %v3914, %v4250
        %v4395 = vmul.f32 %v3915, %v4251
        %v4396 = vmul.f32 %v3916, %v4252
        %v4397 = vmul.f32 %v3917, %v4253
        %v4398 = vmul.f32 %v3918, %v4254
        %v4399 = vmul.f32 %v3919, %v4255
        %v4400 = vmul.f32 %v3920, %v4256
        %v4401 = vmul.f32 %v3921, %v4257
        %v4402 = vmul.f32 %v3922, %v4258
        %v4403 = vmul.f32 %v3923, %v4259
        %v4404 = vmul.f32 %v3924, %v4260
        %v4405 = vmul.f32 %v3925, %v4261
        %v4406 = vmul.f32 %v3942, %v4262
        %v4407 = vmul.f32 %v3943, %v4263
        %v4408 = vmul.f32 %v3944, %v4264
        %v4409 = vmul.f32 %v3945, %v4265
        %v4410 = vmul.f32 %v3946, %v4266
        %v4411 = vmul.f32 %v3947, %v4267
        %v4412 = vmul.f32 %v3948, %v4268
        %v4413 = vmul.f32 %v3949, %v4269
        %v4414 = vmul.f32 %v3950, %v4270
        %v4415 = vmul.f32 %v3951, %v4271
        %v4416 = vmul.f32 %v3952, %v4272
        %v4417 = vmul.f32 %v3953, %v4273
        %v4418 = vmul.f32 %v3954, %v4274
        %v4419 = vmul.f32 %v3955, %v4275
        %v4420 = vmul.f32 %v3956, %v4276
        %v4421 = vmul.f32 %v3957, %v4277
        %v4422 = vmul.f32 %v3974, %v4278
        %v4423 = vmul.f32 %v3975, %v4279
        %v4424 = vmul.f32 %v3976, %v4280
        %v4425 = vmul.f32 %v3977, %v4281
        %v4426 = vmul.f32 %v3978, %v4282
        %v4427 = vmul.f32 %v3979, %v4283
        %v4428 = vmul.f32 %v3980, %v4284
        %v4429 = vmul.f32 %v3981, %v4285
        %v4430 = vmul.f32 %v3982, %v4286
        %v4431 = vmul.f32 %v3983, %v4287
        %v4432 = vmul.f32 %v3984, %v4288
        %v4433 = vmul.f32 %v3985, %v4289
        %v4434 = vmul.f32 %v3986, %v4290
        %v4435 = vmul.f32 %v3987, %v4291
        %v4436 = vmul.f32 %v3988, %v4292
        %v4437 = vmul.f32 %v3989, %v4293
        %v4438 = vmul.f32 %v4006, %v4294
        %v4439 = vmul.f32 %v4007, %v4295
        %v4440 = vmul.f32 %v4008, %v4296
        %v4441 = vmul.f32 %v4009, %v4297
        %v4442 = vmul.f32 %v4010, %v4298
        %v4443 = vmul.f32 %v4011, %v4299
        %v4444 = vmul.f32 %v4012, %v4300
        %v4445 = vmul.f32 %v4013, %v4301
        %v4446 = vmul.f32 %v4014, %v4302
        %v4447 = vmul.f32 %v4015, %v4303
        %v4448 = vmul.f32 %v4016, %v4304
        %v4449 = vmul.f32 %v4017, %v4305
        %v4450 = vmul.f32 %v4018, %v4306
        %v4451 = vmul.f32 %v4019, %v4307
        %v4452 = vmul.f32 %v4020, %v4308
        %v4453 = vmul.f32 %v4021, %v4309
        %4455 = vset.pattern.permute.xlu0 0
        %4456 = vperm.xlu0 %4455, %v4310
        %v4457 = vpop.permute.xlu0 %4456
        %4460 = vset.pattern.permute.xlu0 0
        %4461 = vperm.xlu0 %4460, %v4311
        %v4462 = vpop.permute.xlu0 %4461
        %4465 = vset.pattern.permute.xlu0 0
        %4466 = vperm.xlu0 %4465, %v4312
        %v4467 = vpop.permute.xlu0 %4466
        %4470 = vset.pattern.permute.xlu0 0
        %4471 = vperm.xlu0 %4470, %v4313
        %v4472 = vpop.permute.xlu0 %4471
        %4475 = vset.pattern.permute.xlu0 0
        %4476 = vperm.xlu0 %4475, %v4314
        %v4477 = vpop.permute.xlu0 %4476
        %4480 = vset.pattern.permute.xlu0 0
        %4481 = vperm.xlu0 %4480, %v4315
        %v4482 = vpop.permute.xlu0 %4481
        %4485 = vset.pattern.permute.xlu0 0
        %4486 = vperm.xlu0 %4485, %v4316
        %v4487 = vpop.permute.xlu0 %4486
        %4490 = vset.pattern.permute.xlu0 0
        %4491 = vperm.xlu0 %4490, %v4317
        %v4492 = vpop.permute.xlu0 %4491
        %4495 = vset.pattern.permute.xlu0 0
        %4496 = vperm.xlu0 %4495, %v4318
        %v4497 = vpop.permute.xlu0 %4496
        %4500 = vset.pattern.permute.xlu0 0
        %4501 = vperm.xlu0 %4500, %v4319
        %v4502 = vpop.permute.xlu0 %4501
        %4505 = vset.pattern.permute.xlu0 0
        %4506 = vperm.xlu0 %4505, %v4320
        %v4507 = vpop.permute.xlu0 %4506
        %4510 = vset.pattern.permute.xlu0 0
        %4511 = vperm.xlu0 %4510, %v4321
        %v4512 = vpop.permute.xlu0 %4511
        %4515 = vset.pattern.permute.xlu0 0
        %4516 = vperm.xlu0 %4515, %v4322
        %v4517 = vpop.permute.xlu0 %4516
        %4520 = vset.pattern.permute.xlu0 0
        %4521 = vperm.xlu0 %4520, %v4323
        %v4522 = vpop.permute.xlu0 %4521
        %4525 = vset.pattern.permute.xlu0 0
        %4526 = vperm.xlu0 %4525, %v4324
        %v4527 = vpop.permute.xlu0 %4526
        %4530 = vset.pattern.permute.xlu0 0
        %4531 = vperm.xlu0 %4530, %v4325
        %v4532 = vpop.permute.xlu0 %4531
        %4535 = vset.pattern.permute.xlu0 0
        %4536 = vperm.xlu0 %4535, %v4326
        %v4537 = vpop.permute.xlu0 %4536
        %4540 = vset.pattern.permute.xlu0 0
        %4541 = vperm.xlu0 %4540, %v4327
        %v4542 = vpop.permute.xlu0 %4541
        %4545 = vset.pattern.permute.xlu0 0
        %4546 = vperm.xlu0 %4545, %v4328
        %v4547 = vpop.permute.xlu0 %4546
        %4550 = vset.pattern.permute.xlu0 0
        %4551 = vperm.xlu0 %4550, %v4329
        %v4552 = vpop.permute.xlu0 %4551
        %4555 = vset.pattern.permute.xlu0 0
        %4556 = vperm.xlu0 %4555, %v4330
        %v4557 = vpop.permute.xlu0 %4556
        %4560 = vset.pattern.permute.xlu0 0
        %4561 = vperm.xlu0 %4560, %v4331
        %v4562 = vpop.permute.xlu0 %4561
        %4565 = vset.pattern.permute.xlu0 0
        %4566 = vperm.xlu0 %4565, %v4332
        %v4567 = vpop.permute.xlu0 %4566
        %4570 = vset.pattern.permute.xlu0 0
        %4571 = vperm.xlu0 %4570, %v4333
        %v4572 = vpop.permute.xlu0 %4571
        %4575 = vset.pattern.permute.xlu0 0
        %4576 = vperm.xlu0 %4575, %v4334
        %v4577 = vpop.permute.xlu0 %4576
        %4580 = vset.pattern.permute.xlu0 0
        %4581 = vperm.xlu0 %4580, %v4335
        %v4582 = vpop.permute.xlu0 %4581
        %4585 = vset.pattern.permute.xlu0 0
        %4586 = vperm.xlu0 %4585, %v4336
        %v4587 = vpop.permute.xlu0 %4586
        %4590 = vset.pattern.permute.xlu0 0
        %4591 = vperm.xlu0 %4590, %v4337
        %v4592 = vpop.permute.xlu0 %4591
        %4595 = vset.pattern.permute.xlu0 0
        %4596 = vperm.xlu0 %4595, %v4338
        %v4597 = vpop.permute.xlu0 %4596
        %4600 = vset.pattern.permute.xlu0 0
        %4601 = vperm.xlu0 %4600, %v4339
        %v4602 = vpop.permute.xlu0 %4601
        %4605 = vset.pattern.permute.xlu0 0
        %4606 = vperm.xlu0 %4605, %v4340
        %v4607 = vpop.permute.xlu0 %4606
        %4610 = vset.pattern.permute.xlu0 0
        %4611 = vperm.xlu0 %4610, %v4341
        %v4612 = vpop.permute.xlu0 %4611
        %4615 = vset.pattern.permute.xlu0 0
        %4616 = vperm.xlu0 %4615, %v4342
        %v4617 = vpop.permute.xlu0 %4616
        %4620 = vset.pattern.permute.xlu0 0
        %4621 = vperm.xlu0 %4620, %v4343
        %v4622 = vpop.permute.xlu0 %4621
        %4625 = vset.pattern.permute.xlu0 0
        %4626 = vperm.xlu0 %4625, %v4344
        %v4627 = vpop.permute.xlu0 %4626
        %4630 = vset.pattern.permute.xlu0 0
        %4631 = vperm.xlu0 %4630, %v4345
        %v4632 = vpop.permute.xlu0 %4631
        %4635 = vset.pattern.permute.xlu0 0
        %4636 = vperm.xlu0 %4635, %v4346
        %v4637 = vpop.permute.xlu0 %4636
        %4640 = vset.pattern.permute.xlu0 0
        %4641 = vperm.xlu0 %4640, %v4347
        %v4642 = vpop.permute.xlu0 %4641
        %4645 = vset.pattern.permute.xlu0 0
        %4646 = vperm.xlu0 %4645, %v4348
        %v4647 = vpop.permute.xlu0 %4646
        %4650 = vset.pattern.permute.xlu0 0
        %4651 = vperm.xlu0 %4650, %v4349
        %v4652 = vpop.permute.xlu0 %4651
        %4655 = vset.pattern.permute.xlu0 0
        %4656 = vperm.xlu0 %4655, %v4350
        %v4657 = vpop.permute.xlu0 %4656
        %4660 = vset.pattern.permute.xlu0 0
        %4661 = vperm.xlu0 %4660, %v4351
        %v4662 = vpop.permute.xlu0 %4661
        %4665 = vset.pattern.permute.xlu0 0
        %4666 = vperm.xlu0 %4665, %v4352
        %v4667 = vpop.permute.xlu0 %4666
        %4670 = vset.pattern.permute.xlu0 0
        %4671 = vperm.xlu0 %4670, %v4353
        %v4672 = vpop.permute.xlu0 %4671
        %4675 = vset.pattern.permute.xlu0 0
        %4676 = vperm.xlu0 %4675, %v4354
        %v4677 = vpop.permute.xlu0 %4676
        %4680 = vset.pattern.permute.xlu0 0
        %4681 = vperm.xlu0 %4680, %v4355
        %v4682 = vpop.permute.xlu0 %4681
        %4685 = vset.pattern.permute.xlu0 0
        %4686 = vperm.xlu0 %4685, %v4356
        %v4687 = vpop.permute.xlu0 %4686
        %4690 = vset.pattern.permute.xlu0 0
        %4691 = vperm.xlu0 %4690, %v4357
        %v4692 = vpop.permute.xlu0 %4691
        %4695 = vset.pattern.permute.xlu0 0
        %4696 = vperm.xlu0 %4695, %v4358
        %v4697 = vpop.permute.xlu0 %4696
        %4700 = vset.pattern.permute.xlu0 0
        %4701 = vperm.xlu0 %4700, %v4359
        %v4702 = vpop.permute.xlu0 %4701
        %4705 = vset.pattern.permute.xlu0 0
        %4706 = vperm.xlu0 %4705, %v4360
        %v4707 = vpop.permute.xlu0 %4706
        %4710 = vset.pattern.permute.xlu0 0
        %4711 = vperm.xlu0 %4710, %v4361
        %v4712 = vpop.permute.xlu0 %4711
        %4715 = vset.pattern.permute.xlu0 0
        %4716 = vperm.xlu0 %4715, %v4362
        %v4717 = vpop.permute.xlu0 %4716
        %4720 = vset.pattern.permute.xlu0 0
        %4721 = vperm.xlu0 %4720, %v4363
        %v4722 = vpop.permute.xlu0 %4721
        %4725 = vset.pattern.permute.xlu0 0
        %4726 = vperm.xlu0 %4725, %v4364
        %v4727 = vpop.permute.xlu0 %4726
        %4730 = vset.pattern.permute.xlu0 0
        %4731 = vperm.xlu0 %4730, %v4365
        %v4732 = vpop.permute.xlu0 %4731
        %4735 = vset.pattern.permute.xlu0 0
        %4736 = vperm.xlu0 %4735, %v4366
        %v4737 = vpop.permute.xlu0 %4736
        %4740 = vset.pattern.permute.xlu0 0
        %4741 = vperm.xlu0 %4740, %v4367
        %v4742 = vpop.permute.xlu0 %4741
        %4745 = vset.pattern.permute.xlu0 0
        %4746 = vperm.xlu0 %4745, %v4368
        %v4747 = vpop.permute.xlu0 %4746
        %4750 = vset.pattern.permute.xlu0 0
        %4751 = vperm.xlu0 %4750, %v4369
        %v4752 = vpop.permute.xlu0 %4751
        %4755 = vset.pattern.permute.xlu0 0
        %4756 = vperm.xlu0 %4755, %v4370
        %v4757 = vpop.permute.xlu0 %4756
        %4760 = vset.pattern.permute.xlu0 0
        %4761 = vperm.xlu0 %4760, %v4371
        %v4762 = vpop.permute.xlu0 %4761
        %4765 = vset.pattern.permute.xlu0 0
        %4766 = vperm.xlu0 %4765, %v4372
        %v4767 = vpop.permute.xlu0 %4766
        %4770 = vset.pattern.permute.xlu0 0
        %4771 = vperm.xlu0 %4770, %v4373
        %v4772 = vpop.permute.xlu0 %4771
        %4775 = vset.pattern.permute.xlu0 0
        %4776 = vperm.xlu0 %4775, %v4374
        %v4777 = vpop.permute.xlu0 %4776
        %4780 = vset.pattern.permute.xlu0 0
        %4781 = vperm.xlu0 %4780, %v4375
        %v4782 = vpop.permute.xlu0 %4781
        %4785 = vset.pattern.permute.xlu0 0
        %4786 = vperm.xlu0 %4785, %v4376
        %v4787 = vpop.permute.xlu0 %4786
        %4790 = vset.pattern.permute.xlu0 0
        %4791 = vperm.xlu0 %4790, %v4377
        %v4792 = vpop.permute.xlu0 %4791
        %4795 = vset.pattern.permute.xlu0 0
        %4796 = vperm.xlu0 %4795, %v4378
        %v4797 = vpop.permute.xlu0 %4796
        %4800 = vset.pattern.permute.xlu0 0
        %4801 = vperm.xlu0 %4800, %v4379
        %v4802 = vpop.permute.xlu0 %4801
        %4805 = vset.pattern.permute.xlu0 0
        %4806 = vperm.xlu0 %4805, %v4380
        %v4807 = vpop.permute.xlu0 %4806
        %4810 = vset.pattern.permute.xlu0 0
        %4811 = vperm.xlu0 %4810, %v4381
        %v4812 = vpop.permute.xlu0 %4811
        %4815 = vset.pattern.permute.xlu0 0
        %4816 = vperm.xlu0 %4815, %v4382
        %v4817 = vpop.permute.xlu0 %4816
        %4820 = vset.pattern.permute.xlu0 0
        %4821 = vperm.xlu0 %4820, %v4383
        %v4822 = vpop.permute.xlu0 %4821
        %4825 = vset.pattern.permute.xlu0 0
        %4826 = vperm.xlu0 %4825, %v4384
        %v4827 = vpop.permute.xlu0 %4826
        %4830 = vset.pattern.permute.xlu0 0
        %4831 = vperm.xlu0 %4830, %v4385
        %v4832 = vpop.permute.xlu0 %4831
        %4835 = vset.pattern.permute.xlu0 0
        %4836 = vperm.xlu0 %4835, %v4386
        %v4837 = vpop.permute.xlu0 %4836
        %4840 = vset.pattern.permute.xlu0 0
        %4841 = vperm.xlu0 %4840, %v4387
        %v4842 = vpop.permute.xlu0 %4841
        %4845 = vset.pattern.permute.xlu0 0
        %4846 = vperm.xlu0 %4845, %v4388
        %v4847 = vpop.permute.xlu0 %4846
        %4850 = vset.pattern.permute.xlu0 0
        %4851 = vperm.xlu0 %4850, %v4389
        %v4852 = vpop.permute.xlu0 %4851
        %4855 = vset.pattern.permute.xlu0 0
        %4856 = vperm.xlu0 %4855, %v4390
        %v4857 = vpop.permute.xlu0 %4856
        %4860 = vset.pattern.permute.xlu0 0
        %4861 = vperm.xlu0 %4860, %v4391
        %v4862 = vpop.permute.xlu0 %4861
        %4865 = vset.pattern.permute.xlu0 0
        %4866 = vperm.xlu0 %4865, %v4392
        %v4867 = vpop.permute.xlu0 %4866
        %4870 = vset.pattern.permute.xlu0 0
        %4871 = vperm.xlu0 %4870, %v4393
        %v4872 = vpop.permute.xlu0 %4871
        %4875 = vset.pattern.permute.xlu0 0
        %4876 = vperm.xlu0 %4875, %v4394
        %v4877 = vpop.permute.xlu0 %4876
        %4880 = vset.pattern.permute.xlu0 0
        %4881 = vperm.xlu0 %4880, %v4395
        %v4882 = vpop.permute.xlu0 %4881
        %4885 = vset.pattern.permute.xlu0 0
        %4886 = vperm.xlu0 %4885, %v4396
        %v4887 = vpop.permute.xlu0 %4886
        %4890 = vset.pattern.permute.xlu0 0
        %4891 = vperm.xlu0 %4890, %v4397
        %v4892 = vpop.permute.xlu0 %4891
        %4895 = vset.pattern.permute.xlu0 0
        %4896 = vperm.xlu0 %4895, %v4398
        %v4897 = vpop.permute.xlu0 %4896
        %4900 = vset.pattern.permute.xlu0 0
        %4901 = vperm.xlu0 %4900, %v4399
        %v4902 = vpop.permute.xlu0 %4901
        %4905 = vset.pattern.permute.xlu0 0
        %4906 = vperm.xlu0 %4905, %v4400
        %v4907 = vpop.permute.xlu0 %4906
        %4910 = vset.pattern.permute.xlu0 0
        %4911 = vperm.xlu0 %4910, %v4401
        %v4912 = vpop.permute.xlu0 %4911
        %4915 = vset.pattern.permute.xlu0 0
        %4916 = vperm.xlu0 %4915, %v4402
        %v4917 = vpop.permute.xlu0 %4916
        %4920 = vset.pattern.permute.xlu0 0
        %4921 = vperm.xlu0 %4920, %v4403
        %v4922 = vpop.permute.xlu0 %4921
        %4925 = vset.pattern.permute.xlu0 0
        %4926 = vperm.xlu0 %4925, %v4404
        %v4927 = vpop.permute.xlu0 %4926
        %4930 = vset.pattern.permute.xlu0 0
        %4931 = vperm.xlu0 %4930, %v4405
        %v4932 = vpop.permute.xlu0 %4931
        %4935 = vset.pattern.permute.xlu0 0
        %4936 = vperm.xlu0 %4935, %v4406
        %v4937 = vpop.permute.xlu0 %4936
        %4940 = vset.pattern.permute.xlu0 0
        %4941 = vperm.xlu0 %4940, %v4407
        %v4942 = vpop.permute.xlu0 %4941
        %4945 = vset.pattern.permute.xlu0 0
        %4946 = vperm.xlu0 %4945, %v4408
        %v4947 = vpop.permute.xlu0 %4946
        %4950 = vset.pattern.permute.xlu0 0
        %4951 = vperm.xlu0 %4950, %v4409
        %v4952 = vpop.permute.xlu0 %4951
        %4955 = vset.pattern.permute.xlu0 0
        %4956 = vperm.xlu0 %4955, %v4410
        %v4957 = vpop.permute.xlu0 %4956
        %4960 = vset.pattern.permute.xlu0 0
        %4961 = vperm.xlu0 %4960, %v4411
        %v4962 = vpop.permute.xlu0 %4961
        %4965 = vset.pattern.permute.xlu0 0
        %4966 = vperm.xlu0 %4965, %v4412
        %v4967 = vpop.permute.xlu0 %4966
        %4970 = vset.pattern.permute.xlu0 0
        %4971 = vperm.xlu0 %4970, %v4413
        %v4972 = vpop.permute.xlu0 %4971
        %4975 = vset.pattern.permute.xlu0 0
        %4976 = vperm.xlu0 %4975, %v4414
        %v4977 = vpop.permute.xlu0 %4976
        %4980 = vset.pattern.permute.xlu0 0
        %4981 = vperm.xlu0 %4980, %v4415
        %v4982 = vpop.permute.xlu0 %4981
        %4985 = vset.pattern.permute.xlu0 0
        %4986 = vperm.xlu0 %4985, %v4416
        %v4987 = vpop.permute.xlu0 %4986
        %4990 = vset.pattern.permute.xlu0 0
        %4991 = vperm.xlu0 %4990, %v4417
        %v4992 = vpop.permute.xlu0 %4991
        %4995 = vset.pattern.permute.xlu0 0
        %4996 = vperm.xlu0 %4995, %v4418
        %v4997 = vpop.permute.xlu0 %4996
        %5000 = vset.pattern.permute.xlu0 0
        %5001 = vperm.xlu0 %5000, %v4419
        %v5002 = vpop.permute.xlu0 %5001
        %5005 = vset.pattern.permute.xlu0 0
        %5006 = vperm.xlu0 %5005, %v4420
        %v5007 = vpop.permute.xlu0 %5006
        %5010 = vset.pattern.permute.xlu0 0
        %5011 = vperm.xlu0 %5010, %v4421
        %v5012 = vpop.permute.xlu0 %5011
        %5015 = vset.pattern.permute.xlu0 0
        %5016 = vperm.xlu0 %5015, %v4422
        %v5017 = vpop.permute.xlu0 %5016
        %5020 = vset.pattern.permute.xlu0 0
        %5021 = vperm.xlu0 %5020, %v4423
        %v5022 = vpop.permute.xlu0 %5021
        %5025 = vset.pattern.permute.xlu0 0
        %5026 = vperm.xlu0 %5025, %v4424
        %v5027 = vpop.permute.xlu0 %5026
        %5030 = vset.pattern.permute.xlu0 0
        %5031 = vperm.xlu0 %5030, %v4425
        %v5032 = vpop.permute.xlu0 %5031
        %5035 = vset.pattern.permute.xlu0 0
        %5036 = vperm.xlu0 %5035, %v4426
        %v5037 = vpop.permute.xlu0 %5036
        %5040 = vset.pattern.permute.xlu0 0
        %5041 = vperm.xlu0 %5040, %v4427
        %v5042 = vpop.permute.xlu0 %5041
        %5045 = vset.pattern.permute.xlu0 0
        %5046 = vperm.xlu0 %5045, %v4428
        %v5047 = vpop.permute.xlu0 %5046
        %5050 = vset.pattern.permute.xlu0 0
        %5051 = vperm.xlu0 %5050, %v4429
        %v5052 = vpop.permute.xlu0 %5051
        %5055 = vset.pattern.permute.xlu0 0
        %5056 = vperm.xlu0 %5055, %v4430
        %v5057 = vpop.permute.xlu0 %5056
        %5060 = vset.pattern.permute.xlu0 0
        %5061 = vperm.xlu0 %5060, %v4431
        %v5062 = vpop.permute.xlu0 %5061
        %5065 = vset.pattern.permute.xlu0 0
        %5066 = vperm.xlu0 %5065, %v4432
        %v5067 = vpop.permute.xlu0 %5066
        %5070 = vset.pattern.permute.xlu0 0
        %5071 = vperm.xlu0 %5070, %v4433
        %v5072 = vpop.permute.xlu0 %5071
        %5075 = vset.pattern.permute.xlu0 0
        %5076 = vperm.xlu0 %5075, %v4434
        %v5077 = vpop.permute.xlu0 %5076
        %5080 = vset.pattern.permute.xlu0 0
        %5081 = vperm.xlu0 %5080, %v4435
        %v5082 = vpop.permute.xlu0 %5081
        %5085 = vset.pattern.permute.xlu0 0
        %5086 = vperm.xlu0 %5085, %v4436
        %v5087 = vpop.permute.xlu0 %5086
        %5090 = vset.pattern.permute.xlu0 0
        %5091 = vperm.xlu0 %5090, %v4437
        %v5092 = vpop.permute.xlu0 %5091
        %5095 = vset.pattern.permute.xlu0 0
        %5096 = vperm.xlu0 %5095, %v4438
        %v5097 = vpop.permute.xlu0 %5096
        %5100 = vset.pattern.permute.xlu0 0
        %5101 = vperm.xlu0 %5100, %v4439
        %v5102 = vpop.permute.xlu0 %5101
        %5105 = vset.pattern.permute.xlu0 0
        %5106 = vperm.xlu0 %5105, %v4440
        %v5107 = vpop.permute.xlu0 %5106
        %5110 = vset.pattern.permute.xlu0 0
        %5111 = vperm.xlu0 %5110, %v4441
        %v5112 = vpop.permute.xlu0 %5111
        %5115 = vset.pattern.permute.xlu0 0
        %5116 = vperm.xlu0 %5115, %v4442
        %v5117 = vpop.permute.xlu0 %5116
        %5120 = vset.pattern.permute.xlu0 0
        %5121 = vperm.xlu0 %5120, %v4443
        %v5122 = vpop.permute.xlu0 %5121
        %5125 = vset.pattern.permute.xlu0 0
        %5126 = vperm.xlu0 %5125, %v4444
        %v5127 = vpop.permute.xlu0 %5126
        %5130 = vset.pattern.permute.xlu0 0
        %5131 = vperm.xlu0 %5130, %v4445
        %v5132 = vpop.permute.xlu0 %5131
        %5135 = vset.pattern.permute.xlu0 0
        %5136 = vperm.xlu0 %5135, %v4446
        %v5137 = vpop.permute.xlu0 %5136
        %5140 = vset.pattern.permute.xlu0 0
        %5141 = vperm.xlu0 %5140, %v4447
        %v5142 = vpop.permute.xlu0 %5141
        %5145 = vset.pattern.permute.xlu0 0
        %5146 = vperm.xlu0 %5145, %v4448
        %v5147 = vpop.permute.xlu0 %5146
        %5150 = vset.pattern.permute.xlu0 0
        %5151 = vperm.xlu0 %5150, %v4449
        %v5152 = vpop.permute.xlu0 %5151
        %5155 = vset.pattern.permute.xlu0 0
        %5156 = vperm.xlu0 %5155, %v4450
        %v5157 = vpop.permute.xlu0 %5156
        %5160 = vset.pattern.permute.xlu0 0
        %5161 = vperm.xlu0 %5160, %v4451
        %v5162 = vpop.permute.xlu0 %5161
        %5165 = vset.pattern.permute.xlu0 0
        %5166 = vperm.xlu0 %5165, %v4452
        %v5167 = vpop.permute.xlu0 %5166
        %5170 = vset.pattern.permute.xlu0 0
        %5171 = vperm.xlu0 %5170, %v4453
        %v5172 = vpop.permute.xlu0 %5171
        %v5174 = vmul.f32 %v2861, %v4457
        %v5175 = vmul.f32 %v2862, %v4462
        %v5176 = vmul.f32 %v2863, %v4467
        %v5177 = vmul.f32 %v2864, %v4472
        %v5178 = vmul.f32 %v2865, %v4477
        %v5179 = vmul.f32 %v2866, %v4482
        %v5180 = vmul.f32 %v2867, %v4487
        %v5181 = vmul.f32 %v2868, %v4492
        %v5182 = vmul.f32 %v2869, %v4497
        %v5183 = vmul.f32 %v2870, %v4502
        %v5184 = vmul.f32 %v2871, %v4507
        %v5185 = vmul.f32 %v2872, %v4512
        %v5186 = vmul.f32 %v2873, %v4517
        %v5187 = vmul.f32 %v2874, %v4522
        %v5188 = vmul.f32 %v2875, %v4527
        %v5189 = vmul.f32 %v2876, %v4532
        %v5190 = vmul.f32 %v2877, %v4537
        %v5191 = vmul.f32 %v2878, %v4542
        %v5192 = vmul.f32 %v2879, %v4547
        %v5193 = vmul.f32 %v2880, %v4552
        %v5194 = vmul.f32 %v2881, %v4557
        %v5195 = vmul.f32 %v2882, %v4562
        %v5196 = vmul.f32 %v2883, %v4567
        %v5197 = vmul.f32 %v2884, %v4572
        %v5198 = vmul.f32 %v2885, %v4577
        %v5199 = vmul.f32 %v2886, %v4582
        %v5200 = vmul.f32 %v2887, %v4587
        %v5201 = vmul.f32 %v2888, %v4592
        %v5202 = vmul.f32 %v2889, %v4597
        %v5203 = vmul.f32 %v2890, %v4602
        %v5204 = vmul.f32 %v2891, %v4607
        %v5205 = vmul.f32 %v2892, %v4612
        %v5206 = vmul.f32 %v2893, %v4617
        %v5207 = vmul.f32 %v2894, %v4622
        %v5208 = vmul.f32 %v2895, %v4627
        %v5209 = vmul.f32 %v2896, %v4632
        %v5210 = vmul.f32 %v2897, %v4637
        %v5211 = vmul.f32 %v2898, %v4642
        %v5212 = vmul.f32 %v2899, %v4647
        %v5213 = vmul.f32 %v2900, %v4652
        %v5214 = vmul.f32 %v2901, %v4657
        %v5215 = vmul.f32 %v2902, %v4662
        %v5216 = vmul.f32 %v2903, %v4667
        %v5217 = vmul.f32 %v2904, %v4672
        %v5218 = vmul.f32 %v2905, %v4677
        %v5219 = vmul.f32 %v2906, %v4682
        %v5220 = vmul.f32 %v2907, %v4687
        %v5221 = vmul.f32 %v2908, %v4692
        %v5222 = vmul.f32 %v2909, %v4697
        %v5223 = vmul.f32 %v2910, %v4702
        %v5224 = vmul.f32 %v2911, %v4707
        %v5225 = vmul.f32 %v2912, %v4712
        %v5226 = vmul.f32 %v2913, %v4717
        %v5227 = vmul.f32 %v2914, %v4722
        %v5228 = vmul.f32 %v2915, %v4727
        %v5229 = vmul.f32 %v2916, %v4732
        %v5230 = vmul.f32 %v2917, %v4737
        %v5231 = vmul.f32 %v2918, %v4742
        %v5232 = vmul.f32 %v2919, %v4747
        %v5233 = vmul.f32 %v2920, %v4752
        %v5234 = vmul.f32 %v2921, %v4757
        %v5235 = vmul.f32 %v2922, %v4762
        %v5236 = vmul.f32 %v2923, %v4767
        %v5237 = vmul.f32 %v2924, %v4772
        %v5238 = vmul.f32 %v2925, %v4777
        %v5239 = vmul.f32 %v2926, %v4782
        %v5240 = vmul.f32 %v2927, %v4787
        %v5241 = vmul.f32 %v2928, %v4792
        %v5242 = vmul.f32 %v2929, %v4797
        %v5243 = vmul.f32 %v2930, %v4802
        %v5244 = vmul.f32 %v2931, %v4807
        %v5245 = vmul.f32 %v2932, %v4812
        %v5246 = vmul.f32 %v2933, %v4817
        %v5247 = vmul.f32 %v2934, %v4822
        %v5248 = vmul.f32 %v2935, %v4827
        %v5249 = vmul.f32 %v2936, %v4832
        %v5250 = vmul.f32 %v2937, %v4837
        %v5251 = vmul.f32 %v2938, %v4842
        %v5252 = vmul.f32 %v2939, %v4847
        %v5253 = vmul.f32 %v2940, %v4852
        %v5254 = vmul.f32 %v2941, %v4857
        %v5255 = vmul.f32 %v2942, %v4862
        %v5256 = vmul.f32 %v2943, %v4867
        %v5257 = vmul.f32 %v2944, %v4872
        %v5258 = vmul.f32 %v2945, %v4877
        %v5259 = vmul.f32 %v2946, %v4882
        %v5260 = vmul.f32 %v2947, %v4887
        %v5261 = vmul.f32 %v2948, %v4892
        %v5262 = vmul.f32 %v2949, %v4897
        %v5263 = vmul.f32 %v2950, %v4902
        %v5264 = vmul.f32 %v2951, %v4907
        %v5265 = vmul.f32 %v2952, %v4912
        %v5266 = vmul.f32 %v2953, %v4917
        %v5267 = vmul.f32 %v2954, %v4922
        %v5268 = vmul.f32 %v2955, %v4927
        %v5269 = vmul.f32 %v2956, %v4932
        %v5270 = vmul.f32 %v2957, %v4937
        %v5271 = vmul.f32 %v2958, %v4942
        %v5272 = vmul.f32 %v2959, %v4947
        %v5273 = vmul.f32 %v2960, %v4952
        %v5274 = vmul.f32 %v2961, %v4957
        %v5275 = vmul.f32 %v2962, %v4962
        %v5276 = vmul.f32 %v2963, %v4967
        %v5277 = vmul.f32 %v2964, %v4972
        %v5278 = vmul.f32 %v2965, %v4977
        %v5279 = vmul.f32 %v2966, %v4982
        %v5280 = vmul.f32 %v2967, %v4987
        %v5281 = vmul.f32 %v2968, %v4992
        %v5282 = vmul.f32 %v2969, %v4997
        %v5283 = vmul.f32 %v2970, %v5002
        %v5284 = vmul.f32 %v2971, %v5007
        %v5285 = vmul.f32 %v2972, %v5012
        %v5286 = vmul.f32 %v2973, %v5017
        %v5287 = vmul.f32 %v2974, %v5022
        %v5288 = vmul.f32 %v2975, %v5027
        %v5289 = vmul.f32 %v2976, %v5032
        %v5290 = vmul.f32 %v2977, %v5037
        %v5291 = vmul.f32 %v2978, %v5042
        %v5292 = vmul.f32 %v2979, %v5047
        %v5293 = vmul.f32 %v2980, %v5052
        %v5294 = vmul.f32 %v2981, %v5057
        %v5295 = vmul.f32 %v2982, %v5062
        %v5296 = vmul.f32 %v2983, %v5067
        %v5297 = vmul.f32 %v2984, %v5072
        %v5298 = vmul.f32 %v2985, %v5077
        %v5299 = vmul.f32 %v2986, %v5082
        %v5300 = vmul.f32 %v2987, %v5087
        %v5301 = vmul.f32 %v2988, %v5092
        %v5302 = vmul.f32 %v2989, %v5097
        %v5303 = vmul.f32 %v2990, %v5102
        %v5304 = vmul.f32 %v2991, %v5107
        %v5305 = vmul.f32 %v2992, %v5112
        %v5306 = vmul.f32 %v2993, %v5117
        %v5307 = vmul.f32 %v2994, %v5122
        %v5308 = vmul.f32 %v2995, %v5127
        %v5309 = vmul.f32 %v2996, %v5132
        %v5310 = vmul.f32 %v2997, %v5137
        %v5311 = vmul.f32 %v2998, %v5142
        %v5312 = vmul.f32 %v2999, %v5147
        %v5313 = vmul.f32 %v3000, %v5152
        %v5314 = vmul.f32 %v3001, %v5157
        %v5315 = vmul.f32 %v3002, %v5162
        %v5316 = vmul.f32 %v3003, %v5167
        %v5317 = vmul.f32 %v3004, %v5172
        %5319 = vset.pattern.permute.xlu0 1
        %5320 = vperm.xlu0 %5319, %v3750
        %v5321 = vpop.permute.xlu0 %5320
        %5324 = vset.pattern.permute.xlu0 1
        %5325 = vperm.xlu0 %5324, %v3751
        %v5326 = vpop.permute.xlu0 %5325
        %5329 = vset.pattern.permute.xlu0 1
        %5330 = vperm.xlu0 %5329, %v3752
        %v5331 = vpop.permute.xlu0 %5330
        %5334 = vset.pattern.permute.xlu0 1
        %5335 = vperm.xlu0 %5334, %v3753
        %v5336 = vpop.permute.xlu0 %5335
        %5339 = vset.pattern.permute.xlu0 1
        %5340 = vperm.xlu0 %5339, %v3754
        %v5341 = vpop.permute.xlu0 %5340
        %5344 = vset.pattern.permute.xlu0 1
        %5345 = vperm.xlu0 %5344, %v3755
        %v5346 = vpop.permute.xlu0 %5345
        %5349 = vset.pattern.permute.xlu0 1
        %5350 = vperm.xlu0 %5349, %v3756
        %v5351 = vpop.permute.xlu0 %5350
        %5354 = vset.pattern.permute.xlu0 1
        %5355 = vperm.xlu0 %5354, %v3757
        %v5356 = vpop.permute.xlu0 %5355
        %5359 = vset.pattern.permute.xlu0 1
        %5360 = vperm.xlu0 %5359, %v3758
        %v5361 = vpop.permute.xlu0 %5360
        %5364 = vset.pattern.permute.xlu0 1
        %5365 = vperm.xlu0 %5364, %v3759
        %v5366 = vpop.permute.xlu0 %5365
        %5369 = vset.pattern.permute.xlu0 1
        %5370 = vperm.xlu0 %5369, %v3760
        %v5371 = vpop.permute.xlu0 %5370
        %5374 = vset.pattern.permute.xlu0 1
        %5375 = vperm.xlu0 %5374, %v3761
        %v5376 = vpop.permute.xlu0 %5375
        %5379 = vset.pattern.permute.xlu0 1
        %5380 = vperm.xlu0 %5379, %v3762
        %v5381 = vpop.permute.xlu0 %5380
        %5384 = vset.pattern.permute.xlu0 1
        %5385 = vperm.xlu0 %5384, %v3763
        %v5386 = vpop.permute.xlu0 %5385
        %5389 = vset.pattern.permute.xlu0 1
        %5390 = vperm.xlu0 %5389, %v3764
        %v5391 = vpop.permute.xlu0 %5390
        %5394 = vset.pattern.permute.xlu0 1
        %5395 = vperm.xlu0 %5394, %v3765
        %v5396 = vpop.permute.xlu0 %5395
        %5399 = vset.pattern.permute.xlu0 1
        %5400 = vperm.xlu0 %5399, %v3782
        %v5401 = vpop.permute.xlu0 %5400
        %5404 = vset.pattern.permute.xlu0 1
        %5405 = vperm.xlu0 %5404, %v3783
        %v5406 = vpop.permute.xlu0 %5405
        %5409 = vset.pattern.permute.xlu0 1
        %5410 = vperm.xlu0 %5409, %v3784
        %v5411 = vpop.permute.xlu0 %5410
        %5414 = vset.pattern.permute.xlu0 1
        %5415 = vperm.xlu0 %5414, %v3785
        %v5416 = vpop.permute.xlu0 %5415
        %5419 = vset.pattern.permute.xlu0 1
        %5420 = vperm.xlu0 %5419, %v3786
        %v5421 = vpop.permute.xlu0 %5420
        %5424 = vset.pattern.permute.xlu0 1
        %5425 = vperm.xlu0 %5424, %v3787
        %v5426 = vpop.permute.xlu0 %5425
        %5429 = vset.pattern.permute.xlu0 1
        %5430 = vperm.xlu0 %5429, %v3788
        %v5431 = vpop.permute.xlu0 %5430
        %5434 = vset.pattern.permute.xlu0 1
        %5435 = vperm.xlu0 %5434, %v3789
        %v5436 = vpop.permute.xlu0 %5435
        %5439 = vset.pattern.permute.xlu0 1
        %5440 = vperm.xlu0 %5439, %v3790
        %v5441 = vpop.permute.xlu0 %5440
        %5444 = vset.pattern.permute.xlu0 1
        %5445 = vperm.xlu0 %5444, %v3791
        %v5446 = vpop.permute.xlu0 %5445
        %5449 = vset.pattern.permute.xlu0 1
        %5450 = vperm.xlu0 %5449, %v3792
        %v5451 = vpop.permute.xlu0 %5450
        %5454 = vset.pattern.permute.xlu0 1
        %5455 = vperm.xlu0 %5454, %v3793
        %v5456 = vpop.permute.xlu0 %5455
        %5459 = vset.pattern.permute.xlu0 1
        %5460 = vperm.xlu0 %5459, %v3794
        %v5461 = vpop.permute.xlu0 %5460
        %5464 = vset.pattern.permute.xlu0 1
        %5465 = vperm.xlu0 %5464, %v3795
        %v5466 = vpop.permute.xlu0 %5465
        %5469 = vset.pattern.permute.xlu0 1
        %5470 = vperm.xlu0 %5469, %v3796
        %v5471 = vpop.permute.xlu0 %5470
        %5474 = vset.pattern.permute.xlu0 1
        %5475 = vperm.xlu0 %5474, %v3797
        %v5476 = vpop.permute.xlu0 %5475
        %5479 = vset.pattern.permute.xlu0 1
        %5480 = vperm.xlu0 %5479, %v3814
        %v5481 = vpop.permute.xlu0 %5480
        %5484 = vset.pattern.permute.xlu0 1
        %5485 = vperm.xlu0 %5484, %v3815
        %v5486 = vpop.permute.xlu0 %5485
        %5489 = vset.pattern.permute.xlu0 1
        %5490 = vperm.xlu0 %5489, %v3816
        %v5491 = vpop.permute.xlu0 %5490
        %5494 = vset.pattern.permute.xlu0 1
        %5495 = vperm.xlu0 %5494, %v3817
        %v5496 = vpop.permute.xlu0 %5495
        %5499 = vset.pattern.permute.xlu0 1
        %5500 = vperm.xlu0 %5499, %v3818
        %v5501 = vpop.permute.xlu0 %5500
        %5504 = vset.pattern.permute.xlu0 1
        %5505 = vperm.xlu0 %5504, %v3819
        %v5506 = vpop.permute.xlu0 %5505
        %5509 = vset.pattern.permute.xlu0 1
        %5510 = vperm.xlu0 %5509, %v3820
        %v5511 = vpop.permute.xlu0 %5510
        %5514 = vset.pattern.permute.xlu0 1
        %5515 = vperm.xlu0 %5514, %v3821
        %v5516 = vpop.permute.xlu0 %5515
        %5519 = vset.pattern.permute.xlu0 1
        %5520 = vperm.xlu0 %5519, %v3822
        %v5521 = vpop.permute.xlu0 %5520
        %5524 = vset.pattern.permute.xlu0 1
        %5525 = vperm.xlu0 %5524, %v3823
        %v5526 = vpop.permute.xlu0 %5525
        %5529 = vset.pattern.permute.xlu0 1
        %5530 = vperm.xlu0 %5529, %v3824
        %v5531 = vpop.permute.xlu0 %5530
        %5534 = vset.pattern.permute.xlu0 1
        %5535 = vperm.xlu0 %5534, %v3825
        %v5536 = vpop.permute.xlu0 %5535
        %5539 = vset.pattern.permute.xlu0 1
        %5540 = vperm.xlu0 %5539, %v3826
        %v5541 = vpop.permute.xlu0 %5540
        %5544 = vset.pattern.permute.xlu0 1
        %5545 = vperm.xlu0 %5544, %v3827
        %v5546 = vpop.permute.xlu0 %5545
        %5549 = vset.pattern.permute.xlu0 1
        %5550 = vperm.xlu0 %5549, %v3828
        %v5551 = vpop.permute.xlu0 %5550
        %5554 = vset.pattern.permute.xlu0 1
        %5555 = vperm.xlu0 %5554, %v3829
        %v5556 = vpop.permute.xlu0 %5555
        %5559 = vset.pattern.permute.xlu0 1
        %5560 = vperm.xlu0 %5559, %v3846
        %v5561 = vpop.permute.xlu0 %5560
        %5564 = vset.pattern.permute.xlu0 1
        %5565 = vperm.xlu0 %5564, %v3847
        %v5566 = vpop.permute.xlu0 %5565
        %5569 = vset.pattern.permute.xlu0 1
        %5570 = vperm.xlu0 %5569, %v3848
        %v5571 = vpop.permute.xlu0 %5570
        %5574 = vset.pattern.permute.xlu0 1
        %5575 = vperm.xlu0 %5574, %v3849
        %v5576 = vpop.permute.xlu0 %5575
        %5579 = vset.pattern.permute.xlu0 1
        %5580 = vperm.xlu0 %5579, %v3850
        %v5581 = vpop.permute.xlu0 %5580
        %5584 = vset.pattern.permute.xlu0 1
        %5585 = vperm.xlu0 %5584, %v3851
        %v5586 = vpop.permute.xlu0 %5585
        %5589 = vset.pattern.permute.xlu0 1
        %5590 = vperm.xlu0 %5589, %v3852
        %v5591 = vpop.permute.xlu0 %5590
        %5594 = vset.pattern.permute.xlu0 1
        %5595 = vperm.xlu0 %5594, %v3853
        %v5596 = vpop.permute.xlu0 %5595
        %5599 = vset.pattern.permute.xlu0 1
        %5600 = vperm.xlu0 %5599, %v3854
        %v5601 = vpop.permute.xlu0 %5600
        %5604 = vset.pattern.permute.xlu0 1
        %5605 = vperm.xlu0 %5604, %v3855
        %v5606 = vpop.permute.xlu0 %5605
        %5609 = vset.pattern.permute.xlu0 1
        %5610 = vperm.xlu0 %5609, %v3856
        %v5611 = vpop.permute.xlu0 %5610
        %5614 = vset.pattern.permute.xlu0 1
        %5615 = vperm.xlu0 %5614, %v3857
        %v5616 = vpop.permute.xlu0 %5615
        %5619 = vset.pattern.permute.xlu0 1
        %5620 = vperm.xlu0 %5619, %v3858
        %v5621 = vpop.permute.xlu0 %5620
        %5624 = vset.pattern.permute.xlu0 1
        %5625 = vperm.xlu0 %5624, %v3859
        %v5626 = vpop.permute.xlu0 %5625
        %5629 = vset.pattern.permute.xlu0 1
        %5630 = vperm.xlu0 %5629, %v3860
        %v5631 = vpop.permute.xlu0 %5630
        %5634 = vset.pattern.permute.xlu0 1
        %5635 = vperm.xlu0 %5634, %v3861
        %v5636 = vpop.permute.xlu0 %5635
        %5639 = vset.pattern.permute.xlu0 1
        %5640 = vperm.xlu0 %5639, %v3878
        %v5641 = vpop.permute.xlu0 %5640
        %5644 = vset.pattern.permute.xlu0 1
        %5645 = vperm.xlu0 %5644, %v3879
        %v5646 = vpop.permute.xlu0 %5645
        %5649 = vset.pattern.permute.xlu0 1
        %5650 = vperm.xlu0 %5649, %v3880
        %v5651 = vpop.permute.xlu0 %5650
        %5654 = vset.pattern.permute.xlu0 1
        %5655 = vperm.xlu0 %5654, %v3881
        %v5656 = vpop.permute.xlu0 %5655
        %5659 = vset.pattern.permute.xlu0 1
        %5660 = vperm.xlu0 %5659, %v3882
        %v5661 = vpop.permute.xlu0 %5660
        %5664 = vset.pattern.permute.xlu0 1
        %5665 = vperm.xlu0 %5664, %v3883
        %v5666 = vpop.permute.xlu0 %5665
        %5669 = vset.pattern.permute.xlu0 1
        %5670 = vperm.xlu0 %5669, %v3884
        %v5671 = vpop.permute.xlu0 %5670
        %5674 = vset.pattern.permute.xlu0 1
        %5675 = vperm.xlu0 %5674, %v3885
        %v5676 = vpop.permute.xlu0 %5675
        %5679 = vset.pattern.permute.xlu0 1
        %5680 = vperm.xlu0 %5679, %v3886
        %v5681 = vpop.permute.xlu0 %5680
        %5684 = vset.pattern.permute.xlu0 1
        %5685 = vperm.xlu0 %5684, %v3887
        %v5686 = vpop.permute.xlu0 %5685
        %5689 = vset.pattern.permute.xlu0 1
        %5690 = vperm.xlu0 %5689, %v3888
        %v5691 = vpop.permute.xlu0 %5690
        %5694 = vset.pattern.permute.xlu0 1
        %5695 = vperm.xlu0 %5694, %v3889
        %v5696 = vpop.permute.xlu0 %5695
        %5699 = vset.pattern.permute.xlu0 1
        %5700 = vperm.xlu0 %5699, %v3890
        %v5701 = vpop.permute.xlu0 %5700
        %5704 = vset.pattern.permute.xlu0 1
        %5705 = vperm.xlu0 %5704, %v3891
        %v5706 = vpop.permute.xlu0 %5705
        %5709 = vset.pattern.permute.xlu0 1
        %5710 = vperm.xlu0 %5709, %v3892
        %v5711 = vpop.permute.xlu0 %5710
        %5714 = vset.pattern.permute.xlu0 1
        %5715 = vperm.xlu0 %5714, %v3893
        %v5716 = vpop.permute.xlu0 %5715
        %5719 = vset.pattern.permute.xlu0 1
        %5720 = vperm.xlu0 %5719, %v3910
        %v5721 = vpop.permute.xlu0 %5720
        %5724 = vset.pattern.permute.xlu0 1
        %5725 = vperm.xlu0 %5724, %v3911
        %v5726 = vpop.permute.xlu0 %5725
        %5729 = vset.pattern.permute.xlu0 1
        %5730 = vperm.xlu0 %5729, %v3912
        %v5731 = vpop.permute.xlu0 %5730
        %5734 = vset.pattern.permute.xlu0 1
        %5735 = vperm.xlu0 %5734, %v3913
        %v5736 = vpop.permute.xlu0 %5735
        %5739 = vset.pattern.permute.xlu0 1
        %5740 = vperm.xlu0 %5739, %v3914
        %v5741 = vpop.permute.xlu0 %5740
        %5744 = vset.pattern.permute.xlu0 1
        %5745 = vperm.xlu0 %5744, %v3915
        %v5746 = vpop.permute.xlu0 %5745
        %5749 = vset.pattern.permute.xlu0 1
        %5750 = vperm.xlu0 %5749, %v3916
        %v5751 = vpop.permute.xlu0 %5750
        %5754 = vset.pattern.permute.xlu0 1
        %5755 = vperm.xlu0 %5754, %v3917
        %v5756 = vpop.permute.xlu0 %5755
        %5759 = vset.pattern.permute.xlu0 1
        %5760 = vperm.xlu0 %5759, %v3918
        %v5761 = vpop.permute.xlu0 %5760
        %5764 = vset.pattern.permute.xlu0 1
        %5765 = vperm.xlu0 %5764, %v3919
        %v5766 = vpop.permute.xlu0 %5765
        %5769 = vset.pattern.permute.xlu0 1
        %5770 = vperm.xlu0 %5769, %v3920
        %v5771 = vpop.permute.xlu0 %5770
        %5774 = vset.pattern.permute.xlu0 1
        %5775 = vperm.xlu0 %5774, %v3921
        %v5776 = vpop.permute.xlu0 %5775
        %5779 = vset.pattern.permute.xlu0 1
        %5780 = vperm.xlu0 %5779, %v3922
        %v5781 = vpop.permute.xlu0 %5780
        %5784 = vset.pattern.permute.xlu0 1
        %5785 = vperm.xlu0 %5784, %v3923
        %v5786 = vpop.permute.xlu0 %5785
        %5789 = vset.pattern.permute.xlu0 1
        %5790 = vperm.xlu0 %5789, %v3924
        %v5791 = vpop.permute.xlu0 %5790
        %5794 = vset.pattern.permute.xlu0 1
        %5795 = vperm.xlu0 %5794, %v3925
        %v5796 = vpop.permute.xlu0 %5795
        %5799 = vset.pattern.permute.xlu0 1
        %5800 = vperm.xlu0 %5799, %v3942
        %v5801 = vpop.permute.xlu0 %5800
        %5804 = vset.pattern.permute.xlu0 1
        %5805 = vperm.xlu0 %5804, %v3943
        %v5806 = vpop.permute.xlu0 %5805
        %5809 = vset.pattern.permute.xlu0 1
        %5810 = vperm.xlu0 %5809, %v3944
        %v5811 = vpop.permute.xlu0 %5810
        %5814 = vset.pattern.permute.xlu0 1
        %5815 = vperm.xlu0 %5814, %v3945
        %v5816 = vpop.permute.xlu0 %5815
        %5819 = vset.pattern.permute.xlu0 1
        %5820 = vperm.xlu0 %5819, %v3946
        %v5821 = vpop.permute.xlu0 %5820
        %5824 = vset.pattern.permute.xlu0 1
        %5825 = vperm.xlu0 %5824, %v3947
        %v5826 = vpop.permute.xlu0 %5825
        %5829 = vset.pattern.permute.xlu0 1
        %5830 = vperm.xlu0 %5829, %v3948
        %v5831 = vpop.permute.xlu0 %5830
        %5834 = vset.pattern.permute.xlu0 1
        %5835 = vperm.xlu0 %5834, %v3949
        %v5836 = vpop.permute.xlu0 %5835
        %5839 = vset.pattern.permute.xlu0 1
        %5840 = vperm.xlu0 %5839, %v3950
        %v5841 = vpop.permute.xlu0 %5840
        %5844 = vset.pattern.permute.xlu0 1
        %5845 = vperm.xlu0 %5844, %v3951
        %v5846 = vpop.permute.xlu0 %5845
        %5849 = vset.pattern.permute.xlu0 1
        %5850 = vperm.xlu0 %5849, %v3952
        %v5851 = vpop.permute.xlu0 %5850
        %5854 = vset.pattern.permute.xlu0 1
        %5855 = vperm.xlu0 %5854, %v3953
        %v5856 = vpop.permute.xlu0 %5855
        %5859 = vset.pattern.permute.xlu0 1
        %5860 = vperm.xlu0 %5859, %v3954
        %v5861 = vpop.permute.xlu0 %5860
        %5864 = vset.pattern.permute.xlu0 1
        %5865 = vperm.xlu0 %5864, %v3955
        %v5866 = vpop.permute.xlu0 %5865
        %5869 = vset.pattern.permute.xlu0 1
        %5870 = vperm.xlu0 %5869, %v3956
        %v5871 = vpop.permute.xlu0 %5870
        %5874 = vset.pattern.permute.xlu0 1
        %5875 = vperm.xlu0 %5874, %v3957
        %v5876 = vpop.permute.xlu0 %5875
        %5879 = vset.pattern.permute.xlu0 1
        %5880 = vperm.xlu0 %5879, %v3974
        %v5881 = vpop.permute.xlu0 %5880
        %5884 = vset.pattern.permute.xlu0 1
        %5885 = vperm.xlu0 %5884, %v3975
        %v5886 = vpop.permute.xlu0 %5885
        %5889 = vset.pattern.permute.xlu0 1
        %5890 = vperm.xlu0 %5889, %v3976
        %v5891 = vpop.permute.xlu0 %5890
        %5894 = vset.pattern.permute.xlu0 1
        %5895 = vperm.xlu0 %5894, %v3977
        %v5896 = vpop.permute.xlu0 %5895
        %5899 = vset.pattern.permute.xlu0 1
        %5900 = vperm.xlu0 %5899, %v3978
        %v5901 = vpop.permute.xlu0 %5900
        %5904 = vset.pattern.permute.xlu0 1
        %5905 = vperm.xlu0 %5904, %v3979
        %v5906 = vpop.permute.xlu0 %5905
        %5909 = vset.pattern.permute.xlu0 1
        %5910 = vperm.xlu0 %5909, %v3980
        %v5911 = vpop.permute.xlu0 %5910
        %5914 = vset.pattern.permute.xlu0 1
        %5915 = vperm.xlu0 %5914, %v3981
        %v5916 = vpop.permute.xlu0 %5915
        %5919 = vset.pattern.permute.xlu0 1
        %5920 = vperm.xlu0 %5919, %v3982
        %v5921 = vpop.permute.xlu0 %5920
        %5924 = vset.pattern.permute.xlu0 1
        %5925 = vperm.xlu0 %5924, %v3983
        %v5926 = vpop.permute.xlu0 %5925
        %5929 = vset.pattern.permute.xlu0 1
        %5930 = vperm.xlu0 %5929, %v3984
        %v5931 = vpop.permute.xlu0 %5930
        %5934 = vset.pattern.permute.xlu0 1
        %5935 = vperm.xlu0 %5934, %v3985
        %v5936 = vpop.permute.xlu0 %5935
        %5939 = vset.pattern.permute.xlu0 1
        %5940 = vperm.xlu0 %5939, %v3986
        %v5941 = vpop.permute.xlu0 %5940
        %5944 = vset.pattern.permute.xlu0 1
        %5945 = vperm.xlu0 %5944, %v3987
        %v5946 = vpop.permute.xlu0 %5945
        %5949 = vset.pattern.permute.xlu0 1
        %5950 = vperm.xlu0 %5949, %v3988
        %v5951 = vpop.permute.xlu0 %5950
        %5954 = vset.pattern.permute.xlu0 1
        %5955 = vperm.xlu0 %5954, %v3989
        %v5956 = vpop.permute.xlu0 %5955
        %5959 = vset.pattern.permute.xlu0 1
        %5960 = vperm.xlu0 %5959, %v4006
        %v5961 = vpop.permute.xlu0 %5960
        %5964 = vset.pattern.permute.xlu0 1
        %5965 = vperm.xlu0 %5964, %v4007
        %v5966 = vpop.permute.xlu0 %5965
        %5969 = vset.pattern.permute.xlu0 1
        %5970 = vperm.xlu0 %5969, %v4008
        %v5971 = vpop.permute.xlu0 %5970
        %5974 = vset.pattern.permute.xlu0 1
        %5975 = vperm.xlu0 %5974, %v4009
        %v5976 = vpop.permute.xlu0 %5975
        %5979 = vset.pattern.permute.xlu0 1
        %5980 = vperm.xlu0 %5979, %v4010
        %v5981 = vpop.permute.xlu0 %5980
        %5984 = vset.pattern.permute.xlu0 1
        %5985 = vperm.xlu0 %5984, %v4011
        %v5986 = vpop.permute.xlu0 %5985
        %5989 = vset.pattern.permute.xlu0 1
        %5990 = vperm.xlu0 %5989, %v4012
        %v5991 = vpop.permute.xlu0 %5990
        %5994 = vset.pattern.permute.xlu0 1
        %5995 = vperm.xlu0 %5994, %v4013
        %v5996 = vpop.permute.xlu0 %5995
        %5999 = vset.pattern.permute.xlu0 1
        %6000 = vperm.xlu0 %5999, %v4014
        %v6001 = vpop.permute.xlu0 %6000
        %6004 = vset.pattern.permute.xlu0 1
        %6005 = vperm.xlu0 %6004, %v4015
        %v6006 = vpop.permute.xlu0 %6005
        %6009 = vset.pattern.permute.xlu0 1
        %6010 = vperm.xlu0 %6009, %v4016
        %v6011 = vpop.permute.xlu0 %6010
        %6014 = vset.pattern.permute.xlu0 1
        %6015 = vperm.xlu0 %6014, %v4017
        %v6016 = vpop.permute.xlu0 %6015
        %6019 = vset.pattern.permute.xlu0 1
        %6020 = vperm.xlu0 %6019, %v4018
        %v6021 = vpop.permute.xlu0 %6020
        %6024 = vset.pattern.permute.xlu0 1
        %6025 = vperm.xlu0 %6024, %v4019
        %v6026 = vpop.permute.xlu0 %6025
        %6029 = vset.pattern.permute.xlu0 1
        %6030 = vperm.xlu0 %6029, %v4020
        %v6031 = vpop.permute.xlu0 %6030
        %6034 = vset.pattern.permute.xlu0 1
        %6035 = vperm.xlu0 %6034, %v4021
        %v6036 = vpop.permute.xlu0 %6035
        %v6038 = vadd.f32 %v5174, %v5321
        %v6039 = vadd.f32 %v5175, %v5326
        %v6040 = vadd.f32 %v5176, %v5331
        %v6041 = vadd.f32 %v5177, %v5336
        %v6042 = vadd.f32 %v5178, %v5341
        %v6043 = vadd.f32 %v5179, %v5346
        %v6044 = vadd.f32 %v5180, %v5351
        %v6045 = vadd.f32 %v5181, %v5356
        %v6046 = vadd.f32 %v5182, %v5361
        %v6047 = vadd.f32 %v5183, %v5366
        %v6048 = vadd.f32 %v5184, %v5371
        %v6049 = vadd.f32 %v5185, %v5376
        %v6050 = vadd.f32 %v5186, %v5381
        %v6051 = vadd.f32 %v5187, %v5386
        %v6052 = vadd.f32 %v5188, %v5391
        %v6053 = vadd.f32 %v5189, %v5396
        %v6054 = vadd.f32 %v5190, %v5401
        %v6055 = vadd.f32 %v5191, %v5406
        %v6056 = vadd.f32 %v5192, %v5411
        %v6057 = vadd.f32 %v5193, %v5416
        %v6058 = vadd.f32 %v5194, %v5421
        %v6059 = vadd.f32 %v5195, %v5426
        %v6060 = vadd.f32 %v5196, %v5431
        %v6061 = vadd.f32 %v5197, %v5436
        %v6062 = vadd.f32 %v5198, %v5441
        %v6063 = vadd.f32 %v5199, %v5446
        %v6064 = vadd.f32 %v5200, %v5451
        %v6065 = vadd.f32 %v5201, %v5456
        %v6066 = vadd.f32 %v5202, %v5461
        %v6067 = vadd.f32 %v5203, %v5466
        %v6068 = vadd.f32 %v5204, %v5471
        %v6069 = vadd.f32 %v5205, %v5476
        %v6070 = vadd.f32 %v5206, %v5481
        %v6071 = vadd.f32 %v5207, %v5486
        %v6072 = vadd.f32 %v5208, %v5491
        %v6073 = vadd.f32 %v5209, %v5496
        %v6074 = vadd.f32 %v5210, %v5501
        %v6075 = vadd.f32 %v5211, %v5506
        %v6076 = vadd.f32 %v5212, %v5511
        %v6077 = vadd.f32 %v5213, %v5516
        %v6078 = vadd.f32 %v5214, %v5521
        %v6079 = vadd.f32 %v5215, %v5526
        %v6080 = vadd.f32 %v5216, %v5531
        %v6081 = vadd.f32 %v5217, %v5536
        %v6082 = vadd.f32 %v5218, %v5541
        %v6083 = vadd.f32 %v5219, %v5546
        %v6084 = vadd.f32 %v5220, %v5551
        %v6085 = vadd.f32 %v5221, %v5556
        %v6086 = vadd.f32 %v5222, %v5561
        %v6087 = vadd.f32 %v5223, %v5566
        %v6088 = vadd.f32 %v5224, %v5571
        %v6089 = vadd.f32 %v5225, %v5576
        %v6090 = vadd.f32 %v5226, %v5581
        %v6091 = vadd.f32 %v5227, %v5586
        %v6092 = vadd.f32 %v5228, %v5591
        %v6093 = vadd.f32 %v5229, %v5596
        %v6094 = vadd.f32 %v5230, %v5601
        %v6095 = vadd.f32 %v5231, %v5606
        %v6096 = vadd.f32 %v5232, %v5611
        %v6097 = vadd.f32 %v5233, %v5616
        %v6098 = vadd.f32 %v5234, %v5621
        %v6099 = vadd.f32 %v5235, %v5626
        %v6100 = vadd.f32 %v5236, %v5631
        %v6101 = vadd.f32 %v5237, %v5636
        %v6102 = vadd.f32 %v5238, %v5641
        %v6103 = vadd.f32 %v5239, %v5646
        %v6104 = vadd.f32 %v5240, %v5651
        %v6105 = vadd.f32 %v5241, %v5656
        %v6106 = vadd.f32 %v5242, %v5661
        %v6107 = vadd.f32 %v5243, %v5666
        %v6108 = vadd.f32 %v5244, %v5671
        %v6109 = vadd.f32 %v5245, %v5676
        %v6110 = vadd.f32 %v5246, %v5681
        %v6111 = vadd.f32 %v5247, %v5686
        %v6112 = vadd.f32 %v5248, %v5691
        %v6113 = vadd.f32 %v5249, %v5696
        %v6114 = vadd.f32 %v5250, %v5701
        %v6115 = vadd.f32 %v5251, %v5706
        %v6116 = vadd.f32 %v5252, %v5711
        %v6117 = vadd.f32 %v5253, %v5716
        %v6118 = vadd.f32 %v5254, %v5721
        %v6119 = vadd.f32 %v5255, %v5726
        %v6120 = vadd.f32 %v5256, %v5731
        %v6121 = vadd.f32 %v5257, %v5736
        %v6122 = vadd.f32 %v5258, %v5741
        %v6123 = vadd.f32 %v5259, %v5746
        %v6124 = vadd.f32 %v5260, %v5751
        %v6125 = vadd.f32 %v5261, %v5756
        %v6126 = vadd.f32 %v5262, %v5761
        %v6127 = vadd.f32 %v5263, %v5766
        %v6128 = vadd.f32 %v5264, %v5771
        %v6129 = vadd.f32 %v5265, %v5776
        %v6130 = vadd.f32 %v5266, %v5781
        %v6131 = vadd.f32 %v5267, %v5786
        %v6132 = vadd.f32 %v5268, %v5791
        %v6133 = vadd.f32 %v5269, %v5796
        %v6134 = vadd.f32 %v5270, %v5801
        %v6135 = vadd.f32 %v5271, %v5806
        %v6136 = vadd.f32 %v5272, %v5811
        %v6137 = vadd.f32 %v5273, %v5816
        %v6138 = vadd.f32 %v5274, %v5821
        %v6139 = vadd.f32 %v5275, %v5826
        %v6140 = vadd.f32 %v5276, %v5831
        %v6141 = vadd.f32 %v5277, %v5836
        %v6142 = vadd.f32 %v5278, %v5841
        %v6143 = vadd.f32 %v5279, %v5846
        %v6144 = vadd.f32 %v5280, %v5851
        %v6145 = vadd.f32 %v5281, %v5856
        %v6146 = vadd.f32 %v5282, %v5861
        %v6147 = vadd.f32 %v5283, %v5866
        %v6148 = vadd.f32 %v5284, %v5871
        %v6149 = vadd.f32 %v5285, %v5876
        %v6150 = vadd.f32 %v5286, %v5881
        %v6151 = vadd.f32 %v5287, %v5886
        %v6152 = vadd.f32 %v5288, %v5891
        %v6153 = vadd.f32 %v5289, %v5896
        %v6154 = vadd.f32 %v5290, %v5901
        %v6155 = vadd.f32 %v5291, %v5906
        %v6156 = vadd.f32 %v5292, %v5911
        %v6157 = vadd.f32 %v5293, %v5916
        %v6158 = vadd.f32 %v5294, %v5921
        %v6159 = vadd.f32 %v5295, %v5926
        %v6160 = vadd.f32 %v5296, %v5931
        %v6161 = vadd.f32 %v5297, %v5936
        %v6162 = vadd.f32 %v5298, %v5941
        %v6163 = vadd.f32 %v5299, %v5946
        %v6164 = vadd.f32 %v5300, %v5951
        %v6165 = vadd.f32 %v5301, %v5956
        %v6166 = vadd.f32 %v5302, %v5961
        %v6167 = vadd.f32 %v5303, %v5966
        %v6168 = vadd.f32 %v5304, %v5971
        %v6169 = vadd.f32 %v5305, %v5976
        %v6170 = vadd.f32 %v5306, %v5981
        %v6171 = vadd.f32 %v5307, %v5986
        %v6172 = vadd.f32 %v5308, %v5991
        %v6173 = vadd.f32 %v5309, %v5996
        %v6174 = vadd.f32 %v5310, %v6001
        %v6175 = vadd.f32 %v5311, %v6006
        %v6176 = vadd.f32 %v5312, %v6011
        %v6177 = vadd.f32 %v5313, %v6016
        %v6178 = vadd.f32 %v5314, %v6021
        %v6179 = vadd.f32 %v5315, %v6026
        %v6180 = vadd.f32 %v5316, %v6031
        %v6181 = vadd.f32 %v5317, %v6036
        %6182 = vst.msk [vmem:[%s231] sm:$0xff] %vm2283, %v6038
        %6183 = vst.msk [vmem:[%s231 + $0x8] sm:$0xff] %vm2283, %v6039
        %6184 = vst.msk [vmem:[%s231 + $0x10] sm:$0xff] %vm2283, %v6040
        %6185 = vst.msk [vmem:[%s231 + $0x18] sm:$0xff] %vm2283, %v6041
        %6186 = vst.msk [vmem:[%s231 + $0x20] sm:$0xff] %vm2283, %v6042
        %6187 = vst.msk [vmem:[%s231 + $0x28] sm:$0xff] %vm2283, %v6043
        %6188 = vst.msk [vmem:[%s231 + $0x30] sm:$0xff] %vm2283, %v6044
        %6189 = vst.msk [vmem:[%s231 + $0x38] sm:$0xff] %vm2283, %v6045
        %6190 = vst.msk [vmem:[%s231 + $0x40] sm:$0xff] %vm2283, %v6046
        %6191 = vst.msk [vmem:[%s231 + $0x48] sm:$0xff] %vm2283, %v6047
        %6192 = vst.msk [vmem:[%s231 + $0x50] sm:$0xff] %vm2283, %v6048
        %6193 = vst.msk [vmem:[%s231 + $0x58] sm:$0xff] %vm2283, %v6049
        %6194 = vst.msk [vmem:[%s231 + $0x60] sm:$0xff] %vm2283, %v6050
        %6195 = vst.msk [vmem:[%s231 + $0x68] sm:$0xff] %vm2283, %v6051
        %6196 = vst.msk [vmem:[%s231 + $0x70] sm:$0xff] %vm2283, %v6052
        %6197 = vst.msk [vmem:[%s231 + $0x78] sm:$0xff] %vm2283, %v6053
        %6198 = vst.msk [vmem:[%s231 + $0x80] sm:$0xff] %vm2283, %v6054
        %6199 = vst.msk [vmem:[%s231 + $0x88] sm:$0xff] %vm2283, %v6055
        %6200 = vst.msk [vmem:[%s231 + $0x90] sm:$0xff] %vm2283, %v6056
        %6201 = vst.msk [vmem:[%s231 + $0x98] sm:$0xff] %vm2283, %v6057
        %6202 = vst.msk [vmem:[%s231 + $0xa0] sm:$0xff] %vm2283, %v6058
        %6203 = vst.msk [vmem:[%s231 + $0xa8] sm:$0xff] %vm2283, %v6059
        %6204 = vst.msk [vmem:[%s231 + $0xb0] sm:$0xff] %vm2283, %v6060
        %6205 = vst.msk [vmem:[%s231 + $0xb8] sm:$0xff] %vm2283, %v6061
        %6206 = vst.msk [vmem:[%s231 + $0xc0] sm:$0xff] %vm2283, %v6062
        %6207 = vst.msk [vmem:[%s231 + $0xc8] sm:$0xff] %vm2283, %v6063
        %6208 = vst.msk [vmem:[%s231 + $0xd0] sm:$0xff] %vm2283, %v6064
        %6209 = vst.msk [vmem:[%s231 + $0xd8] sm:$0xff] %vm2283, %v6065
        %6210 = vst.msk [vmem:[%s231 + $0xe0] sm:$0xff] %vm2283, %v6066
        %6211 = vst.msk [vmem:[%s231 + $0xe8] sm:$0xff] %vm2283, %v6067
        %6212 = vst.msk [vmem:[%s231 + $0xf0] sm:$0xff] %vm2283, %v6068
        %6213 = vst.msk [vmem:[%s231 + $0xf8] sm:$0xff] %vm2283, %v6069
        %6214 = vst.msk [vmem:[%s231 + $0x100] sm:$0xff] %vm2283, %v6070
        %6215 = vst.msk [vmem:[%s231 + $0x108] sm:$0xff] %vm2283, %v6071
        %6216 = vst.msk [vmem:[%s231 + $0x110] sm:$0xff] %vm2283, %v6072
        %6217 = vst.msk [vmem:[%s231 + $0x118] sm:$0xff] %vm2283, %v6073
        %6218 = vst.msk [vmem:[%s231 + $0x120] sm:$0xff] %vm2283, %v6074
        %6219 = vst.msk [vmem:[%s231 + $0x128] sm:$0xff] %vm2283, %v6075
        %6220 = vst.msk [vmem:[%s231 + $0x130] sm:$0xff] %vm2283, %v6076
        %6221 = vst.msk [vmem:[%s231 + $0x138] sm:$0xff] %vm2283, %v6077
        %6222 = vst.msk [vmem:[%s231 + $0x140] sm:$0xff] %vm2283, %v6078
        %6223 = vst.msk [vmem:[%s231 + $0x148] sm:$0xff] %vm2283, %v6079
        %6224 = vst.msk [vmem:[%s231 + $0x150] sm:$0xff] %vm2283, %v6080
        %6225 = vst.msk [vmem:[%s231 + $0x158] sm:$0xff] %vm2283, %v6081
        %6226 = vst.msk [vmem:[%s231 + $0x160] sm:$0xff] %vm2283, %v6082
        %6227 = vst.msk [vmem:[%s231 + $0x168] sm:$0xff] %vm2283, %v6083
        %6228 = vst.msk [vmem:[%s231 + $0x170] sm:$0xff] %vm2283, %v6084
        %6229 = vst.msk [vmem:[%s231 + $0x178] sm:$0xff] %vm2283, %v6085
        %6230 = vst.msk [vmem:[%s231 + $0x180] sm:$0xff] %vm2283, %v6086
        %6231 = vst.msk [vmem:[%s231 + $0x188] sm:$0xff] %vm2283, %v6087
        %6232 = vst.msk [vmem:[%s231 + $0x190] sm:$0xff] %vm2283, %v6088
        %6233 = vst.msk [vmem:[%s231 + $0x198] sm:$0xff] %vm2283, %v6089
        %6234 = vst.msk [vmem:[%s231 + $0x1a0] sm:$0xff] %vm2283, %v6090
        %6235 = vst.msk [vmem:[%s231 + $0x1a8] sm:$0xff] %vm2283, %v6091
        %6236 = vst.msk [vmem:[%s231 + $0x1b0] sm:$0xff] %vm2283, %v6092
        %6237 = vst.msk [vmem:[%s231 + $0x1b8] sm:$0xff] %vm2283, %v6093
        %6238 = vst.msk [vmem:[%s231 + $0x1c0] sm:$0xff] %vm2283, %v6094
        %6239 = vst.msk [vmem:[%s231 + $0x1c8] sm:$0xff] %vm2283, %v6095
        %6240 = vst.msk [vmem:[%s231 + $0x1d0] sm:$0xff] %vm2283, %v6096
        %6241 = vst.msk [vmem:[%s231 + $0x1d8] sm:$0xff] %vm2283, %v6097
        %6242 = vst.msk [vmem:[%s231 + $0x1e0] sm:$0xff] %vm2283, %v6098
        %6243 = vst.msk [vmem:[%s231 + $0x1e8] sm:$0xff] %vm2283, %v6099
        %6244 = vst.msk [vmem:[%s231 + $0x1f0] sm:$0xff] %vm2283, %v6100
        %6245 = vst.msk [vmem:[%s231 + $0x1f8] sm:$0xff] %vm2283, %v6101
        %6246 = vst.msk [vmem:[%s231 + $0x200] sm:$0xff] %vm2283, %v6102
        %6247 = vst.msk [vmem:[%s231 + $0x208] sm:$0xff] %vm2283, %v6103
        %6248 = vst.msk [vmem:[%s231 + $0x210] sm:$0xff] %vm2283, %v6104
        %6249 = vst.msk [vmem:[%s231 + $0x218] sm:$0xff] %vm2283, %v6105
        %6250 = vst.msk [vmem:[%s231 + $0x220] sm:$0xff] %vm2283, %v6106
        %6251 = vst.msk [vmem:[%s231 + $0x228] sm:$0xff] %vm2283, %v6107
        %6252 = vst.msk [vmem:[%s231 + $0x230] sm:$0xff] %vm2283, %v6108
        %6253 = vst.msk [vmem:[%s231 + $0x238] sm:$0xff] %vm2283, %v6109
        %6254 = vst.msk [vmem:[%s231 + $0x240] sm:$0xff] %vm2283, %v6110
        %6255 = vst.msk [vmem:[%s231 + $0x248] sm:$0xff] %vm2283, %v6111
        %6256 = vst.msk [vmem:[%s231 + $0x250] sm:$0xff] %vm2283, %v6112
        %6257 = vst.msk [vmem:[%s231 + $0x258] sm:$0xff] %vm2283, %v6113
        %6258 = vst.msk [vmem:[%s231 + $0x260] sm:$0xff] %vm2283, %v6114
        %6259 = vst.msk [vmem:[%s231 + $0x268] sm:$0xff] %vm2283, %v6115
        %6260 = vst.msk [vmem:[%s231 + $0x270] sm:$0xff] %vm2283, %v6116
        %6261 = vst.msk [vmem:[%s231 + $0x278] sm:$0xff] %vm2283, %v6117
        %6262 = vst.msk [vmem:[%s231 + $0x280] sm:$0xff] %vm2283, %v6118
        %6263 = vst.msk [vmem:[%s231 + $0x288] sm:$0xff] %vm2283, %v6119
        %6264 = vst.msk [vmem:[%s231 + $0x290] sm:$0xff] %vm2283, %v6120
        %6265 = vst.msk [vmem:[%s231 + $0x298] sm:$0xff] %vm2283, %v6121
        %6266 = vst.msk [vmem:[%s231 + $0x2a0] sm:$0xff] %vm2283, %v6122
        %6267 = vst.msk [vmem:[%s231 + $0x2a8] sm:$0xff] %vm2283, %v6123
        %6268 = vst.msk [vmem:[%s231 + $0x2b0] sm:$0xff] %vm2283, %v6124
        %6269 = vst.msk [vmem:[%s231 + $0x2b8] sm:$0xff] %vm2283, %v6125
        %6270 = vst.msk [vmem:[%s231 + $0x2c0] sm:$0xff] %vm2283, %v6126
        %6271 = vst.msk [vmem:[%s231 + $0x2c8] sm:$0xff] %vm2283, %v6127
        %6272 = vst.msk [vmem:[%s231 + $0x2d0] sm:$0xff] %vm2283, %v6128
        %6273 = vst.msk [vmem:[%s231 + $0x2d8] sm:$0xff] %vm2283, %v6129
        %6274 = vst.msk [vmem:[%s231 + $0x2e0] sm:$0xff] %vm2283, %v6130
        %6275 = vst.msk [vmem:[%s231 + $0x2e8] sm:$0xff] %vm2283, %v6131
        %6276 = vst.msk [vmem:[%s231 + $0x2f0] sm:$0xff] %vm2283, %v6132
        %6277 = vst.msk [vmem:[%s231 + $0x2f8] sm:$0xff] %vm2283, %v6133
        %6278 = vst.msk [vmem:[%s231 + $0x300] sm:$0xff] %vm2283, %v6134
        %6279 = vst.msk [vmem:[%s231 + $0x308] sm:$0xff] %vm2283, %v6135
        %6280 = vst.msk [vmem:[%s231 + $0x310] sm:$0xff] %vm2283, %v6136
        %6281 = vst.msk [vmem:[%s231 + $0x318] sm:$0xff] %vm2283, %v6137
        %6282 = vst.msk [vmem:[%s231 + $0x320] sm:$0xff] %vm2283, %v6138
        %6283 = vst.msk [vmem:[%s231 + $0x328] sm:$0xff] %vm2283, %v6139
        %6284 = vst.msk [vmem:[%s231 + $0x330] sm:$0xff] %vm2283, %v6140
        %6285 = vst.msk [vmem:[%s231 + $0x338] sm:$0xff] %vm2283, %v6141
        %6286 = vst.msk [vmem:[%s231 + $0x340] sm:$0xff] %vm2283, %v6142
        %6287 = vst.msk [vmem:[%s231 + $0x348] sm:$0xff] %vm2283, %v6143
        %6288 = vst.msk [vmem:[%s231 + $0x350] sm:$0xff] %vm2283, %v6144
        %6289 = vst.msk [vmem:[%s231 + $0x358] sm:$0xff] %vm2283, %v6145
        %6290 = vst.msk [vmem:[%s231 + $0x360] sm:$0xff] %vm2283, %v6146
        %6291 = vst.msk [vmem:[%s231 + $0x368] sm:$0xff] %vm2283, %v6147
        %6292 = vst.msk [vmem:[%s231 + $0x370] sm:$0xff] %vm2283, %v6148
        %6293 = vst.msk [vmem:[%s231 + $0x378] sm:$0xff] %vm2283, %v6149
        %6294 = vst.msk [vmem:[%s231 + $0x380] sm:$0xff] %vm2283, %v6150
        %6295 = vst.msk [vmem:[%s231 + $0x388] sm:$0xff] %vm2283, %v6151
        %6296 = vst.msk [vmem:[%s231 + $0x390] sm:$0xff] %vm2283, %v6152
        %6297 = vst.msk [vmem:[%s231 + $0x398] sm:$0xff] %vm2283, %v6153
        %6298 = vst.msk [vmem:[%s231 + $0x3a0] sm:$0xff] %vm2283, %v6154
        %6299 = vst.msk [vmem:[%s231 + $0x3a8] sm:$0xff] %vm2283, %v6155
        %6300 = vst.msk [vmem:[%s231 + $0x3b0] sm:$0xff] %vm2283, %v6156
        %6301 = vst.msk [vmem:[%s231 + $0x3b8] sm:$0xff] %vm2283, %v6157
        %6302 = vst.msk [vmem:[%s231 + $0x3c0] sm:$0xff] %vm2283, %v6158
        %6303 = vst.msk [vmem:[%s231 + $0x3c8] sm:$0xff] %vm2283, %v6159
        %6304 = vst.msk [vmem:[%s231 + $0x3d0] sm:$0xff] %vm2283, %v6160
        %6305 = vst.msk [vmem:[%s231 + $0x3d8] sm:$0xff] %vm2283, %v6161
        %6306 = vst.msk [vmem:[%s231 + $0x3e0] sm:$0xff] %vm2283, %v6162
        %6307 = vst.msk [vmem:[%s231 + $0x3e8] sm:$0xff] %vm2283, %v6163
        %6308 = vst.msk [vmem:[%s231 + $0x3f0] sm:$0xff] %vm2283, %v6164
        %6309 = vst.msk [vmem:[%s231 + $0x3f8] sm:$0xff] %vm2283, %v6165
        %6310 = vst.msk [vmem:[%s231 + $0x400] sm:$0xff] %vm2283, %v6166
        %6311 = vst.msk [vmem:[%s231 + $0x408] sm:$0xff] %vm2283, %v6167
        %6312 = vst.msk [vmem:[%s231 + $0x410] sm:$0xff] %vm2283, %v6168
        %6313 = vst.msk [vmem:[%s231 + $0x418] sm:$0xff] %vm2283, %v6169
        %6314 = vst.msk [vmem:[%s231 + $0x420] sm:$0xff] %vm2283, %v6170
        %6315 = vst.msk [vmem:[%s231 + $0x428] sm:$0xff] %vm2283, %v6171
        %6316 = vst.msk [vmem:[%s231 + $0x430] sm:$0xff] %vm2283, %v6172
        %6317 = vst.msk [vmem:[%s231 + $0x438] sm:$0xff] %vm2283, %v6173
        %6318 = vst.msk [vmem:[%s231 + $0x440] sm:$0xff] %vm2283, %v6174
        %6319 = vst.msk [vmem:[%s231 + $0x448] sm:$0xff] %vm2283, %v6175
        %6320 = vst.msk [vmem:[%s231 + $0x450] sm:$0xff] %vm2283, %v6176
        %6321 = vst.msk [vmem:[%s231 + $0x458] sm:$0xff] %vm2283, %v6177
        %6322 = vst.msk [vmem:[%s231 + $0x460] sm:$0xff] %vm2283, %v6178
        %6323 = vst.msk [vmem:[%s231 + $0x468] sm:$0xff] %vm2283, %v6179
        %6324 = vst.msk [vmem:[%s231 + $0x470] sm:$0xff] %vm2283, %v6180
        %6325 = vst.msk [vmem:[%s231 + $0x478] sm:$0xff] %vm2283, %v6181
        %s6326 = smul.u32 144, %s20
        %p6327 = scmp.lt.s32.totalorder %s6326, 287
        %s6328 = scalar_select %p6327, %s6326, 287
        %s6329 = smul.addr %s6328, 8
        %s6330 = scalar_lea.vmem %s3, %s6329
        // Predicated region
        $region41: #{tpu_custom_call.1} parent=31 // pred_check
          %p6331 = pneg %p111
        $region42: #{tpu_custom_call.1} parent=31 // pred_check_branch
          %6333 = sbr.rel (%p6331) target = $region44
        $region43: #{tpu_custom_call.1} parent=31 // pred_region
          %s6334 = smul.u32 144, %s20
        $region44: #{tpu_custom_call.1} parent=31 // pred_fallthru
          _
      $region32: #{tpu_custom_call.1} parent=5 // pred_fallthru
        _
      %p6335 = scmp.le.s32.totalorder 2, %s15
      // Predicated region
      $region45: #{tpu_custom_call.1} parent=5 // pred_check
        %p6336 = pneg %p6335
      $region46: #{tpu_custom_call.1} parent=5 // pred_check_branch
        %6338 = sbr.rel (%p6336) target = $region48
      $region47: #{tpu_custom_call.1} parent=5 // pred_region
        %s6339 = ssub.s32 %s15, 2
        // Predicated region
        $region49: #{tpu_custom_call.1} parent=47 // pred_check
          %p6340 = pneg %p117
        $region50: #{tpu_custom_call.1} parent=47 // pred_check_branch
          %6342 = sbr.rel (%p6340) target = $region52
        $region51: #{tpu_custom_call.1} parent=47 // pred_region
          %s6343 = smul.u32 144, %s21
          %p6344 = scmp.lt.s32.totalorder %s6343, 287
          %s6345 = scalar_select %p6344, %s6343, 287
          %s6346 = smul.addr %s6345, 8
          %s6347 = scalar_lea.vmem %s3, %s6346
        $region52: #{tpu_custom_call.1} parent=47 // pred_fallthru
          _
      $region48: #{tpu_custom_call.1} parent=5 // pred_fallthru
        _
    $region6: #{tpu_custom_call.1} parent=1 // loop_footer
      %s19 = sadd.s32 1, %s15
    $region7: #{tpu_custom_call.1} parent=1 // loop_footer_branch
      %14 = sbr.rel target = $region3
    $region8: #{tpu_custom_call.1} parent=1 // loop_exit
      _
    %6348 = vsyncpa [#allocation3], 1
    %s6349 = scalar_lea.sflag [#allocation3], 1
    %6350 = vsyncpa %s6349, 1
    %6351 = vsyncpa [#allocation5], 1
    %s6352 = scalar_lea.sflag [#allocation5], 1
    %6353 = vsyncpa %s6352, 1

</llo_original>
